<compile_context>
chip_gen: v5e
topology: v5e:2x2
jax: 0.10.0
libtpu: 0.0.40
codegen_flags: <defaults>
</compile_context>

<pallas_src>
import functools

import jax
import jax.numpy as jnp
from jax.experimental import pallas as pl
from jax.experimental.pallas import tpu as pltpu

_EPS_BN = 1e-5
_EPS_IN = 1e-5


def _res_enc_kernel(x_ref, mask_ref, w1_ref, b1_ref, w2_ref, b2_ref, a_ref,
                    out_ref, slack_ref, pcol_ref, id_ref, *,
                    B, M, Wo, K, pad, Cout, slack_pad, downsample,
                    use_instance_norm):
    a = a_ref[0, 0]                       # PReLU slope (SMEM scalar)
    BM = B * M
    C = slack_ref.shape[1]                # == Cout (== Cin when stride == 1)

    def pack_from_slack():
        # slack_ref[slack_pad : slack_pad + BM) holds the source rows in flat
        # (b, i, j) order (bf16).  For tap (dy, dx) the source row of output
        # row m is m + (dy-pad)*Wo + (dx-pad); the row slack keeps the
        # statically shifted slice in bounds and mask_ref zeroes every tap
        # that falls outside its own sample's (Ho, Wo) window (zero padding).
        for dy in range(K):
            for dx in range(K):
                t = dy * K + dx
                s0 = slack_pad + (dy - pad) * Wo + (dx - pad)
                vals = slack_ref[s0:s0 + BM, :]
                keep = mask_ref[:, t:t + 1] > 0.0
                pcol_ref[:, t * C:(t + 1) * C] = jnp.where(
                    keep, vals, jnp.zeros_like(vals))

    # ---- conv1 + bn1 (folded) -----------------------------------------------
    if downsample:
        # x_ref is the wrapper-im2col'd (BM, K*K*Cin) bf16 patches; w1 carries
        # conv1+bn1 and the 1x1 downsample conv+bnd side by side (2*Cout cols).
        z = jnp.dot(x_ref[...], w1_ref[...],
                    preferred_element_type=jnp.float32) + b1_ref[...]
        y1 = z[:, :Cout]
        id_ref[...] = z[:, Cout:]          # stash identity (short live range)
    else:
        # x_ref is the flat (BM, Cin) f32 NHWC input; im2col done in-kernel.
        slack_ref[slack_pad:slack_pad + BM, :] = (
            x_ref[...].astype(slack_ref.dtype))
        pack_from_slack()
        z = jnp.dot(pcol_ref[...], w1_ref[...],
                    preferred_element_type=jnp.float32) + b1_ref[...]
        y1 = z
    y1 = jnp.where(y1 >= 0.0, y1, a * y1)                      # PReLU

    # ---- conv2 + bn2 (folded): one im2col MXU matmul -------------------------
    slack_ref[slack_pad:slack_pad + BM, :] = y1.astype(slack_ref.dtype)
    pack_from_slack()
    out = jnp.dot(pcol_ref[...], w2_ref[...],
                  preferred_element_type=jnp.float32) + b2_ref[...]

    # ---- residual add (exact f32 passthrough when not downsampling) ----------
    out = out + (id_ref[...] if downsample else x_ref[...])

    # ---- optional InstanceNorm + PReLU, emitted channels-major ---------------
    for b in range(B):                     # B is small and static
        ob = out[b * M:(b + 1) * M, :].T   # (Cout, M), lane-dense store later
        if use_instance_norm:
            mean = jnp.mean(ob, axis=-1, keepdims=True)
            var = jnp.mean(jnp.square(ob - mean), axis=-1, keepdims=True)
            ob = (ob - mean) * jax.lax.rsqrt(var + _EPS_IN)
        ob = jnp.where(ob >= 0.0, ob, a * ob)                  # PReLU
        out_ref[b] = ob.astype(out_ref.dtype)


def _fold_bn(w_rows, b, bn):
    """Fold eval-mode BatchNorm into conv weight rows (rows, Cout) and bias."""
    scale = bn["gamma"] / jnp.sqrt(bn["var"] + _EPS_BN)
    shift = bn["beta"] - bn["mean"] * scale
    return w_rows * scale[None, :], b * scale + shift


def _conv_w_rows(w_oihw):
    """OIHW -> (K*K*Cin, Cout); rows ordered (tap-major, cin-minor)."""
    co, ci, kh, kw = w_oihw.shape
    return jnp.transpose(w_oihw, (2, 3, 1, 0)).reshape(kh * kw * ci, co)


def residual_encoder_forward(x, params, *, kernel_size, stride, padding,
                             use_instance_norm):
    """x: (B, Cin, H, W) NCHW f32 -> (B, Cout, Ho, Wo) NCHW f32."""
    B, Cin, H, W = x.shape
    Cout = params["conv1_w"].shape[0]
    K, s, p = kernel_size, stride, padding
    Ho = (H + 2 * p - K) // s + 1
    Wo = (W + 2 * p - K) // s + 1
    M = Ho * Wo
    BM = B * M
    downsample = (s != 1)

    assert 2 * p == K - 1 and p < K, "conv2 must be 'same' for the residual add"
    if not downsample:
        assert Cin == Cout, "identity passthrough needs channels_in == channels_out"

    # conv2 + bn2 (folded), PReLU slope.
    w2, b2 = _fold_bn(_conv_w_rows(params["conv2_w"]), params["conv2_b"],
                      params["bn2"])
    b2 = b2[None, :]
    a = params["prelu_a"].reshape(1, 1).astype(jnp.float32)

    # Per-tap validity mask (which taps stay inside the (Ho, Wo) image).
    ii = jnp.arange(Ho)[:, None]
    jj = jnp.arange(Wo)[None, :]
    cols = []
    for dy in range(K):
        for dx in range(K):
            v = ((ii + dy - p >= 0) & (ii + dy - p < Ho) &
                 (jj + dx - p >= 0) & (jj + dx - p < Wo))
            cols.append(v.reshape(M))
    tapmask = jnp.tile(jnp.stack(cols, axis=-1).astype(jnp.float32), (B, 1))

    if downsample:
        # TODO(synk): move this strided im2col in-kernel too (only the
        # stride==1 path packs in-kernel for now).
        x_nhwc = jnp.transpose(x, (0, 2, 3, 1))
        x_pad = jnp.pad(x_nhwc, ((0, 0), (p, p), (p, p), (0, 0)))
        patches = []
        for dy in range(K):
            for dx in range(K):
                sl = jax.lax.slice(
                    x_pad, (0, dy, dx, 0),
                    (B, dy + (Ho - 1) * s + 1, dx + (Wo - 1) * s + 1, Cin),
                    (1, s, s, 1))
                patches.append(sl.reshape(B, M, Cin))
        x_in = jnp.concatenate(patches, axis=-1).reshape(BM, K * K * Cin)
        x_in = x_in.astype(jnp.bfloat16)

        w1, b1 = _fold_bn(_conv_w_rows(params["conv1_w"]), params["conv1_b"],
                          params["bn1"])
        wd, bd = _fold_bn(_conv_w_rows(params["convd_w"]), params["convd_b"],
                          params["bnd"])
        center = p * K + p                 # tap (dy=p, dx=p) reads x[i*s, j*s]
        wid = jnp.zeros((K * K * Cin, Cout), jnp.float32)
        wid = wid.at[center * Cin:(center + 1) * Cin, :].set(wd)
        w1_in = jnp.concatenate([w1, wid], axis=1)           # (K*K*Cin, 2*Cout)
        b1_in = jnp.concatenate([b1, bd], axis=0)[None, :]   # (1, 2*Cout)
    else:
        # Flat NHWC f32 input; conv1's im2col happens in-kernel.
        x_in = jnp.transpose(x, (0, 2, 3, 1)).reshape(BM, Cin)
        w1_in, b1 = _fold_bn(_conv_w_rows(params["conv1_w"]), params["conv1_b"],
                             params["bn1"])
        b1_in = b1[None, :]                                   # (1, Cout)

    slack_pad = ((p * Wo + p + 15) // 16) * 16   # bf16 sublane-pack aligned

    kernel = functools.partial(
        _res_enc_kernel, B=B, M=M, Wo=Wo, K=K, pad=p, Cout=Cout,
        slack_pad=slack_pad, downsample=downsample,
        use_instance_norm=use_instance_norm)

    out = pl.pallas_call(
        kernel,
        out_shape=jax.ShapeDtypeStruct((B, Cout, M), jnp.float32),
        in_specs=[
            pl.BlockSpec(memory_space=pltpu.MemorySpace.VMEM),   # x / xcol
            pl.BlockSpec(memory_space=pltpu.MemorySpace.VMEM),   # tap mask
            pl.BlockSpec(memory_space=pltpu.MemorySpace.VMEM),   # w1 (+downsample)
            pl.BlockSpec(memory_space=pltpu.MemorySpace.VMEM),   # b1
            pl.BlockSpec(memory_space=pltpu.MemorySpace.VMEM),   # w2
            pl.BlockSpec(memory_space=pltpu.MemorySpace.VMEM),   # b2
            pl.BlockSpec(memory_space=pltpu.MemorySpace.SMEM),   # PReLU slope
        ],
        out_specs=pl.BlockSpec(memory_space=pltpu.MemorySpace.VMEM),
        scratch_shapes=[
            pltpu.VMEM((BM + 2 * slack_pad, Cout), jnp.bfloat16),  # slack rows
            pltpu.VMEM((BM, K * K * Cout), jnp.bfloat16),          # im2col patches
            pltpu.VMEM((BM, Cout), jnp.float32),                   # identity stash
        ],
        compiler_params=pltpu.CompilerParams(
            vmem_limit_bytes=32 * 1024 * 1024),
    )(x_in, tapmask, w1_in.astype(jnp.bfloat16), b1_in,
      w2.astype(jnp.bfloat16), b2, a)

    # (B, Cout, Ho*Wo) -> NCHW is a free contiguous reshape (no transpose pass).
    return out.reshape(B, Cout, Ho, Wo)


def init_params(key, cin, cout, K, stride):
    keys = jax.random.split(key, 9)

    def conv_init(k, co, ci, kh, kw):
        return jax.random.normal(k, (co, ci, kh, kw), jnp.float32) / jnp.sqrt(
            ci * kh * kw)

    def bn_init(k):
        k1, k2, k3, k4 = jax.random.split(k, 4)
        return {
            "gamma": 1.0 + 0.2 * jax.random.normal(k1, (cout,), jnp.float32),
            "beta": 0.1 * jax.random.normal(k2, (cout,), jnp.float32),
            "mean": 0.3 * jax.random.normal(k3, (cout,), jnp.float32),
            "var": jax.random.uniform(k4, (cout,), jnp.float32, 0.5, 1.5),
        }

    params = {
        "conv1_w": conv_init(keys[0], cout, cin, K, K),
        "conv1_b": 0.1 * jax.random.normal(keys[1], (cout,), jnp.float32),
        "bn1": bn_init(keys[2]),
        "conv2_w": conv_init(keys[3], cout, cout, K, K),
        "conv2_b": 0.1 * jax.random.normal(keys[4], (cout,), jnp.float32),
        "bn2": bn_init(keys[5]),
        "prelu_a": jnp.full((1,), 0.25, jnp.float32),
    }
    if stride != 1:
        params["convd_w"] = conv_init(keys[6], cout, cin, 1, 1)
        params["convd_b"] = 0.1 * jax.random.normal(keys[7], (cout,), jnp.float32)
        params["bnd"] = bn_init(keys[8])
    return params


def _reference_forward(x, params, *, kernel_size, stride, padding,
                       use_instance_norm):
    """Pure-JAX NCHW reference mirroring the PyTorch forward (eval-mode BN)."""
    a = params["prelu_a"]

    def conv(inp, w, b, st, pd):
        y = jax.lax.conv_general_dilated(
            inp, w, (st, st), [(pd, pd), (pd, pd)],
            dimension_numbers=("NCHW", "OIHW", "NCHW"))
        return y + b[None, :, None, None]

    def bn(y, q):
        scale = q["gamma"] / jnp.sqrt(q["var"] + _EPS_BN)
        shift = q["beta"] - q["mean"] * scale
        return y * scale[None, :, None, None] + shift[None, :, None, None]

    def prelu(y):
        return jnp.where(y >= 0.0, y, a * y)

    out = prelu(bn(conv(x, params["conv1_w"], params["conv1_b"],
                        stride, padding), params["bn1"]))
    out = bn(conv(out, params["conv2_w"], params["conv2_b"], 1, padding),
             params["bn2"])
    if stride != 1:
        identity = bn(conv(x, params["convd_w"], params["convd_b"], stride, 0),
                      params["bnd"])
    else:
        identity = x
    out = out + identity
    if use_instance_norm:
        mean = jnp.mean(out, axis=(2, 3), keepdims=True)
        var = jnp.mean(jnp.square(out - mean), axis=(2, 3), keepdims=True)
        out = (out - mean) * jax.lax.rsqrt(var + _EPS_IN)
    return prelu(out)


if __name__ == "__main__":
    key = jax.random.PRNGKey(0)
    kx, kp1, kp2 = jax.random.split(key, 3)

    # Config A: channels 4 -> 32, stride 2 (downsample branch) + InstanceNorm.
    B, Cin, Cout, H, W, K = 2, 4, 32, 16, 16, 3
    x = jax.random.normal(kx, (B, Cin, H, W), jnp.float32)
    params_a = init_params(kp1, Cin, Cout, K, stride=2)
    out_a = jax.block_until_ready(residual_encoder_forward(
        x, params_a, kernel_size=K, stride=2, padding=1,
        use_instance_norm=True))
    ref_a = _reference_forward(x, params_a, kernel_size=K, stride=2,
                               padding=1, use_instance_norm=True)
    assert out_a.shape == (B, Cout, 8, 8)
    err_a = float(jnp.max(jnp.abs(out_a - ref_a)))
    # bf16 MXU inputs -> loosened tolerance (reference is pure f32).
    assert jnp.allclose(out_a, ref_a, atol=7e-2, rtol=7e-2), err_a

    # Config B: channels 32 -> 32, stride 1 (identity passthrough), no IN.
    x_b = jax.random.normal(kx, (B, Cout, H, W), jnp.float32)
    params_b = init_params(kp2, Cout, Cout, K, stride=1)
    out_b = jax.block_until_ready(residual_encoder_forward(
        x_b, params_b, kernel_size=K, stride=1, padding=1,
        use_instance_norm=False))
    ref_b = _reference_forward(x_b, params_b, kernel_size=K, stride=1,
                               padding=1, use_instance_norm=False)
    assert out_b.shape == (B, Cout, H, W)
    err_b = float(jnp.max(jnp.abs(out_b - ref_b)))
    assert jnp.allclose(out_b, ref_b, atol=7e-2, rtol=7e-2), err_b

    print("KERNEL_OK")
</pallas_src>

<mosaic_0001>
module attributes {stable_mosaic.version = 11 : i64} {
  func.func @_res_enc_kernel(%arg0: memref<128x36xbf16, #tpu.memory_space<vmem>>, %arg1: memref<128x9xf32, #tpu.memory_space<vmem>>, %arg2: memref<36x64xbf16, #tpu.memory_space<vmem>>, %arg3: memref<1x64xf32, #tpu.memory_space<vmem>>, %arg4: memref<288x32xbf16, #tpu.memory_space<vmem>>, %arg5: memref<1x32xf32, #tpu.memory_space<vmem>>, %arg6: memref<1x1xf32, #tpu.memory_space<smem>>, %arg7: memref<2x32x64xf32, #tpu.memory_space<vmem>>, %arg8: memref<160x32xbf16, #tpu.memory_space<vmem>>, %arg9: memref<128x288xbf16, #tpu.memory_space<vmem>>, %arg10: memref<128x32xf32, #tpu.memory_space<vmem>>) attributes {dimension_semantics = [], scalar_prefetch = 0 : i64, scratch_operands = 3 : i64, tpu.core_type = #tpu.core_type<tc>} {
    %c0 = arith.constant 0 : index
    %c0_0 = arith.constant 0 : index
    %0 = memref.load %arg6[%c0, %c0_0] : memref<1x1xf32, #tpu.memory_space<smem>>
    %c0_1 = arith.constant 0 : index
    %c0_2 = arith.constant 0 : index
    %1 = vector.load %arg0[%c0_1, %c0_2] : memref<128x36xbf16, #tpu.memory_space<vmem>>, vector<128x36xbf16>
    %c0_3 = arith.constant 0 : index
    %c0_4 = arith.constant 0 : index
    %2 = vector.load %arg2[%c0_3, %c0_4] : memref<36x64xbf16, #tpu.memory_space<vmem>>, vector<36x64xbf16>
    %cst = arith.constant dense<0.000000e+00> : vector<128x64xf32>
    %3 = tpu.matmul %1, %2, %cst {dimension_numbers = #tpu.dot_dimension_numbers<[1], [0], [0], [1], [0, 0, 1, 1], [], []>} : vector<128x36xbf16>, vector<36x64xbf16>, vector<128x64xf32> -> vector<128x64xf32>
    %c0_5 = arith.constant 0 : index
    %c0_6 = arith.constant 0 : index
    %4 = vector.load %arg3[%c0_5, %c0_6] : memref<1x64xf32, #tpu.memory_space<vmem>>, vector<1x64xf32>
    %5 = vector.broadcast %4 : vector<1x64xf32> to vector<128x64xf32>
    %6 = arith.addf %3, %5 : vector<128x64xf32>
    %7 = vector.extract_strided_slice %6 {offsets = [0, 0], sizes = [128, 32], strides = [1, 1]} : vector<128x64xf32> to vector<128x32xf32>
    %8 = vector.extract_strided_slice %6 {offsets = [0, 32], sizes = [128, 32], strides = [1, 1]} : vector<128x64xf32> to vector<128x32xf32>
    %c0_7 = arith.constant 0 : index
    %c0_8 = arith.constant 0 : index
    %9 = vector.load %arg10[%c0_7, %c0_8] : memref<128x32xf32, #tpu.memory_space<vmem>>, vector<128x32xf32>
    tpu.vector_store %arg10[%c0_7, %c0_8], %8 {strides = array<i32>} : memref<128x32xf32, #tpu.memory_space<vmem>>, vector<128x32xf32>,
    %cst_9 = arith.constant 0.000000e+00 : f32
    %10 = vector.broadcast %cst_9 : f32 to vector<128x32xf32>
    %11 = arith.cmpf oge, %7, %10 : vector<128x32xf32>
    %12 = vector.broadcast %0 : f32 to vector<128x32xf32>
    %13 = arith.mulf %12, %7 : vector<128x32xf32>
    %14 = arith.select %11, %7, %13 : vector<128x32xi1>, vector<128x32xf32>
    %15 = arith.truncf %14 : vector<128x32xf32> to vector<128x32xbf16>
    %c16 = arith.constant 16 : index
    %c0_10 = arith.constant 0 : index
    %16 = vector.load %arg8[%c16, %c0_10] : memref<160x32xbf16, #tpu.memory_space<vmem>>, vector<128x32xbf16>
    tpu.vector_store %arg8[%c16, %c0_10], %15 {strides = array<i32>} : memref<160x32xbf16, #tpu.memory_space<vmem>>, vector<128x32xbf16>,
    %c7 = arith.constant 7 : index
    %c0_11 = arith.constant 0 : index
    %17 = vector.load %arg8[%c7, %c0_11] : memref<160x32xbf16, #tpu.memory_space<vmem>>, vector<128x32xbf16>
    %c0_12 = arith.constant 0 : index
    %c0_13 = arith.constant 0 : index
    %18 = vector.load %arg1[%c0_12, %c0_13] : memref<128x9xf32, #tpu.memory_space<vmem>>, vector<128x1xf32>
    %cst_14 = arith.constant 0.000000e+00 : f32
    %19 = vector.broadcast %cst_14 : f32 to vector<128x1xf32>
    %20 = arith.cmpf ogt, %18, %19 : vector<128x1xf32>
    %cst_15 = arith.constant 0.000000e+00 : bf16
    %21 = vector.broadcast %cst_15 : bf16 to vector<128x32xbf16>
    %22 = vector.shape_cast %20 : vector<128x1xi1> to vector<128x1xi1>
    %23 = vector.broadcast %22 : vector<128x1xi1> to vector<128x32xi1>
    %24 = arith.select %23, %17, %21 : vector<128x32xi1>, vector<128x32xbf16>
    %c0_16 = arith.constant 0 : index
    %c0_17 = arith.constant 0 : index
    %25 = vector.load %arg9[%c0_16, %c0_17] : memref<128x288xbf16, #tpu.memory_space<vmem>>, vector<128x32xbf16>
    tpu.vector_store %arg9[%c0_16, %c0_17], %24 {strides = array<i32>} : memref<128x288xbf16, #tpu.memory_space<vmem>>, vector<128x32xbf16>,
    %c8 = arith.constant 8 : index
    %c0_18 = arith.constant 0 : index
    %26 = vector.load %arg8[%c8, %c0_18] : memref<160x32xbf16, #tpu.memory_space<vmem>>, vector<128x32xbf16>
    %c0_19 = arith.constant 0 : index
    %c1 = arith.constant 1 : index
    %27 = vector.load %arg1[%c0_19, %c1] : memref<128x9xf32, #tpu.memory_space<vmem>>, vector<128x1xf32>
    %cst_20 = arith.constant 0.000000e+00 : f32
    %28 = vector.broadcast %cst_20 : f32 to vector<128x1xf32>
    %29 = arith.cmpf ogt, %27, %28 : vector<128x1xf32>
    %cst_21 = arith.constant 0.000000e+00 : bf16
    %30 = vector.broadcast %cst_21 : bf16 to vector<128x32xbf16>
    %31 = vector.shape_cast %29 : vector<128x1xi1> to vector<128x1xi1>
    %32 = vector.broadcast %31 : vector<128x1xi1> to vector<128x32xi1>
    %33 = arith.select %32, %26, %30 : vector<128x32xi1>, vector<128x32xbf16>
    %c0_22 = arith.constant 0 : index
    %c32 = arith.constant 32 : index
    %34 = vector.load %arg9[%c0_22, %c32] : memref<128x288xbf16, #tpu.memory_space<vmem>>, vector<128x32xbf16>
    tpu.vector_store %arg9[%c0_22, %c32], %33 {strides = array<i32>} : memref<128x288xbf16, #tpu.memory_space<vmem>>, vector<128x32xbf16>,
    %c9 = arith.constant 9 : index
    %c0_23 = arith.constant 0 : index
    %35 = vector.load %arg8[%c9, %c0_23] : memref<160x32xbf16, #tpu.memory_space<vmem>>, vector<128x32xbf16>
    %c0_24 = arith.constant 0 : index
    %c2 = arith.constant 2 : index
    %36 = vector.load %arg1[%c0_24, %c2] : memref<128x9xf32, #tpu.memory_space<vmem>>, vector<128x1xf32>
    %cst_25 = arith.constant 0.000000e+00 : f32
    %37 = vector.broadcast %cst_25 : f32 to vector<128x1xf32>
    %38 = arith.cmpf ogt, %36, %37 : vector<128x1xf32>
    %cst_26 = arith.constant 0.000000e+00 : bf16
    %39 = vector.broadcast %cst_26 : bf16 to vector<128x32xbf16>
    %40 = vector.shape_cast %38 : vector<128x1xi1> to vector<128x1xi1>
    %41 = vector.broadcast %40 : vector<128x1xi1> to vector<128x32xi1>
    %42 = arith.select %41, %35, %39 : vector<128x32xi1>, vector<128x32xbf16>
    %c0_27 = arith.constant 0 : index
    %c64 = arith.constant 64 : index
    %43 = vector.load %arg9[%c0_27, %c64] : memref<128x288xbf16, #tpu.memory_space<vmem>>, vector<128x32xbf16>
    tpu.vector_store %arg9[%c0_27, %c64], %42 {strides = array<i32>} : memref<128x288xbf16, #tpu.memory_space<vmem>>, vector<128x32xbf16>,
    %c15 = arith.constant 15 : index
    %c0_28 = arith.constant 0 : index
    %44 = vector.load %arg8[%c15, %c0_28] : memref<160x32xbf16, #tpu.memory_space<vmem>>, vector<128x32xbf16>
    %c0_29 = arith.constant 0 : index
    %c3 = arith.constant 3 : index
    %45 = vector.load %arg1[%c0_29, %c3] : memref<128x9xf32, #tpu.memory_space<vmem>>, vector<128x1xf32>
    %cst_30 = arith.constant 0.000000e+00 : f32
    %46 = vector.broadcast %cst_30 : f32 to vector<128x1xf32>
    %47 = arith.cmpf ogt, %45, %46 : vector<128x1xf32>
    %cst_31 = arith.constant 0.000000e+00 : bf16
    %48 = vector.broadcast %cst_31 : bf16 to vector<128x32xbf16>
    %49 = vector.shape_cast %47 : vector<128x1xi1> to vector<128x1xi1>
    %50 = vector.broadcast %49 : vector<128x1xi1> to vector<128x32xi1>
    %51 = arith.select %50, %44, %48 : vector<128x32xi1>, vector<128x32xbf16>
    %c0_32 = arith.constant 0 : index
    %c96 = arith.constant 96 : index
    %52 = vector.load %arg9[%c0_32, %c96] : memref<128x288xbf16, #tpu.memory_space<vmem>>, vector<128x32xbf16>
    tpu.vector_store %arg9[%c0_32, %c96], %51 {strides = array<i32>} : memref<128x288xbf16, #tpu.memory_space<vmem>>, vector<128x32xbf16>,
    %c16_33 = arith.constant 16 : index
    %c0_34 = arith.constant 0 : index
    %53 = vector.load %arg8[%c16_33, %c0_34] : memref<160x32xbf16, #tpu.memory_space<vmem>>, vector<128x32xbf16>
    %c0_35 = arith.constant 0 : index
    %c4 = arith.constant 4 : index
    %54 = vector.load %arg1[%c0_35, %c4] : memref<128x9xf32, #tpu.memory_space<vmem>>, vector<128x1xf32>
    %cst_36 = arith.constant 0.000000e+00 : f32
    %55 = vector.broadcast %cst_36 : f32 to vector<128x1xf32>
    %56 = arith.cmpf ogt, %54, %55 : vector<128x1xf32>
    %cst_37 = arith.constant 0.000000e+00 : bf16
    %57 = vector.broadcast %cst_37 : bf16 to vector<128x32xbf16>
    %58 = vector.shape_cast %56 : vector<128x1xi1> to vector<128x1xi1>
    %59 = vector.broadcast %58 : vector<128x1xi1> to vector<128x32xi1>
    %60 = arith.select %59, %53, %57 : vector<128x32xi1>, vector<128x32xbf16>
    %c0_38 = arith.constant 0 : index
    %c128 = arith.constant 128 : index
    %61 = vector.load %arg9[%c0_38, %c128] : memref<128x288xbf16, #tpu.memory_space<vmem>>, vector<128x32xbf16>
    tpu.vector_store %arg9[%c0_38, %c128], %60 {strides = array<i32>} : memref<128x288xbf16, #tpu.memory_space<vmem>>, vector<128x32xbf16>,
    %c17 = arith.constant 17 : index
    %c0_39 = arith.constant 0 : index
    %62 = vector.load %arg8[%c17, %c0_39] : memref<160x32xbf16, #tpu.memory_space<vmem>>, vector<128x32xbf16>
    %c0_40 = arith.constant 0 : index
    %c5 = arith.constant 5 : index
    %63 = vector.load %arg1[%c0_40, %c5] : memref<128x9xf32, #tpu.memory_space<vmem>>, vector<128x1xf32>
    %cst_41 = arith.constant 0.000000e+00 : f32
    %64 = vector.broadcast %cst_41 : f32 to vector<128x1xf32>
    %65 = arith.cmpf ogt, %63, %64 : vector<128x1xf32>
    %cst_42 = arith.constant 0.000000e+00 : bf16
    %66 = vector.broadcast %cst_42 : bf16 to vector<128x32xbf16>
    %67 = vector.shape_cast %65 : vector<128x1xi1> to vector<128x1xi1>
    %68 = vector.broadcast %67 : vector<128x1xi1> to vector<128x32xi1>
    %69 = arith.select %68, %62, %66 : vector<128x32xi1>, vector<128x32xbf16>
    %c0_43 = arith.constant 0 : index
    %c160 = arith.constant 160 : index
    %70 = vector.load %arg9[%c0_43, %c160] : memref<128x288xbf16, #tpu.memory_space<vmem>>, vector<128x32xbf16>
    tpu.vector_store %arg9[%c0_43, %c160], %69 {strides = array<i32>} : memref<128x288xbf16, #tpu.memory_space<vmem>>, vector<128x32xbf16>,
    %c23 = arith.constant 23 : index
    %c0_44 = arith.constant 0 : index
    %71 = vector.load %arg8[%c23, %c0_44] : memref<160x32xbf16, #tpu.memory_space<vmem>>, vector<128x32xbf16>
    %c0_45 = arith.constant 0 : index
    %c6 = arith.constant 6 : index
    %72 = vector.load %arg1[%c0_45, %c6] : memref<128x9xf32, #tpu.memory_space<vmem>>, vector<128x1xf32>
    %cst_46 = arith.constant 0.000000e+00 : f32
    %73 = vector.broadcast %cst_46 : f32 to vector<128x1xf32>
    %74 = arith.cmpf ogt, %72, %73 : vector<128x1xf32>
    %cst_47 = arith.constant 0.000000e+00 : bf16
    %75 = vector.broadcast %cst_47 : bf16 to vector<128x32xbf16>
    %76 = vector.shape_cast %74 : vector<128x1xi1> to vector<128x1xi1>
    %77 = vector.broadcast %76 : vector<128x1xi1> to vector<128x32xi1>
    %78 = arith.select %77, %71, %75 : vector<128x32xi1>, vector<128x32xbf16>
    %c0_48 = arith.constant 0 : index
    %c192 = arith.constant 192 : index
    %79 = vector.load %arg9[%c0_48, %c192] : memref<128x288xbf16, #tpu.memory_space<vmem>>, vector<128x32xbf16>
    tpu.vector_store %arg9[%c0_48, %c192], %78 {strides = array<i32>} : memref<128x288xbf16, #tpu.memory_space<vmem>>, vector<128x32xbf16>,
    %c24 = arith.constant 24 : index
    %c0_49 = arith.constant 0 : index
    %80 = vector.load %arg8[%c24, %c0_49] : memref<160x32xbf16, #tpu.memory_space<vmem>>, vector<128x32xbf16>
    %c0_50 = arith.constant 0 : index
    %c7_51 = arith.constant 7 : index
    %81 = vector.load %arg1[%c0_50, %c7_51] : memref<128x9xf32, #tpu.memory_space<vmem>>, vector<128x1xf32>
    %cst_52 = arith.constant 0.000000e+00 : f32
    %82 = vector.broadcast %cst_52 : f32 to vector<128x1xf32>
    %83 = arith.cmpf ogt, %81, %82 : vector<128x1xf32>
    %cst_53 = arith.constant 0.000000e+00 : bf16
    %84 = vector.broadcast %cst_53 : bf16 to vector<128x32xbf16>
    %85 = vector.shape_cast %83 : vector<128x1xi1> to vector<128x1xi1>
    %86 = vector.broadcast %85 : vector<128x1xi1> to vector<128x32xi1>
    %87 = arith.select %86, %80, %84 : vector<128x32xi1>, vector<128x32xbf16>
    %c0_54 = arith.constant 0 : index
    %c224 = arith.constant 224 : index
    %88 = vector.load %arg9[%c0_54, %c224] : memref<128x288xbf16, #tpu.memory_space<vmem>>, vector<128x32xbf16>
    tpu.vector_store %arg9[%c0_54, %c224], %87 {strides = array<i32>} : memref<128x288xbf16, #tpu.memory_space<vmem>>, vector<128x32xbf16>,
    %c25 = arith.constant 25 : index
    %c0_55 = arith.constant 0 : index
    %89 = vector.load %arg8[%c25, %c0_55] : memref<160x32xbf16, #tpu.memory_space<vmem>>, vector<128x32xbf16>
    %c0_56 = arith.constant 0 : index
    %c8_57 = arith.constant 8 : index
    %90 = vector.load %arg1[%c0_56, %c8_57] : memref<128x9xf32, #tpu.memory_space<vmem>>, vector<128x1xf32>
    %cst_58 = arith.constant 0.000000e+00 : f32
    %91 = vector.broadcast %cst_58 : f32 to vector<128x1xf32>
    %92 = arith.cmpf ogt, %90, %91 : vector<128x1xf32>
    %cst_59 = arith.constant 0.000000e+00 : bf16
    %93 = vector.broadcast %cst_59 : bf16 to vector<128x32xbf16>
    %94 = vector.shape_cast %92 : vector<128x1xi1> to vector<128x1xi1>
    %95 = vector.broadcast %94 : vector<128x1xi1> to vector<128x32xi1>
    %96 = arith.select %95, %89, %93 : vector<128x32xi1>, vector<128x32xbf16>
    %c0_60 = arith.constant 0 : index
    %c256 = arith.constant 256 : index
    %97 = vector.load %arg9[%c0_60, %c256] : memref<128x288xbf16, #tpu.memory_space<vmem>>, vector<128x32xbf16>
    tpu.vector_store %arg9[%c0_60, %c256], %96 {strides = array<i32>} : memref<128x288xbf16, #tpu.memory_space<vmem>>, vector<128x32xbf16>,
    %c0_61 = arith.constant 0 : index
    %c0_62 = arith.constant 0 : index
    %98 = vector.load %arg9[%c0_61, %c0_62] : memref<128x288xbf16, #tpu.memory_space<vmem>>, vector<128x288xbf16>
    %c0_63 = arith.constant 0 : index
    %c0_64 = arith.constant 0 : index
    %99 = vector.load %arg4[%c0_63, %c0_64] : memref<288x32xbf16, #tpu.memory_space<vmem>>, vector<288x32xbf16>
    %cst_65 = arith.constant dense<0.000000e+00> : vector<128x32xf32>
    %100 = tpu.matmul %98, %99, %cst_65 {dimension_numbers = #tpu.dot_dimension_numbers<[1], [0], [0], [1], [0, 0, 1, 1], [], []>} : vector<128x288xbf16>, vector<288x32xbf16>, vector<128x32xf32> -> vector<128x32xf32>
    %c0_66 = arith.constant 0 : index
    %c0_67 = arith.constant 0 : index
    %101 = vector.load %arg5[%c0_66, %c0_67] : memref<1x32xf32, #tpu.memory_space<vmem>>, vector<1x32xf32>
    %102 = vector.broadcast %101 : vector<1x32xf32> to vector<128x32xf32>
    %103 = arith.addf %100, %102 : vector<128x32xf32>
    %c0_68 = arith.constant 0 : index
    %c0_69 = arith.constant 0 : index
    %104 = vector.load %arg10[%c0_68, %c0_69] : memref<128x32xf32, #tpu.memory_space<vmem>>, vector<128x32xf32>
    %105 = arith.addf %103, %104 : vector<128x32xf32>
    %106 = vector.extract_strided_slice %105 {offsets = [0, 0], sizes = [64, 32], strides = [1, 1]} : vector<128x32xf32> to vector<64x32xf32>
    %107 = tpu.transpose %106, [1, 0] : vector<64x32xf32> -> vector<32x64xf32>
    %cst_70 = arith.constant dense<0.000000e+00> : vector<32xf32>
    %108 = vector.multi_reduction <add>, %107, %cst_70 [1] : vector<32x64xf32> to vector<32xf32>
    %109 = vector.shape_cast %108 : vector<32xf32> to vector<32x1xf32>
    %cst_71 = arith.constant 6.400000e+01 : f32
    %110 = vector.broadcast %cst_71 : f32 to vector<32x1xf32>
    %111 = arith.divf %109, %110 : vector<32x1xf32>
    %112 = vector.broadcast %111 : vector<32x1xf32> to vector<32x64xf32>
    %113 = arith.subf %107, %112 : vector<32x64xf32>
    %114 = arith.mulf %113, %113 : vector<32x64xf32>
    %cst_72 = arith.constant dense<0.000000e+00> : vector<32xf32>
    %115 = vector.multi_reduction <add>, %114, %cst_72 [1] : vector<32x64xf32> to vector<32xf32>
    %116 = vector.shape_cast %115 : vector<32xf32> to vector<32x1xf32>
    %cst_73 = arith.constant 6.400000e+01 : f32
    %117 = vector.broadcast %cst_73 : f32 to vector<32x1xf32>
    %118 = arith.divf %116, %117 : vector<32x1xf32>
    %119 = vector.broadcast %111 : vector<32x1xf32> to vector<32x64xf32>
    %120 = arith.subf %107, %119 : vector<32x64xf32>
    %cst_74 = arith.constant 9.99999974E-6 : f32
    %121 = vector.broadcast %cst_74 : f32 to vector<32x1xf32>
    %122 = arith.addf %118, %121 : vector<32x1xf32>
    %123 = math.rsqrt %122 : vector<32x1xf32>
    %124 = vector.broadcast %123 : vector<32x1xf32> to vector<32x64xf32>
    %125 = arith.mulf %120, %124 : vector<32x64xf32>
    %cst_75 = arith.constant 0.000000e+00 : f32
    %126 = vector.broadcast %cst_75 : f32 to vector<32x64xf32>
    %127 = arith.cmpf oge, %125, %126 : vector<32x64xf32>
    %128 = vector.broadcast %0 : f32 to vector<32x64xf32>
    %129 = arith.mulf %128, %125 : vector<32x64xf32>
    %130 = arith.select %127, %125, %129 : vector<32x64xi1>, vector<32x64xf32>
    %c0_76 = arith.constant 0 : index
    %c0_77 = arith.constant 0 : index
    %c0_78 = arith.constant 0 : index
    %131 = vector.load %arg7[%c0_76, %c0_77, %c0_78] : memref<2x32x64xf32, #tpu.memory_space<vmem>>, vector<1x32x64xf32>
    %132 = vector.shape_cast %131 : vector<1x32x64xf32> to vector<32x64xf32>
    %133 = vector.shape_cast %130 : vector<32x64xf32> to vector<1x32x64xf32>
    tpu.vector_store %arg7[%c0_76, %c0_77, %c0_78], %133 {strides = array<i32>} : memref<2x32x64xf32, #tpu.memory_space<vmem>>, vector<1x32x64xf32>,
    %134 = vector.extract_strided_slice %105 {offsets = [64, 0], sizes = [64, 32], strides = [1, 1]} : vector<128x32xf32> to vector<64x32xf32>
    %135 = tpu.transpose %134, [1, 0] : vector<64x32xf32> -> vector<32x64xf32>
    %cst_79 = arith.constant dense<0.000000e+00> : vector<32xf32>
    %136 = vector.multi_reduction <add>, %135, %cst_79 [1] : vector<32x64xf32> to vector<32xf32>
    %137 = vector.shape_cast %136 : vector<32xf32> to vector<32x1xf32>
    %cst_80 = arith.constant 6.400000e+01 : f32
    %138 = vector.broadcast %cst_80 : f32 to vector<32x1xf32>
    %139 = arith.divf %137, %138 : vector<32x1xf32>
    %140 = vector.broadcast %139 : vector<32x1xf32> to vector<32x64xf32>
    %141 = arith.subf %135, %140 : vector<32x64xf32>
    %142 = arith.mulf %141, %141 : vector<32x64xf32>
    %cst_81 = arith.constant dense<0.000000e+00> : vector<32xf32>
    %143 = vector.multi_reduction <add>, %142, %cst_81 [1] : vector<32x64xf32> to vector<32xf32>
    %144 = vector.shape_cast %143 : vector<32xf32> to vector<32x1xf32>
    %cst_82 = arith.constant 6.400000e+01 : f32
    %145 = vector.broadcast %cst_82 : f32 to vector<32x1xf32>
    %146 = arith.divf %144, %145 : vector<32x1xf32>
    %147 = vector.broadcast %139 : vector<32x1xf32> to vector<32x64xf32>
    %148 = arith.subf %135, %147 : vector<32x64xf32>
    %cst_83 = arith.constant 9.99999974E-6 : f32
    %149 = vector.broadcast %cst_83 : f32 to vector<32x1xf32>
    %150 = arith.addf %146, %149 : vector<32x1xf32>
    %151 = math.rsqrt %150 : vector<32x1xf32>
    %152 = vector.broadcast %151 : vector<32x1xf32> to vector<32x64xf32>
    %153 = arith.mulf %148, %152 : vector<32x64xf32>
    %cst_84 = arith.constant 0.000000e+00 : f32
    %154 = vector.broadcast %cst_84 : f32 to vector<32x64xf32>
    %155 = arith.cmpf oge, %153, %154 : vector<32x64xf32>
    %156 = vector.broadcast %0 : f32 to vector<32x64xf32>
    %157 = arith.mulf %156, %153 : vector<32x64xf32>
    %158 = arith.select %155, %153, %157 : vector<32x64xi1>, vector<32x64xf32>
    %c1_85 = arith.constant 1 : index
    %c0_86 = arith.constant 0 : index
    %c0_87 = arith.constant 0 : index
    %159 = vector.load %arg7[%c1_85, %c0_86, %c0_87] : memref<2x32x64xf32, #tpu.memory_space<vmem>>, vector<1x32x64xf32>
    %160 = vector.shape_cast %159 : vector<1x32x64xf32> to vector<32x64xf32>
    %161 = vector.shape_cast %158 : vector<32x64xf32> to vector<1x32x64xf32>
    tpu.vector_store %arg7[%c1_85, %c0_86, %c0_87], %161 {strides = array<i32>} : memref<2x32x64xf32, #tpu.memory_space<vmem>>, vector<1x32x64xf32>,
    return
  }
}

</mosaic_0001>

<llo_original>
// kernel: tpu_custom_call.1
$region0: #{tpu_custom_call.1}
  #allocation0 [shape = 'u32[]', space=smem, size = 0x4, offset = 0x4, fixed_abs, tag = 'smem constant byte address 0x4 - core index']
  #allocation1 [shape = 'u32[72,128]{1,0:T(1,128)}', space=vmem, size = 0x9000, scoped, tag = 'internal scratch']
  #allocation2 [shape = 'bf16[160,32]{1,0:T(8,128)(2,1)}', space=vmem, size = 0xa000, scoped, tag = 'scratch operand']
  #allocation3 [shape = 'bf16[128,288]{1,0:T(8,128)(2,1)}', space=vmem, size = 0x18000, scoped, tag = 'scratch operand']
  #allocation4 [shape = 'f32[128,32]{1,0:T(8,128)}', space=vmem, size = 0x10000, scoped, tag = 'scratch operand']
  #allocation5 [shape = 'f32[1,1]{1,0:T(1,128)S(6)}', space=smem, size = 0x200, scoped, tag = 'scoped memory for tpu_custom_call.1']
  %s0 = inlined_call_operand.vmem [shape: bf16[128,36], index: 0, kind: input, shape index: {}]
  %s1 = inlined_call_operand.vmem [shape: f32[128,9], index: 1, kind: input, shape index: {}]
  %s2 = inlined_call_operand.vmem [shape: bf16[36,64], index: 2, kind: input, shape index: {}]
  %s3 = inlined_call_operand.vmem [shape: f32[1,64], index: 3, kind: input, shape index: {}]
  %s4 = inlined_call_operand.vmem [shape: bf16[288,32], index: 4, kind: input, shape index: {}]
  %s5 = inlined_call_operand.vmem [shape: f32[1,32], index: 5, kind: input, shape index: {}]
  %s6 = inlined_call_operand.<no memory space> [shape: f32[1,1], index: 6, kind: input, shape index: {}]
  %s7 = inlined_call_operand.hbm [shape: f32[2,32,64], index: 7, kind: output, shape index: {}]
  %s8 = sld [smem:[#allocation0]]
  $region38: #{tpu_custom_call.1} parent=0
    _
  %s10 = ssub.s32 1, %s8
  %s11 = scalar_select 0, %s10, %s8
  %12 = sst [smem:[#allocation5]] %s6
  $region1: #{tpu_custom_call.1} parent=0
    #allocation6 [shape = 'u8[32768]{0}', space=vmem, size = 0x8000, scoped, tag = 'output window, operand 0, single buffered']
    #allocation7 [shape = 's32[1]{0}', space=sflag, size = 0x4, scoped, tag = 'scoped memory for tpu_custom_call.1']
    %13 = vsyncpa [#allocation7], 0
    // Predicated region
    $region2: #{tpu_custom_call.1} parent=1 // pred_check
      _
    $region3: #{tpu_custom_call.1} parent=1 // pred_check_branch
      %15 = sbr.rel (0) target = $region5
    $region4: #{tpu_custom_call.1} parent=1 // pred_region
      _
    $region5: #{tpu_custom_call.1} parent=1 // pred_fallthru
      _
    // Predicated region
    $region6: #{tpu_custom_call.1} parent=1 // pred_check
      _
    $region7: #{tpu_custom_call.1} parent=1 // pred_check_branch
      %17 = sbr.rel (0) target = $region9
    $region8: #{tpu_custom_call.1} parent=1 // pred_region
      _
    $region9: #{tpu_custom_call.1} parent=1 // pred_fallthru
      _
    // Predicated region
    $region10: #{tpu_custom_call.1} parent=1 // pred_check
      _
    $region11: #{tpu_custom_call.1} parent=1 // pred_check_branch
      %19 = sbr.rel (0) target = $region13
    $region12: #{tpu_custom_call.1} parent=1 // pred_region
      _
    $region13: #{tpu_custom_call.1} parent=1 // pred_fallthru
      _
    // Predicated region
    $region14: #{tpu_custom_call.1} parent=1 // pred_check
      _
    $region15: #{tpu_custom_call.1} parent=1 // pred_check_branch
      %21 = sbr.rel (0) target = $region17
    $region16: #{tpu_custom_call.1} parent=1 // pred_region
      _
    $region17: #{tpu_custom_call.1} parent=1 // pred_fallthru
      _
    // Predicated region
    $region18: #{tpu_custom_call.1} parent=1 // pred_check
      _
    $region19: #{tpu_custom_call.1} parent=1 // pred_check_branch
      %23 = sbr.rel (0) target = $region21
    $region20: #{tpu_custom_call.1} parent=1 // pred_region
      _
    $region21: #{tpu_custom_call.1} parent=1 // pred_fallthru
      _
    // Predicated region
    $region22: #{tpu_custom_call.1} parent=1 // pred_check
      _
    $region23: #{tpu_custom_call.1} parent=1 // pred_check_branch
      %25 = sbr.rel (0) target = $region25
    $region24: #{tpu_custom_call.1} parent=1 // pred_region
      _
    $region25: #{tpu_custom_call.1} parent=1 // pred_fallthru
      _
    // Predicated region
    $region26: #{tpu_custom_call.1} parent=1 // pred_check
      _
    $region27: #{tpu_custom_call.1} parent=1 // pred_check_branch
      %27 = sbr.rel (0) target = $region29
    $region28: #{tpu_custom_call.1} parent=1 // pred_region
      _
    $region29: #{tpu_custom_call.1} parent=1 // pred_fallthru
      _
    %s31 = sld [smem:[#allocation5]]
    %v32 = vld [vmem:[%s0] sm:$0xf]
    %v33 = vld [vmem:[%s0 + $0x4] sm:$0xf]
    %v34 = vld [vmem:[%s0 + $0x8] sm:$0xf]
    %v35 = vld [vmem:[%s0 + $0xc] sm:$0xf]
    %v36 = vld [vmem:[%s0 + $0x10] sm:$0xf]
    %v37 = vld [vmem:[%s0 + $0x14] sm:$0xf]
    %v38 = vld [vmem:[%s0 + $0x18] sm:$0xf]
    %v39 = vld [vmem:[%s0 + $0x1c] sm:$0xf]
    %v40 = vld [vmem:[%s0 + $0x20] sm:$0xf]
    %v41 = vld [vmem:[%s0 + $0x24] sm:$0xf]
    %v42 = vld [vmem:[%s0 + $0x28] sm:$0xf]
    %v43 = vld [vmem:[%s0 + $0x2c] sm:$0xf]
    %v44 = vld [vmem:[%s0 + $0x30] sm:$0xf]
    %v45 = vld [vmem:[%s0 + $0x34] sm:$0xf]
    %v46 = vld [vmem:[%s0 + $0x38] sm:$0xf]
    %v47 = vld [vmem:[%s0 + $0x3c] sm:$0xf]
    %v48 = vld [vmem:[%s2] sm:$0xf]
    %v49 = vld [vmem:[%s2 + $0x4] sm:$0xf]
    %v50 = vld [vmem:[%s2 + $0x8] sm:$0xf]
    %v51 = vld [vmem:[%s2 + $0xc] sm:$0xf]
    %v52 = vld [vmem:[%s2 + $0x10] sm:$0x3]
    %v53 = vld [vmem:[%s3] sm:$0x1]
    %v55 = vperm.slane %v53, 0
    %v73 = vunpack.c.l.b16 %v32
    %v74 = vunpack.c.l.b16 %v33
    %v75 = vunpack.c.l.b16 %v34
    %v76 = vunpack.c.l.b16 %v35
    %v77 = vunpack.c.l.b16 %v36
    %v78 = vunpack.c.l.b16 %v37
    %v79 = vunpack.c.l.b16 %v38
    %v80 = vunpack.c.l.b16 %v39
    %v81 = vunpack.c.l.b16 %v40
    %v82 = vunpack.c.l.b16 %v41
    %v83 = vunpack.c.l.b16 %v42
    %v84 = vunpack.c.l.b16 %v43
    %v85 = vunpack.c.l.b16 %v44
    %v86 = vunpack.c.l.b16 %v45
    %v87 = vunpack.c.l.b16 %v46
    %v88 = vunpack.c.l.b16 %v47
    %v89 = vpack.c.b16 %v74, %v73
    %v90 = vpack.c.b16 %v76, %v75
    %v91 = vpack.c.b16 %v78, %v77
    %v92 = vpack.c.b16 %v80, %v79
    %v93 = vpack.c.b16 %v82, %v81
    %v94 = vpack.c.b16 %v84, %v83
    %v95 = vpack.c.b16 %v86, %v85
    %v96 = vpack.c.b16 %v88, %v87
    %v102 = vunpack.c.l.b16 %v48
    %v103 = vunpack.c.l.b16 %v49
    %v104 = vunpack.c.l.b16 %v50
    %v105 = vunpack.c.l.b16 %v51
    %v106 = vunpack.c.l.b16 %v52
    %v107 = vpack.c.b16 %v103, %v102
    %v108 = vpack.c.b16 %v105, %v104
    %v109 = vpack.c.b16 %v106, %v106
    %vm112 = vcmask 293888
    %v114 = vsel %vm112, %v89, 0
    %v117 = vsel %vm112, %v90, 0
    %v120 = vsel %vm112, %v91, 0
    %v123 = vsel %vm112, %v92, 0
    %v126 = vsel %vm112, %v93, 0
    %v129 = vsel %vm112, %v94, 0
    %v132 = vsel %vm112, %v95, 0
    %v135 = vsel %vm112, %v96, 0
    %vm137 = vcmask 1041408
    %v139 = vsel %vm137, %v109, 0
    %141 = vmatpush.bf16.msra.mxu0 0
    %142 = vmatpush.bf16.msra.mxu0 0
    %143 = vmatpush.bf16.msra.mxu0 0
    %144 = vmatpush.bf16.msra.mxu0 0
    %145 = vmatpush.bf16.msra.mxu0 0
    %146 = vmatpush.bf16.msra.mxu0 %v139
    %147 = vmatpush.bf16.msra.mxu0 %v108
    %148 = vmatpush.bf16.msra.mxu0 %v107
    %149 = vmatmul.bf16.gmra.mxu0 %v114
    %v150 = vpop.f32.mrf.mxu0
    %v151 = vadd.f32 %v55, %v150
    %v152 = vpop.f32.mrf.mxu0
    %v153 = vadd.f32 %v55, %v152
    %154 = vmatmul.bf16.gmra.mxu0 %v117
    %v155 = vpop.f32.mrf.mxu0
    %v156 = vadd.f32 %v55, %v155
    %v157 = vpop.f32.mrf.mxu0
    %v158 = vadd.f32 %v55, %v157
    %159 = vmatmul.bf16.gmra.mxu0 %v120
    %v160 = vpop.f32.mrf.mxu0
    %v161 = vadd.f32 %v55, %v160
    %v162 = vpop.f32.mrf.mxu0
    %v163 = vadd.f32 %v55, %v162
    %164 = vmatmul.bf16.gmra.mxu0 %v123
    %v165 = vpop.f32.mrf.mxu0
    %v166 = vadd.f32 %v55, %v165
    %v167 = vpop.f32.mrf.mxu0
    %v168 = vadd.f32 %v55, %v167
    %169 = vmatmul.bf16.gmra.mxu0 %v126
    %v170 = vpop.f32.mrf.mxu0
    %v171 = vadd.f32 %v55, %v170
    %v172 = vpop.f32.mrf.mxu0
    %v173 = vadd.f32 %v55, %v172
    %174 = vmatmul.bf16.gmra.mxu0 %v129
    %v175 = vpop.f32.mrf.mxu0
    %v176 = vadd.f32 %v55, %v175
    %v177 = vpop.f32.mrf.mxu0
    %v178 = vadd.f32 %v55, %v177
    %179 = vmatmul.bf16.gmra.mxu0 %v132
    %v180 = vpop.f32.mrf.mxu0
    %v181 = vadd.f32 %v55, %v180
    %v182 = vpop.f32.mrf.mxu0
    %v183 = vadd.f32 %v55, %v182
    %184 = vmatmul.bf16.gmra.mxu0 %v135
    %v185 = vpop.f32.mrf.mxu0
    %v186 = vadd.f32 %v55, %v185
    %v187 = vpop.f32.mrf.mxu0
    %v188 = vadd.f32 %v55, %v187
    %189 = vdwg.mxu0
    %206 = vrot.lane.b32.xlu0 %v151, 96
    %v207 = vpop.permute.xlu0 %206
    %208 = vrot.lane.b32.xlu0 %v153, 96
    %v209 = vpop.permute.xlu0 %208
    %210 = vrot.lane.b32.xlu0 %v156, 96
    %v211 = vpop.permute.xlu0 %210
    %212 = vrot.lane.b32.xlu0 %v158, 96
    %v213 = vpop.permute.xlu0 %212
    %214 = vrot.lane.b32.xlu0 %v161, 96
    %v215 = vpop.permute.xlu0 %214
    %216 = vrot.lane.b32.xlu0 %v163, 96
    %v217 = vpop.permute.xlu0 %216
    %218 = vrot.lane.b32.xlu0 %v166, 96
    %v219 = vpop.permute.xlu0 %218
    %220 = vrot.lane.b32.xlu0 %v168, 96
    %v221 = vpop.permute.xlu0 %220
    %222 = vrot.lane.b32.xlu0 %v171, 96
    %v223 = vpop.permute.xlu0 %222
    %224 = vrot.lane.b32.xlu0 %v173, 96
    %v225 = vpop.permute.xlu0 %224
    %226 = vrot.lane.b32.xlu0 %v176, 96
    %v227 = vpop.permute.xlu0 %226
    %228 = vrot.lane.b32.xlu0 %v178, 96
    %v229 = vpop.permute.xlu0 %228
    %230 = vrot.lane.b32.xlu0 %v181, 96
    %v231 = vpop.permute.xlu0 %230
    %232 = vrot.lane.b32.xlu0 %v183, 96
    %v233 = vpop.permute.xlu0 %232
    %234 = vrot.lane.b32.xlu0 %v186, 96
    %v235 = vpop.permute.xlu0 %234
    %236 = vrot.lane.b32.xlu0 %v188, 96
    %v237 = vpop.permute.xlu0 %236
    %vm254 = vcmask 261120
    %255 = vst.msk [vmem:[#allocation4] sm:$0xff] %vm254, %v207
    %256 = vst.msk [vmem:[#allocation4 + $0x8] sm:$0xff] %vm254, %v209
    %257 = vst.msk [vmem:[#allocation4 + $0x10] sm:$0xff] %vm254, %v211
    %258 = vst.msk [vmem:[#allocation4 + $0x18] sm:$0xff] %vm254, %v213
    %259 = vst.msk [vmem:[#allocation4 + $0x20] sm:$0xff] %vm254, %v215
    %260 = vst.msk [vmem:[#allocation4 + $0x28] sm:$0xff] %vm254, %v217
    %261 = vst.msk [vmem:[#allocation4 + $0x30] sm:$0xff] %vm254, %v219
    %262 = vst.msk [vmem:[#allocation4 + $0x38] sm:$0xff] %vm254, %v221
    %263 = vst.msk [vmem:[#allocation4 + $0x40] sm:$0xff] %vm254, %v223
    %264 = vst.msk [vmem:[#allocation4 + $0x48] sm:$0xff] %vm254, %v225
    %265 = vst.msk [vmem:[#allocation4 + $0x50] sm:$0xff] %vm254, %v227
    %266 = vst.msk [vmem:[#allocation4 + $0x58] sm:$0xff] %vm254, %v229
    %267 = vst.msk [vmem:[#allocation4 + $0x60] sm:$0xff] %vm254, %v231
    %268 = vst.msk [vmem:[#allocation4 + $0x68] sm:$0xff] %vm254, %v233
    %269 = vst.msk [vmem:[#allocation4 + $0x70] sm:$0xff] %vm254, %v235
    %270 = vst.msk [vmem:[#allocation4 + $0x78] sm:$0xff] %vm254, %v237
    %vm271 = vcmp.ge.f32.partialorder %v151, 0.0
    %vm272 = vcmp.ge.f32.partialorder %v153, 0.0
    %vm273 = vcmp.ge.f32.partialorder %v156, 0.0
    %vm274 = vcmp.ge.f32.partialorder %v158, 0.0
    %vm275 = vcmp.ge.f32.partialorder %v161, 0.0
    %vm276 = vcmp.ge.f32.partialorder %v163, 0.0
    %vm277 = vcmp.ge.f32.partialorder %v166, 0.0
    %vm278 = vcmp.ge.f32.partialorder %v168, 0.0
    %vm279 = vcmp.ge.f32.partialorder %v171, 0.0
    %vm280 = vcmp.ge.f32.partialorder %v173, 0.0
    %vm281 = vcmp.ge.f32.partialorder %v176, 0.0
    %vm282 = vcmp.ge.f32.partialorder %v178, 0.0
    %vm283 = vcmp.ge.f32.partialorder %v181, 0.0
    %vm284 = vcmp.ge.f32.partialorder %v183, 0.0
    %vm285 = vcmp.ge.f32.partialorder %v186, 0.0
    %vm286 = vcmp.ge.f32.partialorder %v188, 0.0
    %v287 = vstv %s31
    %v288 = vmul.f32 %v287, %v151
    %v289 = vmul.f32 %v287, %v153
    %v290 = vmul.f32 %v287, %v156
    %v291 = vmul.f32 %v287, %v158
    %v292 = vmul.f32 %v287, %v161
    %v293 = vmul.f32 %v287, %v163
    %v294 = vmul.f32 %v287, %v166
    %v295 = vmul.f32 %v287, %v168
    %v296 = vmul.f32 %v287, %v171
    %v297 = vmul.f32 %v287, %v173
    %v298 = vmul.f32 %v287, %v176
    %v299 = vmul.f32 %v287, %v178
    %v300 = vmul.f32 %v287, %v181
    %v301 = vmul.f32 %v287, %v183
    %v302 = vmul.f32 %v287, %v186
    %v303 = vmul.f32 %v287, %v188
    %v304 = vsel %vm271, %v151, %v288
    %v305 = vsel %vm272, %v153, %v289
    %v306 = vsel %vm273, %v156, %v290
    %v307 = vsel %vm274, %v158, %v291
    %v308 = vsel %vm275, %v161, %v292
    %v309 = vsel %vm276, %v163, %v293
    %v310 = vsel %vm277, %v166, %v294
    %v311 = vsel %vm278, %v168, %v295
    %v312 = vsel %vm279, %v171, %v296
    %v313 = vsel %vm280, %v173, %v297
    %v314 = vsel %vm281, %v176, %v298
    %v315 = vsel %vm282, %v178, %v299
    %v316 = vsel %vm283, %v181, %v300
    %v317 = vsel %vm284, %v183, %v301
    %v318 = vsel %vm285, %v186, %v302
    %v319 = vsel %vm286, %v188, %v303
    %v320 = vpack.c.bf16 %v304, %v304
    %v321 = vpack.c.bf16 %v305, %v305
    %v322 = vpack.c.bf16 %v306, %v306
    %v323 = vpack.c.bf16 %v307, %v307
    %v324 = vpack.c.bf16 %v308, %v308
    %v325 = vpack.c.bf16 %v309, %v309
    %v326 = vpack.c.bf16 %v310, %v310
    %v327 = vpack.c.bf16 %v311, %v311
    %v328 = vpack.c.bf16 %v312, %v312
    %v329 = vpack.c.bf16 %v313, %v313
    %v330 = vpack.c.bf16 %v314, %v314
    %v331 = vpack.c.bf16 %v315, %v315
    %v332 = vpack.c.bf16 %v316, %v316
    %v333 = vpack.c.bf16 %v317, %v317
    %v334 = vpack.c.bf16 %v318, %v318
    %v335 = vpack.c.bf16 %v319, %v319
    %vm336 = vcmask 257024
    %337 = vst.msk [vmem:[#allocation2 + $0x8] sm:$0xf] %vm336, %v320
    %338 = vst.msk [vmem:[#allocation2 + $0xc] sm:$0xf] %vm336, %v321
    %339 = vst.msk [vmem:[#allocation2 + $0x10] sm:$0xf] %vm336, %v322
    %340 = vst.msk [vmem:[#allocation2 + $0x14] sm:$0xf] %vm336, %v323
    %341 = vst.msk [vmem:[#allocation2 + $0x18] sm:$0xf] %vm336, %v324
    %342 = vst.msk [vmem:[#allocation2 + $0x1c] sm:$0xf] %vm336, %v325
    %343 = vst.msk [vmem:[#allocation2 + $0x20] sm:$0xf] %vm336, %v326
    %344 = vst.msk [vmem:[#allocation2 + $0x24] sm:$0xf] %vm336, %v327
    %345 = vst.msk [vmem:[#allocation2 + $0x28] sm:$0xf] %vm336, %v328
    %346 = vst.msk [vmem:[#allocation2 + $0x2c] sm:$0xf] %vm336, %v329
    %347 = vst.msk [vmem:[#allocation2 + $0x30] sm:$0xf] %vm336, %v330
    %348 = vst.msk [vmem:[#allocation2 + $0x34] sm:$0xf] %vm336, %v331
    %349 = vst.msk [vmem:[#allocation2 + $0x38] sm:$0xf] %vm336, %v332
    %350 = vst.msk [vmem:[#allocation2 + $0x3c] sm:$0xf] %vm336, %v333
    %351 = vst.msk [vmem:[#allocation2 + $0x40] sm:$0xf] %vm336, %v334
    %352 = vst.msk [vmem:[#allocation2 + $0x44] sm:$0xf] %vm336, %v335
    %v353 = vld [vmem:[#allocation2] sm:$0x8]
    %v354 = vld [vmem:[#allocation2 + $0x4] sm:$0xf]
    %v355 = vld [vmem:[#allocation2 + $0x8] sm:$0xf]
    %v356 = vld [vmem:[#allocation2 + $0xc] sm:$0xf]
    %v357 = vld [vmem:[#allocation2 + $0x10] sm:$0xf]
    %v358 = vld [vmem:[#allocation2 + $0x14] sm:$0xf]
    %v359 = vld [vmem:[#allocation2 + $0x18] sm:$0xf]
    %v360 = vld [vmem:[#allocation2 + $0x1c] sm:$0xf]
    %v361 = vld [vmem:[#allocation2 + $0x20] sm:$0xf]
    %v362 = vld [vmem:[#allocation2 + $0x24] sm:$0xf]
    %v363 = vld [vmem:[#allocation2 + $0x28] sm:$0xf]
    %v364 = vld [vmem:[#allocation2 + $0x2c] sm:$0xf]
    %v365 = vld [vmem:[#allocation2 + $0x30] sm:$0xf]
    %v366 = vld [vmem:[#allocation2 + $0x34] sm:$0xf]
    %v367 = vld [vmem:[#allocation2 + $0x38] sm:$0xf]
    %v368 = vld [vmem:[#allocation2 + $0x3c] sm:$0xf]
    %v369 = vld [vmem:[#allocation2 + $0x40] sm:$0xf]
    %v370 = vld [vmem:[%s1] sm:$0xff]
    %v371 = vld [vmem:[%s1 + $0x8] sm:$0xff]
    %v372 = vld [vmem:[%s1 + $0x10] sm:$0xff]
    %v373 = vld [vmem:[%s1 + $0x18] sm:$0xff]
    %v374 = vld [vmem:[%s1 + $0x20] sm:$0xff]
    %v375 = vld [vmem:[%s1 + $0x28] sm:$0xff]
    %v376 = vld [vmem:[%s1 + $0x30] sm:$0xff]
    %v377 = vld [vmem:[%s1 + $0x38] sm:$0xff]
    %v378 = vld [vmem:[%s1 + $0x40] sm:$0xff]
    %v379 = vld [vmem:[%s1 + $0x48] sm:$0xff]
    %v380 = vld [vmem:[%s1 + $0x50] sm:$0xff]
    %v381 = vld [vmem:[%s1 + $0x58] sm:$0xff]
    %v382 = vld [vmem:[%s1 + $0x60] sm:$0xff]
    %v383 = vld [vmem:[%s1 + $0x68] sm:$0xff]
    %v384 = vld [vmem:[%s1 + $0x70] sm:$0xff]
    %v385 = vld [vmem:[%s1 + $0x78] sm:$0xff]
    %vm386 = vcmp.gt.f32.partialorder %v370, 0.0
    %vm387 = vcmp.gt.f32.partialorder %v371, 0.0
    %vm388 = vcmp.gt.f32.partialorder %v372, 0.0
    %vm389 = vcmp.gt.f32.partialorder %v373, 0.0
    %vm390 = vcmp.gt.f32.partialorder %v374, 0.0
    %vm391 = vcmp.gt.f32.partialorder %v375, 0.0
    %vm392 = vcmp.gt.f32.partialorder %v376, 0.0
    %vm393 = vcmp.gt.f32.partialorder %v377, 0.0
    %vm394 = vcmp.gt.f32.partialorder %v378, 0.0
    %vm395 = vcmp.gt.f32.partialorder %v379, 0.0
    %vm396 = vcmp.gt.f32.partialorder %v380, 0.0
    %vm397 = vcmp.gt.f32.partialorder %v381, 0.0
    %vm398 = vcmp.gt.f32.partialorder %v382, 0.0
    %vm399 = vcmp.gt.f32.partialorder %v383, 0.0
    %vm400 = vcmp.gt.f32.partialorder %v384, 0.0
    %vm401 = vcmp.gt.f32.partialorder %v385, 0.0
    %v402 = vsel %vm386, 1, 0
    %v403 = vsel %vm387, 1, 0
    %v404 = vsel %vm388, 1, 0
    %v405 = vsel %vm389, 1, 0
    %v406 = vsel %vm390, 1, 0
    %v407 = vsel %vm391, 1, 0
    %v408 = vsel %vm392, 1, 0
    %v409 = vsel %vm393, 1, 0
    %v410 = vsel %vm394, 1, 0
    %v411 = vsel %vm395, 1, 0
    %v412 = vsel %vm396, 1, 0
    %v413 = vsel %vm397, 1, 0
    %v414 = vsel %vm398, 1, 0
    %v415 = vsel %vm399, 1, 0
    %v416 = vsel %vm400, 1, 0
    %v417 = vsel %vm401, 1, 0
    %418 = vset.pattern.permute.xlu0 0
    %419 = vperm.xlu0 %418, %v402
    %v420 = vpop.permute.xlu0 %419
    %421 = vset.pattern.permute.xlu0 0
    %422 = vperm.xlu0 %421, %v403
    %v423 = vpop.permute.xlu0 %422
    %424 = vset.pattern.permute.xlu0 0
    %425 = vperm.xlu0 %424, %v404
    %v426 = vpop.permute.xlu0 %425
    %427 = vset.pattern.permute.xlu0 0
    %428 = vperm.xlu0 %427, %v405
    %v429 = vpop.permute.xlu0 %428
    %430 = vset.pattern.permute.xlu0 0
    %431 = vperm.xlu0 %430, %v406
    %v432 = vpop.permute.xlu0 %431
    %433 = vset.pattern.permute.xlu0 0
    %434 = vperm.xlu0 %433, %v407
    %v435 = vpop.permute.xlu0 %434
    %436 = vset.pattern.permute.xlu0 0
    %437 = vperm.xlu0 %436, %v408
    %v438 = vpop.permute.xlu0 %437
    %439 = vset.pattern.permute.xlu0 0
    %440 = vperm.xlu0 %439, %v409
    %v441 = vpop.permute.xlu0 %440
    %442 = vset.pattern.permute.xlu0 0
    %443 = vperm.xlu0 %442, %v410
    %v444 = vpop.permute.xlu0 %443
    %445 = vset.pattern.permute.xlu0 0
    %446 = vperm.xlu0 %445, %v411
    %v447 = vpop.permute.xlu0 %446
    %448 = vset.pattern.permute.xlu0 0
    %449 = vperm.xlu0 %448, %v412
    %v450 = vpop.permute.xlu0 %449
    %451 = vset.pattern.permute.xlu0 0
    %452 = vperm.xlu0 %451, %v413
    %v453 = vpop.permute.xlu0 %452
    %454 = vset.pattern.permute.xlu0 0
    %455 = vperm.xlu0 %454, %v414
    %v456 = vpop.permute.xlu0 %455
    %457 = vset.pattern.permute.xlu0 0
    %458 = vperm.xlu0 %457, %v415
    %v459 = vpop.permute.xlu0 %458
    %460 = vset.pattern.permute.xlu0 0
    %461 = vperm.xlu0 %460, %v416
    %v462 = vpop.permute.xlu0 %461
    %463 = vset.pattern.permute.xlu0 0
    %464 = vperm.xlu0 %463, %v417
    %v465 = vpop.permute.xlu0 %464
    %vm466 = vcmp.eq.s32.totalorder %v420, 1
    %vm467 = vcmp.eq.s32.totalorder %v423, 1
    %vm468 = vcmp.eq.s32.totalorder %v426, 1
    %vm469 = vcmp.eq.s32.totalorder %v429, 1
    %vm470 = vcmp.eq.s32.totalorder %v432, 1
    %vm471 = vcmp.eq.s32.totalorder %v435, 1
    %vm472 = vcmp.eq.s32.totalorder %v438, 1
    %vm473 = vcmp.eq.s32.totalorder %v441, 1
    %vm474 = vcmp.eq.s32.totalorder %v444, 1
    %vm475 = vcmp.eq.s32.totalorder %v447, 1
    %vm476 = vcmp.eq.s32.totalorder %v450, 1
    %vm477 = vcmp.eq.s32.totalorder %v453, 1
    %vm478 = vcmp.eq.s32.totalorder %v456, 1
    %vm479 = vcmp.eq.s32.totalorder %v459, 1
    %vm480 = vcmp.eq.s32.totalorder %v462, 1
    %vm481 = vcmp.eq.s32.totalorder %v465, 1
    %vm482 = vmpackc.low %vm466, %vm466
    %vm483 = vmpackc.low %vm467, %vm467
    %vm484 = vmpackc.low %vm468, %vm468
    %vm485 = vmpackc.low %vm469, %vm469
    %vm486 = vmpackc.low %vm470, %vm470
    %vm487 = vmpackc.low %vm471, %vm471
    %vm488 = vmpackc.low %vm472, %vm472
    %vm489 = vmpackc.low %vm473, %vm473
    %vm490 = vmpackc.low %vm474, %vm474
    %vm491 = vmpackc.low %vm475, %vm475
    %vm492 = vmpackc.low %vm476, %vm476
    %vm493 = vmpackc.low %vm477, %vm477
    %vm494 = vmpackc.low %vm478, %vm478
    %vm495 = vmpackc.low %vm479, %vm479
    %vm496 = vmpackc.low %vm480, %vm480
    %vm497 = vmpackc.low %vm481, %vm481
    %v498 = vsel %vm482, 65537, 0
    %v499 = vsel %vm483, 65537, 0
    %v500 = vsel %vm484, 65537, 0
    %v501 = vsel %vm485, 65537, 0
    %v502 = vsel %vm486, 65537, 0
    %v503 = vsel %vm487, 65537, 0
    %v504 = vsel %vm488, 65537, 0
    %v505 = vsel %vm489, 65537, 0
    %v506 = vsel %vm490, 65537, 0
    %v507 = vsel %vm491, 65537, 0
    %v508 = vsel %vm492, 65537, 0
    %v509 = vsel %vm493, 65537, 0
    %v510 = vsel %vm494, 65537, 0
    %v511 = vsel %vm495, 65537, 0
    %v512 = vsel %vm496, 65537, 0
    %v513 = vsel %vm497, 65537, 0
    %vm514 = vsmask.f32 3328
    %vm515 = vsmask.f32 7440
    %vm516 = vmor %vm514, %vm515
    %v518 = vshll.u32 %v498, 16
    %v520 = vrot.slane %v518, 5
    %v521 = vshrl.u32 %v498, 16
    %v523 = vrot.slane %v521, 4
    %v524 = vor.u32 %v523, %v520
    %v525 = vrot.slane %v524, 4
    %v527 = vshll.u32 %v499, 16
    %v529 = vrot.slane %v527, 5
    %v530 = vsel %vm516, %v525, %v529
    %v531 = vshrl.u32 %v499, 16
    %v533 = vrot.slane %v531, 4
    %v534 = vor.u32 %v533, %v529
    %v535 = vrot.slane %v534, 4
    %v537 = vshll.u32 %v500, 16
    %v539 = vrot.slane %v537, 5
    %v540 = vsel %vm516, %v535, %v539
    %v541 = vshrl.u32 %v500, 16
    %v543 = vrot.slane %v541, 4
    %v544 = vor.u32 %v543, %v539
    %v545 = vrot.slane %v544, 4
    %v547 = vshll.u32 %v501, 16
    %v549 = vrot.slane %v547, 5
    %v550 = vsel %vm516, %v545, %v549
    %v551 = vshrl.u32 %v501, 16
    %v553 = vrot.slane %v551, 4
    %v554 = vor.u32 %v553, %v549
    %v555 = vrot.slane %v554, 4
    %v557 = vshll.u32 %v502, 16
    %v559 = vrot.slane %v557, 5
    %v560 = vsel %vm516, %v555, %v559
    %v561 = vshrl.u32 %v502, 16
    %v563 = vrot.slane %v561, 4
    %v564 = vor.u32 %v563, %v559
    %v565 = vrot.slane %v564, 4
    %v567 = vshll.u32 %v503, 16
    %v569 = vrot.slane %v567, 5
    %v570 = vsel %vm516, %v565, %v569
    %v571 = vshrl.u32 %v503, 16
    %v573 = vrot.slane %v571, 4
    %v574 = vor.u32 %v573, %v569
    %v575 = vrot.slane %v574, 4
    %v577 = vshll.u32 %v504, 16
    %v579 = vrot.slane %v577, 5
    %v580 = vsel %vm516, %v575, %v579
    %v581 = vshrl.u32 %v504, 16
    %v583 = vrot.slane %v581, 4
    %v584 = vor.u32 %v583, %v579
    %v585 = vrot.slane %v584, 4
    %v587 = vshll.u32 %v505, 16
    %v589 = vrot.slane %v587, 5
    %v590 = vsel %vm516, %v585, %v589
    %v591 = vshrl.u32 %v505, 16
    %v593 = vrot.slane %v591, 4
    %v594 = vor.u32 %v593, %v589
    %v595 = vrot.slane %v594, 4
    %v597 = vshll.u32 %v506, 16
    %v599 = vrot.slane %v597, 5
    %v600 = vsel %vm516, %v595, %v599
    %v601 = vshrl.u32 %v506, 16
    %v603 = vrot.slane %v601, 4
    %v604 = vor.u32 %v603, %v599
    %v605 = vrot.slane %v604, 4
    %v607 = vshll.u32 %v507, 16
    %v609 = vrot.slane %v607, 5
    %v610 = vsel %vm516, %v605, %v609
    %v611 = vshrl.u32 %v507, 16
    %v613 = vrot.slane %v611, 4
    %v614 = vor.u32 %v613, %v609
    %v615 = vrot.slane %v614, 4
    %v617 = vshll.u32 %v508, 16
    %v619 = vrot.slane %v617, 5
    %v620 = vsel %vm516, %v615, %v619
    %v621 = vshrl.u32 %v508, 16
    %v623 = vrot.slane %v621, 4
    %v624 = vor.u32 %v623, %v619
    %v625 = vrot.slane %v624, 4
    %v627 = vshll.u32 %v509, 16
    %v629 = vrot.slane %v627, 5
    %v630 = vsel %vm516, %v625, %v629
    %v631 = vshrl.u32 %v509, 16
    %v633 = vrot.slane %v631, 4
    %v634 = vor.u32 %v633, %v629
    %v635 = vrot.slane %v634, 4
    %v637 = vshll.u32 %v510, 16
    %v639 = vrot.slane %v637, 5
    %v640 = vsel %vm516, %v635, %v639
    %v641 = vshrl.u32 %v510, 16
    %v643 = vrot.slane %v641, 4
    %v644 = vor.u32 %v643, %v639
    %v645 = vrot.slane %v644, 4
    %v647 = vshll.u32 %v511, 16
    %v649 = vrot.slane %v647, 5
    %v650 = vsel %vm516, %v645, %v649
    %v651 = vshrl.u32 %v511, 16
    %v653 = vrot.slane %v651, 4
    %v654 = vor.u32 %v653, %v649
    %v655 = vrot.slane %v654, 4
    %v657 = vshll.u32 %v512, 16
    %v659 = vrot.slane %v657, 5
    %v660 = vsel %vm516, %v655, %v659
    %v661 = vshrl.u32 %v512, 16
    %v663 = vrot.slane %v661, 4
    %v664 = vor.u32 %v663, %v659
    %v665 = vrot.slane %v664, 4
    %v667 = vshll.u32 %v513, 16
    %v669 = vrot.slane %v667, 5
    %v670 = vsel %vm516, %v665, %v669
    %v671 = vshrl.u32 %v513, 16
    %v673 = vrot.slane %v671, 4
    %v674 = vor.u32 %v673, %v669
    %v675 = vrot.slane %v674, 4
    %v676 = vunpack.c.l.b16 %v520
    %v677 = vunpack.c.h.b16 %v520
    %v678 = vunpack.c.l.b16 0
    %v679 = vunpack.c.h.b16 0
    %vm680 = vcmp.ne.s32.totalorder %v676, %v678
    %vm681 = vcmp.ne.s32.totalorder %v677, %v679
    %vm682 = vmpackc.low %vm681, %vm680
    %v683 = vunpack.c.l.b16 %v530
    %v684 = vunpack.c.h.b16 %v530
    %v685 = vunpack.c.l.b16 0
    %v686 = vunpack.c.h.b16 0
    %vm687 = vcmp.ne.s32.totalorder %v683, %v685
    %vm688 = vcmp.ne.s32.totalorder %v684, %v686
    %vm689 = vmpackc.low %vm688, %vm687
    %v690 = vunpack.c.l.b16 %v540
    %v691 = vunpack.c.h.b16 %v540
    %v692 = vunpack.c.l.b16 0
    %v693 = vunpack.c.h.b16 0
    %vm694 = vcmp.ne.s32.totalorder %v690, %v692
    %vm695 = vcmp.ne.s32.totalorder %v691, %v693
    %vm696 = vmpackc.low %vm695, %vm694
    %v697 = vunpack.c.l.b16 %v550
    %v698 = vunpack.c.h.b16 %v550
    %v699 = vunpack.c.l.b16 0
    %v700 = vunpack.c.h.b16 0
    %vm701 = vcmp.ne.s32.totalorder %v697, %v699
    %vm702 = vcmp.ne.s32.totalorder %v698, %v700
    %vm703 = vmpackc.low %vm702, %vm701
    %v704 = vunpack.c.l.b16 %v560
    %v705 = vunpack.c.h.b16 %v560
    %v706 = vunpack.c.l.b16 0
    %v707 = vunpack.c.h.b16 0
    %vm708 = vcmp.ne.s32.totalorder %v704, %v706
    %vm709 = vcmp.ne.s32.totalorder %v705, %v707
    %vm710 = vmpackc.low %vm709, %vm708
    %v711 = vunpack.c.l.b16 %v570
    %v712 = vunpack.c.h.b16 %v570
    %v713 = vunpack.c.l.b16 0
    %v714 = vunpack.c.h.b16 0
    %vm715 = vcmp.ne.s32.totalorder %v711, %v713
    %vm716 = vcmp.ne.s32.totalorder %v712, %v714
    %vm717 = vmpackc.low %vm716, %vm715
    %v718 = vunpack.c.l.b16 %v580
    %v719 = vunpack.c.h.b16 %v580
    %v720 = vunpack.c.l.b16 0
    %v721 = vunpack.c.h.b16 0
    %vm722 = vcmp.ne.s32.totalorder %v718, %v720
    %vm723 = vcmp.ne.s32.totalorder %v719, %v721
    %vm724 = vmpackc.low %vm723, %vm722
    %v725 = vunpack.c.l.b16 %v590
    %v726 = vunpack.c.h.b16 %v590
    %v727 = vunpack.c.l.b16 0
    %v728 = vunpack.c.h.b16 0
    %vm729 = vcmp.ne.s32.totalorder %v725, %v727
    %vm730 = vcmp.ne.s32.totalorder %v726, %v728
    %vm731 = vmpackc.low %vm730, %vm729
    %v732 = vunpack.c.l.b16 %v600
    %v733 = vunpack.c.h.b16 %v600
    %v734 = vunpack.c.l.b16 0
    %v735 = vunpack.c.h.b16 0
    %vm736 = vcmp.ne.s32.totalorder %v732, %v734
    %vm737 = vcmp.ne.s32.totalorder %v733, %v735
    %vm738 = vmpackc.low %vm737, %vm736
    %v739 = vunpack.c.l.b16 %v610
    %v740 = vunpack.c.h.b16 %v610
    %v741 = vunpack.c.l.b16 0
    %v742 = vunpack.c.h.b16 0
    %vm743 = vcmp.ne.s32.totalorder %v739, %v741
    %vm744 = vcmp.ne.s32.totalorder %v740, %v742
    %vm745 = vmpackc.low %vm744, %vm743
    %v746 = vunpack.c.l.b16 %v620
    %v747 = vunpack.c.h.b16 %v620
    %v748 = vunpack.c.l.b16 0
    %v749 = vunpack.c.h.b16 0
    %vm750 = vcmp.ne.s32.totalorder %v746, %v748
    %vm751 = vcmp.ne.s32.totalorder %v747, %v749
    %vm752 = vmpackc.low %vm751, %vm750
    %v753 = vunpack.c.l.b16 %v630
    %v754 = vunpack.c.h.b16 %v630
    %v755 = vunpack.c.l.b16 0
    %v756 = vunpack.c.h.b16 0
    %vm757 = vcmp.ne.s32.totalorder %v753, %v755
    %vm758 = vcmp.ne.s32.totalorder %v754, %v756
    %vm759 = vmpackc.low %vm758, %vm757
    %v760 = vunpack.c.l.b16 %v640
    %v761 = vunpack.c.h.b16 %v640
    %v762 = vunpack.c.l.b16 0
    %v763 = vunpack.c.h.b16 0
    %vm764 = vcmp.ne.s32.totalorder %v760, %v762
    %vm765 = vcmp.ne.s32.totalorder %v761, %v763
    %vm766 = vmpackc.low %vm765, %vm764
    %v767 = vunpack.c.l.b16 %v650
    %v768 = vunpack.c.h.b16 %v650
    %v769 = vunpack.c.l.b16 0
    %v770 = vunpack.c.h.b16 0
    %vm771 = vcmp.ne.s32.totalorder %v767, %v769
    %vm772 = vcmp.ne.s32.totalorder %v768, %v770
    %vm773 = vmpackc.low %vm772, %vm771
    %v774 = vunpack.c.l.b16 %v660
    %v775 = vunpack.c.h.b16 %v660
    %v776 = vunpack.c.l.b16 0
    %v777 = vunpack.c.h.b16 0
    %vm778 = vcmp.ne.s32.totalorder %v774, %v776
    %vm779 = vcmp.ne.s32.totalorder %v775, %v777
    %vm780 = vmpackc.low %vm779, %vm778
    %v781 = vunpack.c.l.b16 %v670
    %v782 = vunpack.c.h.b16 %v670
    %v783 = vunpack.c.l.b16 0
    %v784 = vunpack.c.h.b16 0
    %vm785 = vcmp.ne.s32.totalorder %v781, %v783
    %vm786 = vcmp.ne.s32.totalorder %v782, %v784
    %vm787 = vmpackc.low %vm786, %vm785
    %v788 = vunpack.c.l.b16 %v675
    %v789 = vunpack.c.h.b16 %v675
    %v790 = vunpack.c.l.b16 0
    %v791 = vunpack.c.h.b16 0
    %vm792 = vcmp.ne.s32.totalorder %v788, %v790
    %vm793 = vcmp.ne.s32.totalorder %v789, %v791
    %vm794 = vmpackc.low %vm793, %vm792
    %v795 = vsel %vm682, %v353, 0
    %v796 = vsel %vm689, %v354, 0
    %v797 = vsel %vm696, %v355, 0
    %v798 = vsel %vm703, %v356, 0
    %v799 = vsel %vm710, %v357, 0
    %v800 = vsel %vm717, %v358, 0
    %v801 = vsel %vm724, %v359, 0
    %v802 = vsel %vm731, %v360, 0
    %v803 = vsel %vm738, %v361, 0
    %v804 = vsel %vm745, %v362, 0
    %v805 = vsel %vm752, %v363, 0
    %v806 = vsel %vm759, %v364, 0
    %v807 = vsel %vm766, %v365, 0
    %v808 = vsel %vm773, %v366, 0
    %v809 = vsel %vm780, %v367, 0
    %v810 = vsel %vm787, %v368, 0
    %v811 = vsel %vm794, %v369, 0
    %vm812 = vsmask.f32 256
    %vm813 = vsmask.f32 4368
    %vm814 = vmor %vm812, %vm813
    %v816 = vshrl.u32 %v795, 16
    %v818 = vrot.slane %v816, 7
    %v819 = vrot.slane %v818, 4
    %v821 = vshrl.u32 %v796, 16
    %v823 = vrot.slane %v821, 7
    %v824 = vshll.u32 %v796, 16
    %v826 = vor.u32 %v823, %v824
    %v827 = vsel %vm814, %v819, %v826
    %v828 = vrot.slane %v823, 4
    %v830 = vshrl.u32 %v797, 16
    %v832 = vrot.slane %v830, 7
    %v833 = vshll.u32 %v797, 16
    %v835 = vor.u32 %v832, %v833
    %v836 = vsel %vm814, %v828, %v835
    %v837 = vrot.slane %v832, 4
    %v839 = vshrl.u32 %v798, 16
    %v841 = vrot.slane %v839, 7
    %v842 = vshll.u32 %v798, 16
    %v844 = vor.u32 %v841, %v842
    %v845 = vsel %vm814, %v837, %v844
    %v846 = vrot.slane %v841, 4
    %v848 = vshrl.u32 %v799, 16
    %v850 = vrot.slane %v848, 7
    %v851 = vshll.u32 %v799, 16
    %v853 = vor.u32 %v850, %v851
    %v854 = vsel %vm814, %v846, %v853
    %v855 = vrot.slane %v850, 4
    %v857 = vshrl.u32 %v800, 16
    %v859 = vrot.slane %v857, 7
    %v860 = vshll.u32 %v800, 16
    %v862 = vor.u32 %v859, %v860
    %v863 = vsel %vm814, %v855, %v862
    %v864 = vrot.slane %v859, 4
    %v866 = vshrl.u32 %v801, 16
    %v868 = vrot.slane %v866, 7
    %v869 = vshll.u32 %v801, 16
    %v871 = vor.u32 %v868, %v869
    %v872 = vsel %vm814, %v864, %v871
    %v873 = vrot.slane %v868, 4
    %v875 = vshrl.u32 %v802, 16
    %v877 = vrot.slane %v875, 7
    %v878 = vshll.u32 %v802, 16
    %v880 = vor.u32 %v877, %v878
    %v881 = vsel %vm814, %v873, %v880
    %v882 = vrot.slane %v877, 4
    %v884 = vshrl.u32 %v803, 16
    %v886 = vrot.slane %v884, 7
    %v887 = vshll.u32 %v803, 16
    %v889 = vor.u32 %v886, %v887
    %v890 = vsel %vm814, %v882, %v889
    %v891 = vrot.slane %v886, 4
    %v893 = vshrl.u32 %v804, 16
    %v895 = vrot.slane %v893, 7
    %v896 = vshll.u32 %v804, 16
    %v898 = vor.u32 %v895, %v896
    %v899 = vsel %vm814, %v891, %v898
    %v900 = vrot.slane %v895, 4
    %v902 = vshrl.u32 %v805, 16
    %v904 = vrot.slane %v902, 7
    %v905 = vshll.u32 %v805, 16
    %v907 = vor.u32 %v904, %v905
    %v908 = vsel %vm814, %v900, %v907
    %v909 = vrot.slane %v904, 4
    %v911 = vshrl.u32 %v806, 16
    %v913 = vrot.slane %v911, 7
    %v914 = vshll.u32 %v806, 16
    %v916 = vor.u32 %v913, %v914
    %v917 = vsel %vm814, %v909, %v916
    %v918 = vrot.slane %v913, 4
    %v920 = vshrl.u32 %v807, 16
    %v922 = vrot.slane %v920, 7
    %v923 = vshll.u32 %v807, 16
    %v925 = vor.u32 %v922, %v923
    %v926 = vsel %vm814, %v918, %v925
    %v927 = vrot.slane %v922, 4
    %v929 = vshrl.u32 %v808, 16
    %v931 = vrot.slane %v929, 7
    %v932 = vshll.u32 %v808, 16
    %v934 = vor.u32 %v931, %v932
    %v935 = vsel %vm814, %v927, %v934
    %v936 = vrot.slane %v931, 4
    %v938 = vshrl.u32 %v809, 16
    %v940 = vrot.slane %v938, 7
    %v941 = vshll.u32 %v809, 16
    %v943 = vor.u32 %v940, %v941
    %v944 = vsel %vm814, %v936, %v943
    %v945 = vrot.slane %v940, 4
    %v947 = vshrl.u32 %v810, 16
    %v949 = vrot.slane %v947, 7
    %v950 = vshll.u32 %v810, 16
    %v952 = vor.u32 %v949, %v950
    %v953 = vsel %vm814, %v945, %v952
    %v954 = vrot.slane %v949, 4
    %v956 = vshrl.u32 %v811, 16
    %v958 = vrot.slane %v956, 7
    %v959 = vshll.u32 %v811, 16
    %v961 = vor.u32 %v958, %v959
    %v962 = vsel %vm814, %v954, %v961
    %979 = vst.msk [vmem:[#allocation3] sm:$0xf] %vm336, %v827
    %980 = vst.msk [vmem:[#allocation3 + $0xc] sm:$0xf] %vm336, %v836
    %981 = vst.msk [vmem:[#allocation3 + $0x18] sm:$0xf] %vm336, %v845
    %982 = vst.msk [vmem:[#allocation3 + $0x24] sm:$0xf] %vm336, %v854
    %983 = vst.msk [vmem:[#allocation3 + $0x30] sm:$0xf] %vm336, %v863
    %984 = vst.msk [vmem:[#allocation3 + $0x3c] sm:$0xf] %vm336, %v872
    %985 = vst.msk [vmem:[#allocation3 + $0x48] sm:$0xf] %vm336, %v881
    %986 = vst.msk [vmem:[#allocation3 + $0x54] sm:$0xf] %vm336, %v890
    %987 = vst.msk [vmem:[#allocation3 + $0x60] sm:$0xf] %vm336, %v899
    %988 = vst.msk [vmem:[#allocation3 + $0x6c] sm:$0xf] %vm336, %v908
    %989 = vst.msk [vmem:[#allocation3 + $0x78] sm:$0xf] %vm336, %v917
    %990 = vst.msk [vmem:[#allocation3 + $0x84] sm:$0xf] %vm336, %v926
    %991 = vst.msk [vmem:[#allocation3 + $0x90] sm:$0xf] %vm336, %v935
    %992 = vst.msk [vmem:[#allocation3 + $0x9c] sm:$0xf] %vm336, %v944
    %993 = vst.msk [vmem:[#allocation3 + $0xa8] sm:$0xf] %vm336, %v953
    %994 = vst.msk [vmem:[#allocation3 + $0xb4] sm:$0xf] %vm336, %v962
    %v995 = vld [vmem:[#allocation2 + $0x4] sm:$0xf]
    %v996 = vld [vmem:[#allocation2 + $0x8] sm:$0xf]
    %v997 = vld [vmem:[#allocation2 + $0xc] sm:$0xf]
    %v998 = vld [vmem:[#allocation2 + $0x10] sm:$0xf]
    %v999 = vld [vmem:[#allocation2 + $0x14] sm:$0xf]
    %v1000 = vld [vmem:[#allocation2 + $0x18] sm:$0xf]
    %v1001 = vld [vmem:[#allocation2 + $0x1c] sm:$0xf]
    %v1002 = vld [vmem:[#allocation2 + $0x20] sm:$0xf]
    %v1003 = vld [vmem:[#allocation2 + $0x24] sm:$0xf]
    %v1004 = vld [vmem:[#allocation2 + $0x28] sm:$0xf]
    %v1005 = vld [vmem:[#allocation2 + $0x2c] sm:$0xf]
    %v1006 = vld [vmem:[#allocation2 + $0x30] sm:$0xf]
    %v1007 = vld [vmem:[#allocation2 + $0x34] sm:$0xf]
    %v1008 = vld [vmem:[#allocation2 + $0x38] sm:$0xf]
    %v1009 = vld [vmem:[#allocation2 + $0x3c] sm:$0xf]
    %v1010 = vld [vmem:[#allocation2 + $0x40] sm:$0xf]
    %v1011 = vld [vmem:[%s1] sm:$0xff]
    %v1012 = vld [vmem:[%s1 + $0x8] sm:$0xff]
    %v1013 = vld [vmem:[%s1 + $0x10] sm:$0xff]
    %v1014 = vld [vmem:[%s1 + $0x18] sm:$0xff]
    %v1015 = vld [vmem:[%s1 + $0x20] sm:$0xff]
    %v1016 = vld [vmem:[%s1 + $0x28] sm:$0xff]
    %v1017 = vld [vmem:[%s1 + $0x30] sm:$0xff]
    %v1018 = vld [vmem:[%s1 + $0x38] sm:$0xff]
    %v1019 = vld [vmem:[%s1 + $0x40] sm:$0xff]
    %v1020 = vld [vmem:[%s1 + $0x48] sm:$0xff]
    %v1021 = vld [vmem:[%s1 + $0x50] sm:$0xff]
    %v1022 = vld [vmem:[%s1 + $0x58] sm:$0xff]
    %v1023 = vld [vmem:[%s1 + $0x60] sm:$0xff]
    %v1024 = vld [vmem:[%s1 + $0x68] sm:$0xff]
    %v1025 = vld [vmem:[%s1 + $0x70] sm:$0xff]
    %v1026 = vld [vmem:[%s1 + $0x78] sm:$0xff]
    %vm1027 = vcmp.gt.f32.partialorder %v1011, 0.0
    %vm1028 = vcmp.gt.f32.partialorder %v1012, 0.0
    %vm1029 = vcmp.gt.f32.partialorder %v1013, 0.0
    %vm1030 = vcmp.gt.f32.partialorder %v1014, 0.0
    %vm1031 = vcmp.gt.f32.partialorder %v1015, 0.0
    %vm1032 = vcmp.gt.f32.partialorder %v1016, 0.0
    %vm1033 = vcmp.gt.f32.partialorder %v1017, 0.0
    %vm1034 = vcmp.gt.f32.partialorder %v1018, 0.0
    %vm1035 = vcmp.gt.f32.partialorder %v1019, 0.0
    %vm1036 = vcmp.gt.f32.partialorder %v1020, 0.0
    %vm1037 = vcmp.gt.f32.partialorder %v1021, 0.0
    %vm1038 = vcmp.gt.f32.partialorder %v1022, 0.0
    %vm1039 = vcmp.gt.f32.partialorder %v1023, 0.0
    %vm1040 = vcmp.gt.f32.partialorder %v1024, 0.0
    %vm1041 = vcmp.gt.f32.partialorder %v1025, 0.0
    %vm1042 = vcmp.gt.f32.partialorder %v1026, 0.0
    %v1043 = vsel %vm1027, 1, 0
    %v1044 = vsel %vm1028, 1, 0
    %v1045 = vsel %vm1029, 1, 0
    %v1046 = vsel %vm1030, 1, 0
    %v1047 = vsel %vm1031, 1, 0
    %v1048 = vsel %vm1032, 1, 0
    %v1049 = vsel %vm1033, 1, 0
    %v1050 = vsel %vm1034, 1, 0
    %v1051 = vsel %vm1035, 1, 0
    %v1052 = vsel %vm1036, 1, 0
    %v1053 = vsel %vm1037, 1, 0
    %v1054 = vsel %vm1038, 1, 0
    %v1055 = vsel %vm1039, 1, 0
    %v1056 = vsel %vm1040, 1, 0
    %v1057 = vsel %vm1041, 1, 0
    %v1058 = vsel %vm1042, 1, 0
    %1059 = vset.pattern.permute.xlu0 1
    %1060 = vperm.xlu0 %1059, %v1043
    %v1061 = vpop.permute.xlu0 %1060
    %1062 = vset.pattern.permute.xlu0 1
    %1063 = vperm.xlu0 %1062, %v1044
    %v1064 = vpop.permute.xlu0 %1063
    %1065 = vset.pattern.permute.xlu0 1
    %1066 = vperm.xlu0 %1065, %v1045
    %v1067 = vpop.permute.xlu0 %1066
    %1068 = vset.pattern.permute.xlu0 1
    %1069 = vperm.xlu0 %1068, %v1046
    %v1070 = vpop.permute.xlu0 %1069
    %1071 = vset.pattern.permute.xlu0 1
    %1072 = vperm.xlu0 %1071, %v1047
    %v1073 = vpop.permute.xlu0 %1072
    %1074 = vset.pattern.permute.xlu0 1
    %1075 = vperm.xlu0 %1074, %v1048
    %v1076 = vpop.permute.xlu0 %1075
    %1077 = vset.pattern.permute.xlu0 1
    %1078 = vperm.xlu0 %1077, %v1049
    %v1079 = vpop.permute.xlu0 %1078
    %1080 = vset.pattern.permute.xlu0 1
    %1081 = vperm.xlu0 %1080, %v1050
    %v1082 = vpop.permute.xlu0 %1081
    %1083 = vset.pattern.permute.xlu0 1
    %1084 = vperm.xlu0 %1083, %v1051
    %v1085 = vpop.permute.xlu0 %1084
    %1086 = vset.pattern.permute.xlu0 1
    %1087 = vperm.xlu0 %1086, %v1052
    %v1088 = vpop.permute.xlu0 %1087
    %1089 = vset.pattern.permute.xlu0 1
    %1090 = vperm.xlu0 %1089, %v1053
    %v1091 = vpop.permute.xlu0 %1090
    %1092 = vset.pattern.permute.xlu0 1
    %1093 = vperm.xlu0 %1092, %v1054
    %v1094 = vpop.permute.xlu0 %1093
    %1095 = vset.pattern.permute.xlu0 1
    %1096 = vperm.xlu0 %1095, %v1055
    %v1097 = vpop.permute.xlu0 %1096
    %1098 = vset.pattern.permute.xlu0 1
    %1099 = vperm.xlu0 %1098, %v1056
    %v1100 = vpop.permute.xlu0 %1099
    %1101 = vset.pattern.permute.xlu0 1
    %1102 = vperm.xlu0 %1101, %v1057
    %v1103 = vpop.permute.xlu0 %1102
    %1104 = vset.pattern.permute.xlu0 1
    %1105 = vperm.xlu0 %1104, %v1058
    %v1106 = vpop.permute.xlu0 %1105
    %vm1107 = vcmp.eq.s32.totalorder %v1061, 1
    %vm1108 = vcmp.eq.s32.totalorder %v1064, 1
    %vm1109 = vcmp.eq.s32.totalorder %v1067, 1
    %vm1110 = vcmp.eq.s32.totalorder %v1070, 1
    %vm1111 = vcmp.eq.s32.totalorder %v1073, 1
    %vm1112 = vcmp.eq.s32.totalorder %v1076, 1
    %vm1113 = vcmp.eq.s32.totalorder %v1079, 1
    %vm1114 = vcmp.eq.s32.totalorder %v1082, 1
    %vm1115 = vcmp.eq.s32.totalorder %v1085, 1
    %vm1116 = vcmp.eq.s32.totalorder %v1088, 1
    %vm1117 = vcmp.eq.s32.totalorder %v1091, 1
    %vm1118 = vcmp.eq.s32.totalorder %v1094, 1
    %vm1119 = vcmp.eq.s32.totalorder %v1097, 1
    %vm1120 = vcmp.eq.s32.totalorder %v1100, 1
    %vm1121 = vcmp.eq.s32.totalorder %v1103, 1
    %vm1122 = vcmp.eq.s32.totalorder %v1106, 1
    %vm1123 = vmpackc.low %vm1107, %vm1107
    %vm1124 = vmpackc.low %vm1108, %vm1108
    %vm1125 = vmpackc.low %vm1109, %vm1109
    %vm1126 = vmpackc.low %vm1110, %vm1110
    %vm1127 = vmpackc.low %vm1111, %vm1111
    %vm1128 = vmpackc.low %vm1112, %vm1112
    %vm1129 = vmpackc.low %vm1113, %vm1113
    %vm1130 = vmpackc.low %vm1114, %vm1114
    %vm1131 = vmpackc.low %vm1115, %vm1115
    %vm1132 = vmpackc.low %vm1116, %vm1116
    %vm1133 = vmpackc.low %vm1117, %vm1117
    %vm1134 = vmpackc.low %vm1118, %vm1118
    %vm1135 = vmpackc.low %vm1119, %vm1119
    %vm1136 = vmpackc.low %vm1120, %vm1120
    %vm1137 = vmpackc.low %vm1121, %vm1121
    %vm1138 = vmpackc.low %vm1122, %vm1122
    %v1139 = vsel %vm1123, %v995, 0
    %v1140 = vsel %vm1124, %v996, 0
    %v1141 = vsel %vm1125, %v997, 0
    %v1142 = vsel %vm1126, %v998, 0
    %v1143 = vsel %vm1127, %v999, 0
    %v1144 = vsel %vm1128, %v1000, 0
    %v1145 = vsel %vm1129, %v1001, 0
    %v1146 = vsel %vm1130, %v1002, 0
    %v1147 = vsel %vm1131, %v1003, 0
    %v1148 = vsel %vm1132, %v1004, 0
    %v1149 = vsel %vm1133, %v1005, 0
    %v1150 = vsel %vm1134, %v1006, 0
    %v1151 = vsel %vm1135, %v1007, 0
    %v1152 = vsel %vm1136, %v1008, 0
    %v1153 = vsel %vm1137, %v1009, 0
    %v1154 = vsel %vm1138, %v1010, 0
    %1171 = vrot.lane.b32.xlu0 %v1139, 32
    %v1172 = vpop.permute.xlu0 %1171
    %1173 = vrot.lane.b32.xlu0 %v1140, 32
    %v1174 = vpop.permute.xlu0 %1173
    %1175 = vrot.lane.b32.xlu0 %v1141, 32
    %v1176 = vpop.permute.xlu0 %1175
    %1177 = vrot.lane.b32.xlu0 %v1142, 32
    %v1178 = vpop.permute.xlu0 %1177
    %1179 = vrot.lane.b32.xlu0 %v1143, 32
    %v1180 = vpop.permute.xlu0 %1179
    %1181 = vrot.lane.b32.xlu0 %v1144, 32
    %v1182 = vpop.permute.xlu0 %1181
    %1183 = vrot.lane.b32.xlu0 %v1145, 32
    %v1184 = vpop.permute.xlu0 %1183
    %1185 = vrot.lane.b32.xlu0 %v1146, 32
    %v1186 = vpop.permute.xlu0 %1185
    %1187 = vrot.lane.b32.xlu0 %v1147, 32
    %v1188 = vpop.permute.xlu0 %1187
    %1189 = vrot.lane.b32.xlu0 %v1148, 32
    %v1190 = vpop.permute.xlu0 %1189
    %1191 = vrot.lane.b32.xlu0 %v1149, 32
    %v1192 = vpop.permute.xlu0 %1191
    %1193 = vrot.lane.b32.xlu0 %v1150, 32
    %v1194 = vpop.permute.xlu0 %1193
    %1195 = vrot.lane.b32.xlu0 %v1151, 32
    %v1196 = vpop.permute.xlu0 %1195
    %1197 = vrot.lane.b32.xlu0 %v1152, 32
    %v1198 = vpop.permute.xlu0 %1197
    %1199 = vrot.lane.b32.xlu0 %v1153, 32
    %v1200 = vpop.permute.xlu0 %1199
    %1201 = vrot.lane.b32.xlu0 %v1154, 32
    %v1202 = vpop.permute.xlu0 %1201
    %vm1219 = vcmask 519424
    %1220 = vst.msk [vmem:[#allocation3] sm:$0xf] %vm1219, %v1172
    %1221 = vst.msk [vmem:[#allocation3 + $0xc] sm:$0xf] %vm1219, %v1174
    %1222 = vst.msk [vmem:[#allocation3 + $0x18] sm:$0xf] %vm1219, %v1176
    %1223 = vst.msk [vmem:[#allocation3 + $0x24] sm:$0xf] %vm1219, %v1178
    %1224 = vst.msk [vmem:[#allocation3 + $0x30] sm:$0xf] %vm1219, %v1180
    %1225 = vst.msk [vmem:[#allocation3 + $0x3c] sm:$0xf] %vm1219, %v1182
    %1226 = vst.msk [vmem:[#allocation3 + $0x48] sm:$0xf] %vm1219, %v1184
    %1227 = vst.msk [vmem:[#allocation3 + $0x54] sm:$0xf] %vm1219, %v1186
    %1228 = vst.msk [vmem:[#allocation3 + $0x60] sm:$0xf] %vm1219, %v1188
    %1229 = vst.msk [vmem:[#allocation3 + $0x6c] sm:$0xf] %vm1219, %v1190
    %1230 = vst.msk [vmem:[#allocation3 + $0x78] sm:$0xf] %vm1219, %v1192
    %1231 = vst.msk [vmem:[#allocation3 + $0x84] sm:$0xf] %vm1219, %v1194
    %1232 = vst.msk [vmem:[#allocation3 + $0x90] sm:$0xf] %vm1219, %v1196
    %1233 = vst.msk [vmem:[#allocation3 + $0x9c] sm:$0xf] %vm1219, %v1198
    %1234 = vst.msk [vmem:[#allocation3 + $0xa8] sm:$0xf] %vm1219, %v1200
    %1235 = vst.msk [vmem:[#allocation3 + $0xb4] sm:$0xf] %vm1219, %v1202
    %v1236 = vld [vmem:[#allocation2 + $0x4] sm:$0xf]
    %v1237 = vld [vmem:[#allocation2 + $0x8] sm:$0xf]
    %v1238 = vld [vmem:[#allocation2 + $0xc] sm:$0xf]
    %v1239 = vld [vmem:[#allocation2 + $0x10] sm:$0xf]
    %v1240 = vld [vmem:[#allocation2 + $0x14] sm:$0xf]
    %v1241 = vld [vmem:[#allocation2 + $0x18] sm:$0xf]
    %v1242 = vld [vmem:[#allocation2 + $0x1c] sm:$0xf]
    %v1243 = vld [vmem:[#allocation2 + $0x20] sm:$0xf]
    %v1244 = vld [vmem:[#allocation2 + $0x24] sm:$0xf]
    %v1245 = vld [vmem:[#allocation2 + $0x28] sm:$0xf]
    %v1246 = vld [vmem:[#allocation2 + $0x2c] sm:$0xf]
    %v1247 = vld [vmem:[#allocation2 + $0x30] sm:$0xf]
    %v1248 = vld [vmem:[#allocation2 + $0x34] sm:$0xf]
    %v1249 = vld [vmem:[#allocation2 + $0x38] sm:$0xf]
    %v1250 = vld [vmem:[#allocation2 + $0x3c] sm:$0xf]
    %v1251 = vld [vmem:[#allocation2 + $0x40] sm:$0xf]
    %v1252 = vld [vmem:[#allocation2 + $0x44] sm:$0x1]
    %v1253 = vld [vmem:[%s1] sm:$0xff]
    %v1254 = vld [vmem:[%s1 + $0x8] sm:$0xff]
    %v1255 = vld [vmem:[%s1 + $0x10] sm:$0xff]
    %v1256 = vld [vmem:[%s1 + $0x18] sm:$0xff]
    %v1257 = vld [vmem:[%s1 + $0x20] sm:$0xff]
    %v1258 = vld [vmem:[%s1 + $0x28] sm:$0xff]
    %v1259 = vld [vmem:[%s1 + $0x30] sm:$0xff]
    %v1260 = vld [vmem:[%s1 + $0x38] sm:$0xff]
    %v1261 = vld [vmem:[%s1 + $0x40] sm:$0xff]
    %v1262 = vld [vmem:[%s1 + $0x48] sm:$0xff]
    %v1263 = vld [vmem:[%s1 + $0x50] sm:$0xff]
    %v1264 = vld [vmem:[%s1 + $0x58] sm:$0xff]
    %v1265 = vld [vmem:[%s1 + $0x60] sm:$0xff]
    %v1266 = vld [vmem:[%s1 + $0x68] sm:$0xff]
    %v1267 = vld [vmem:[%s1 + $0x70] sm:$0xff]
    %v1268 = vld [vmem:[%s1 + $0x78] sm:$0xff]
    %vm1269 = vcmp.gt.f32.partialorder %v1253, 0.0
    %vm1270 = vcmp.gt.f32.partialorder %v1254, 0.0
    %vm1271 = vcmp.gt.f32.partialorder %v1255, 0.0
    %vm1272 = vcmp.gt.f32.partialorder %v1256, 0.0
    %vm1273 = vcmp.gt.f32.partialorder %v1257, 0.0
    %vm1274 = vcmp.gt.f32.partialorder %v1258, 0.0
    %vm1275 = vcmp.gt.f32.partialorder %v1259, 0.0
    %vm1276 = vcmp.gt.f32.partialorder %v1260, 0.0
    %vm1277 = vcmp.gt.f32.partialorder %v1261, 0.0
    %vm1278 = vcmp.gt.f32.partialorder %v1262, 0.0
    %vm1279 = vcmp.gt.f32.partialorder %v1263, 0.0
    %vm1280 = vcmp.gt.f32.partialorder %v1264, 0.0
    %vm1281 = vcmp.gt.f32.partialorder %v1265, 0.0
    %vm1282 = vcmp.gt.f32.partialorder %v1266, 0.0
    %vm1283 = vcmp.gt.f32.partialorder %v1267, 0.0
    %vm1284 = vcmp.gt.f32.partialorder %v1268, 0.0
    %v1285 = vsel %vm1269, 1, 0
    %v1286 = vsel %vm1270, 1, 0
    %v1287 = vsel %vm1271, 1, 0
    %v1288 = vsel %vm1272, 1, 0
    %v1289 = vsel %vm1273, 1, 0
    %v1290 = vsel %vm1274, 1, 0
    %v1291 = vsel %vm1275, 1, 0
    %v1292 = vsel %vm1276, 1, 0
    %v1293 = vsel %vm1277, 1, 0
    %v1294 = vsel %vm1278, 1, 0
    %v1295 = vsel %vm1279, 1, 0
    %v1296 = vsel %vm1280, 1, 0
    %v1297 = vsel %vm1281, 1, 0
    %v1298 = vsel %vm1282, 1, 0
    %v1299 = vsel %vm1283, 1, 0
    %v1300 = vsel %vm1284, 1, 0
    %1301 = vset.pattern.permute.xlu0 2
    %1302 = vperm.xlu0 %1301, %v1285
    %v1303 = vpop.permute.xlu0 %1302
    %1304 = vset.pattern.permute.xlu0 2
    %1305 = vperm.xlu0 %1304, %v1286
    %v1306 = vpop.permute.xlu0 %1305
    %1307 = vset.pattern.permute.xlu0 2
    %1308 = vperm.xlu0 %1307, %v1287
    %v1309 = vpop.permute.xlu0 %1308
    %1310 = vset.pattern.permute.xlu0 2
    %1311 = vperm.xlu0 %1310, %v1288
    %v1312 = vpop.permute.xlu0 %1311
    %1313 = vset.pattern.permute.xlu0 2
    %1314 = vperm.xlu0 %1313, %v1289
    %v1315 = vpop.permute.xlu0 %1314
    %1316 = vset.pattern.permute.xlu0 2
    %1317 = vperm.xlu0 %1316, %v1290
    %v1318 = vpop.permute.xlu0 %1317
    %1319 = vset.pattern.permute.xlu0 2
    %1320 = vperm.xlu0 %1319, %v1291
    %v1321 = vpop.permute.xlu0 %1320
    %1322 = vset.pattern.permute.xlu0 2
    %1323 = vperm.xlu0 %1322, %v1292
    %v1324 = vpop.permute.xlu0 %1323
    %1325 = vset.pattern.permute.xlu0 2
    %1326 = vperm.xlu0 %1325, %v1293
    %v1327 = vpop.permute.xlu0 %1326
    %1328 = vset.pattern.permute.xlu0 2
    %1329 = vperm.xlu0 %1328, %v1294
    %v1330 = vpop.permute.xlu0 %1329
    %1331 = vset.pattern.permute.xlu0 2
    %1332 = vperm.xlu0 %1331, %v1295
    %v1333 = vpop.permute.xlu0 %1332
    %1334 = vset.pattern.permute.xlu0 2
    %1335 = vperm.xlu0 %1334, %v1296
    %v1336 = vpop.permute.xlu0 %1335
    %1337 = vset.pattern.permute.xlu0 2
    %1338 = vperm.xlu0 %1337, %v1297
    %v1339 = vpop.permute.xlu0 %1338
    %1340 = vset.pattern.permute.xlu0 2
    %1341 = vperm.xlu0 %1340, %v1298
    %v1342 = vpop.permute.xlu0 %1341
    %1343 = vset.pattern.permute.xlu0 2
    %1344 = vperm.xlu0 %1343, %v1299
    %v1345 = vpop.permute.xlu0 %1344
    %1346 = vset.pattern.permute.xlu0 2
    %1347 = vperm.xlu0 %1346, %v1300
    %v1348 = vpop.permute.xlu0 %1347
    %vm1349 = vcmp.eq.s32.totalorder %v1303, 1
    %vm1350 = vcmp.eq.s32.totalorder %v1306, 1
    %vm1351 = vcmp.eq.s32.totalorder %v1309, 1
    %vm1352 = vcmp.eq.s32.totalorder %v1312, 1
    %vm1353 = vcmp.eq.s32.totalorder %v1315, 1
    %vm1354 = vcmp.eq.s32.totalorder %v1318, 1
    %vm1355 = vcmp.eq.s32.totalorder %v1321, 1
    %vm1356 = vcmp.eq.s32.totalorder %v1324, 1
    %vm1357 = vcmp.eq.s32.totalorder %v1327, 1
    %vm1358 = vcmp.eq.s32.totalorder %v1330, 1
    %vm1359 = vcmp.eq.s32.totalorder %v1333, 1
    %vm1360 = vcmp.eq.s32.totalorder %v1336, 1
    %vm1361 = vcmp.eq.s32.totalorder %v1339, 1
    %vm1362 = vcmp.eq.s32.totalorder %v1342, 1
    %vm1363 = vcmp.eq.s32.totalorder %v1345, 1
    %vm1364 = vcmp.eq.s32.totalorder %v1348, 1
    %vm1365 = vmpackc.low %vm1349, %vm1349
    %vm1366 = vmpackc.low %vm1350, %vm1350
    %vm1367 = vmpackc.low %vm1351, %vm1351
    %vm1368 = vmpackc.low %vm1352, %vm1352
    %vm1369 = vmpackc.low %vm1353, %vm1353
    %vm1370 = vmpackc.low %vm1354, %vm1354
    %vm1371 = vmpackc.low %vm1355, %vm1355
    %vm1372 = vmpackc.low %vm1356, %vm1356
    %vm1373 = vmpackc.low %vm1357, %vm1357
    %vm1374 = vmpackc.low %vm1358, %vm1358
    %vm1375 = vmpackc.low %vm1359, %vm1359
    %vm1376 = vmpackc.low %vm1360, %vm1360
    %vm1377 = vmpackc.low %vm1361, %vm1361
    %vm1378 = vmpackc.low %vm1362, %vm1362
    %vm1379 = vmpackc.low %vm1363, %vm1363
    %vm1380 = vmpackc.low %vm1364, %vm1364
    %v1381 = vsel %vm1365, 65537, 0
    %v1382 = vsel %vm1366, 65537, 0
    %v1383 = vsel %vm1367, 65537, 0
    %v1384 = vsel %vm1368, 65537, 0
    %v1385 = vsel %vm1369, 65537, 0
    %v1386 = vsel %vm1370, 65537, 0
    %v1387 = vsel %vm1371, 65537, 0
    %v1388 = vsel %vm1372, 65537, 0
    %v1389 = vsel %vm1373, 65537, 0
    %v1390 = vsel %vm1374, 65537, 0
    %v1391 = vsel %vm1375, 65537, 0
    %v1392 = vsel %vm1376, 65537, 0
    %v1393 = vsel %vm1377, 65537, 0
    %v1394 = vsel %vm1378, 65537, 0
    %v1395 = vsel %vm1379, 65537, 0
    %v1396 = vsel %vm1380, 65537, 0
    %v1398 = vshrl.u32 %v1381, 16
    %v1400 = vrot.slane %v1398, 7
    %v1401 = vshll.u32 %v1381, 16
    %v1403 = vor.u32 %v1400, %v1401
    %v1404 = vrot.slane %v1400, 4
    %v1406 = vshrl.u32 %v1382, 16
    %v1408 = vrot.slane %v1406, 7
    %v1409 = vshll.u32 %v1382, 16
    %v1411 = vor.u32 %v1408, %v1409
    %v1412 = vsel %vm814, %v1404, %v1411
    %v1413 = vrot.slane %v1408, 4
    %v1415 = vshrl.u32 %v1383, 16
    %v1417 = vrot.slane %v1415, 7
    %v1418 = vshll.u32 %v1383, 16
    %v1420 = vor.u32 %v1417, %v1418
    %v1421 = vsel %vm814, %v1413, %v1420
    %v1422 = vrot.slane %v1417, 4
    %v1424 = vshrl.u32 %v1384, 16
    %v1426 = vrot.slane %v1424, 7
    %v1427 = vshll.u32 %v1384, 16
    %v1429 = vor.u32 %v1426, %v1427
    %v1430 = vsel %vm814, %v1422, %v1429
    %v1431 = vrot.slane %v1426, 4
    %v1433 = vshrl.u32 %v1385, 16
    %v1435 = vrot.slane %v1433, 7
    %v1436 = vshll.u32 %v1385, 16
    %v1438 = vor.u32 %v1435, %v1436
    %v1439 = vsel %vm814, %v1431, %v1438
    %v1440 = vrot.slane %v1435, 4
    %v1442 = vshrl.u32 %v1386, 16
    %v1444 = vrot.slane %v1442, 7
    %v1445 = vshll.u32 %v1386, 16
    %v1447 = vor.u32 %v1444, %v1445
    %v1448 = vsel %vm814, %v1440, %v1447
    %v1449 = vrot.slane %v1444, 4
    %v1451 = vshrl.u32 %v1387, 16
    %v1453 = vrot.slane %v1451, 7
    %v1454 = vshll.u32 %v1387, 16
    %v1456 = vor.u32 %v1453, %v1454
    %v1457 = vsel %vm814, %v1449, %v1456
    %v1458 = vrot.slane %v1453, 4
    %v1460 = vshrl.u32 %v1388, 16
    %v1462 = vrot.slane %v1460, 7
    %v1463 = vshll.u32 %v1388, 16
    %v1465 = vor.u32 %v1462, %v1463
    %v1466 = vsel %vm814, %v1458, %v1465
    %v1467 = vrot.slane %v1462, 4
    %v1469 = vshrl.u32 %v1389, 16
    %v1471 = vrot.slane %v1469, 7
    %v1472 = vshll.u32 %v1389, 16
    %v1474 = vor.u32 %v1471, %v1472
    %v1475 = vsel %vm814, %v1467, %v1474
    %v1476 = vrot.slane %v1471, 4
    %v1478 = vshrl.u32 %v1390, 16
    %v1480 = vrot.slane %v1478, 7
    %v1481 = vshll.u32 %v1390, 16
    %v1483 = vor.u32 %v1480, %v1481
    %v1484 = vsel %vm814, %v1476, %v1483
    %v1485 = vrot.slane %v1480, 4
    %v1487 = vshrl.u32 %v1391, 16
    %v1489 = vrot.slane %v1487, 7
    %v1490 = vshll.u32 %v1391, 16
    %v1492 = vor.u32 %v1489, %v1490
    %v1493 = vsel %vm814, %v1485, %v1492
    %v1494 = vrot.slane %v1489, 4
    %v1496 = vshrl.u32 %v1392, 16
    %v1498 = vrot.slane %v1496, 7
    %v1499 = vshll.u32 %v1392, 16
    %v1501 = vor.u32 %v1498, %v1499
    %v1502 = vsel %vm814, %v1494, %v1501
    %v1503 = vrot.slane %v1498, 4
    %v1505 = vshrl.u32 %v1393, 16
    %v1507 = vrot.slane %v1505, 7
    %v1508 = vshll.u32 %v1393, 16
    %v1510 = vor.u32 %v1507, %v1508
    %v1511 = vsel %vm814, %v1503, %v1510
    %v1512 = vrot.slane %v1507, 4
    %v1514 = vshrl.u32 %v1394, 16
    %v1516 = vrot.slane %v1514, 7
    %v1517 = vshll.u32 %v1394, 16
    %v1519 = vor.u32 %v1516, %v1517
    %v1520 = vsel %vm814, %v1512, %v1519
    %v1521 = vrot.slane %v1516, 4
    %v1523 = vshrl.u32 %v1395, 16
    %v1525 = vrot.slane %v1523, 7
    %v1526 = vshll.u32 %v1395, 16
    %v1528 = vor.u32 %v1525, %v1526
    %v1529 = vsel %vm814, %v1521, %v1528
    %v1530 = vrot.slane %v1525, 4
    %v1532 = vshrl.u32 %v1396, 16
    %v1534 = vrot.slane %v1532, 7
    %v1535 = vshll.u32 %v1396, 16
    %v1537 = vor.u32 %v1534, %v1535
    %v1538 = vsel %vm814, %v1530, %v1537
    %v1539 = vrot.slane %v1534, 4
    %v1540 = vunpack.c.l.b16 %v1403
    %v1541 = vunpack.c.h.b16 %v1403
    %v1542 = vunpack.c.l.b16 0
    %v1543 = vunpack.c.h.b16 0
    %vm1544 = vcmp.ne.s32.totalorder %v1540, %v1542
    %vm1545 = vcmp.ne.s32.totalorder %v1541, %v1543
    %vm1546 = vmpackc.low %vm1545, %vm1544
    %v1547 = vunpack.c.l.b16 %v1412
    %v1548 = vunpack.c.h.b16 %v1412
    %v1549 = vunpack.c.l.b16 0
    %v1550 = vunpack.c.h.b16 0
    %vm1551 = vcmp.ne.s32.totalorder %v1547, %v1549
    %vm1552 = vcmp.ne.s32.totalorder %v1548, %v1550
    %vm1553 = vmpackc.low %vm1552, %vm1551
    %v1554 = vunpack.c.l.b16 %v1421
    %v1555 = vunpack.c.h.b16 %v1421
    %v1556 = vunpack.c.l.b16 0
    %v1557 = vunpack.c.h.b16 0
    %vm1558 = vcmp.ne.s32.totalorder %v1554, %v1556
    %vm1559 = vcmp.ne.s32.totalorder %v1555, %v1557
    %vm1560 = vmpackc.low %vm1559, %vm1558
    %v1561 = vunpack.c.l.b16 %v1430
    %v1562 = vunpack.c.h.b16 %v1430
    %v1563 = vunpack.c.l.b16 0
    %v1564 = vunpack.c.h.b16 0
    %vm1565 = vcmp.ne.s32.totalorder %v1561, %v1563
    %vm1566 = vcmp.ne.s32.totalorder %v1562, %v1564
    %vm1567 = vmpackc.low %vm1566, %vm1565
    %v1568 = vunpack.c.l.b16 %v1439
    %v1569 = vunpack.c.h.b16 %v1439
    %v1570 = vunpack.c.l.b16 0
    %v1571 = vunpack.c.h.b16 0
    %vm1572 = vcmp.ne.s32.totalorder %v1568, %v1570
    %vm1573 = vcmp.ne.s32.totalorder %v1569, %v1571
    %vm1574 = vmpackc.low %vm1573, %vm1572
    %v1575 = vunpack.c.l.b16 %v1448
    %v1576 = vunpack.c.h.b16 %v1448
    %v1577 = vunpack.c.l.b16 0
    %v1578 = vunpack.c.h.b16 0
    %vm1579 = vcmp.ne.s32.totalorder %v1575, %v1577
    %vm1580 = vcmp.ne.s32.totalorder %v1576, %v1578
    %vm1581 = vmpackc.low %vm1580, %vm1579
    %v1582 = vunpack.c.l.b16 %v1457
    %v1583 = vunpack.c.h.b16 %v1457
    %v1584 = vunpack.c.l.b16 0
    %v1585 = vunpack.c.h.b16 0
    %vm1586 = vcmp.ne.s32.totalorder %v1582, %v1584
    %vm1587 = vcmp.ne.s32.totalorder %v1583, %v1585
    %vm1588 = vmpackc.low %vm1587, %vm1586
    %v1589 = vunpack.c.l.b16 %v1466
    %v1590 = vunpack.c.h.b16 %v1466
    %v1591 = vunpack.c.l.b16 0
    %v1592 = vunpack.c.h.b16 0
    %vm1593 = vcmp.ne.s32.totalorder %v1589, %v1591
    %vm1594 = vcmp.ne.s32.totalorder %v1590, %v1592
    %vm1595 = vmpackc.low %vm1594, %vm1593
    %v1596 = vunpack.c.l.b16 %v1475
    %v1597 = vunpack.c.h.b16 %v1475
    %v1598 = vunpack.c.l.b16 0
    %v1599 = vunpack.c.h.b16 0
    %vm1600 = vcmp.ne.s32.totalorder %v1596, %v1598
    %vm1601 = vcmp.ne.s32.totalorder %v1597, %v1599
    %vm1602 = vmpackc.low %vm1601, %vm1600
    %v1603 = vunpack.c.l.b16 %v1484
    %v1604 = vunpack.c.h.b16 %v1484
    %v1605 = vunpack.c.l.b16 0
    %v1606 = vunpack.c.h.b16 0
    %vm1607 = vcmp.ne.s32.totalorder %v1603, %v1605
    %vm1608 = vcmp.ne.s32.totalorder %v1604, %v1606
    %vm1609 = vmpackc.low %vm1608, %vm1607
    %v1610 = vunpack.c.l.b16 %v1493
    %v1611 = vunpack.c.h.b16 %v1493
    %v1612 = vunpack.c.l.b16 0
    %v1613 = vunpack.c.h.b16 0
    %vm1614 = vcmp.ne.s32.totalorder %v1610, %v1612
    %vm1615 = vcmp.ne.s32.totalorder %v1611, %v1613
    %vm1616 = vmpackc.low %vm1615, %vm1614
    %v1617 = vunpack.c.l.b16 %v1502
    %v1618 = vunpack.c.h.b16 %v1502
    %v1619 = vunpack.c.l.b16 0
    %v1620 = vunpack.c.h.b16 0
    %vm1621 = vcmp.ne.s32.totalorder %v1617, %v1619
    %vm1622 = vcmp.ne.s32.totalorder %v1618, %v1620
    %vm1623 = vmpackc.low %vm1622, %vm1621
    %v1624 = vunpack.c.l.b16 %v1511
    %v1625 = vunpack.c.h.b16 %v1511
    %v1626 = vunpack.c.l.b16 0
    %v1627 = vunpack.c.h.b16 0
    %vm1628 = vcmp.ne.s32.totalorder %v1624, %v1626
    %vm1629 = vcmp.ne.s32.totalorder %v1625, %v1627
    %vm1630 = vmpackc.low %vm1629, %vm1628
    %v1631 = vunpack.c.l.b16 %v1520
    %v1632 = vunpack.c.h.b16 %v1520
    %v1633 = vunpack.c.l.b16 0
    %v1634 = vunpack.c.h.b16 0
    %vm1635 = vcmp.ne.s32.totalorder %v1631, %v1633
    %vm1636 = vcmp.ne.s32.totalorder %v1632, %v1634
    %vm1637 = vmpackc.low %vm1636, %vm1635
    %v1638 = vunpack.c.l.b16 %v1529
    %v1639 = vunpack.c.h.b16 %v1529
    %v1640 = vunpack.c.l.b16 0
    %v1641 = vunpack.c.h.b16 0
    %vm1642 = vcmp.ne.s32.totalorder %v1638, %v1640
    %vm1643 = vcmp.ne.s32.totalorder %v1639, %v1641
    %vm1644 = vmpackc.low %vm1643, %vm1642
    %v1645 = vunpack.c.l.b16 %v1538
    %v1646 = vunpack.c.h.b16 %v1538
    %v1647 = vunpack.c.l.b16 0
    %v1648 = vunpack.c.h.b16 0
    %vm1649 = vcmp.ne.s32.totalorder %v1645, %v1647
    %vm1650 = vcmp.ne.s32.totalorder %v1646, %v1648
    %vm1651 = vmpackc.low %vm1650, %vm1649
    %v1652 = vunpack.c.l.b16 %v1539
    %v1653 = vunpack.c.h.b16 %v1539
    %v1654 = vunpack.c.l.b16 0
    %v1655 = vunpack.c.h.b16 0
    %vm1656 = vcmp.ne.s32.totalorder %v1652, %v1654
    %vm1657 = vcmp.ne.s32.totalorder %v1653, %v1655
    %vm1658 = vmpackc.low %vm1657, %vm1656
    %v1659 = vsel %vm1546, %v1236, 0
    %v1660 = vsel %vm1553, %v1237, 0
    %v1661 = vsel %vm1560, %v1238, 0
    %v1662 = vsel %vm1567, %v1239, 0
    %v1663 = vsel %vm1574, %v1240, 0
    %v1664 = vsel %vm1581, %v1241, 0
    %v1665 = vsel %vm1588, %v1242, 0
    %v1666 = vsel %vm1595, %v1243, 0
    %v1667 = vsel %vm1602, %v1244, 0
    %v1668 = vsel %vm1609, %v1245, 0
    %v1669 = vsel %vm1616, %v1246, 0
    %v1670 = vsel %vm1623, %v1247, 0
    %v1671 = vsel %vm1630, %v1248, 0
    %v1672 = vsel %vm1637, %v1249, 0
    %v1673 = vsel %vm1644, %v1250, 0
    %v1674 = vsel %vm1651, %v1251, 0
    %v1675 = vsel %vm1658, %v1252, 0
    %v1677 = vshrl.u32 %v1659, 16
    %v1679 = vrot.slane %v1677, 4
    %v1680 = vshll.u32 %v1659, 16
    %v1682 = vrot.slane %v1680, 5
    %v1683 = vor.u32 %v1679, %v1682
    %v1684 = vrot.slane %v1683, 4
    %v1686 = vshll.u32 %v1660, 16
    %v1688 = vrot.slane %v1686, 5
    %v1689 = vsel %vm516, %v1684, %v1688
    %v1690 = vshrl.u32 %v1660, 16
    %v1692 = vrot.slane %v1690, 4
    %v1693 = vor.u32 %v1692, %v1688
    %v1694 = vrot.slane %v1693, 4
    %v1696 = vshll.u32 %v1661, 16
    %v1698 = vrot.slane %v1696, 5
    %v1699 = vsel %vm516, %v1694, %v1698
    %v1700 = vshrl.u32 %v1661, 16
    %v1702 = vrot.slane %v1700, 4
    %v1703 = vor.u32 %v1702, %v1698
    %v1704 = vrot.slane %v1703, 4
    %v1706 = vshll.u32 %v1662, 16
    %v1708 = vrot.slane %v1706, 5
    %v1709 = vsel %vm516, %v1704, %v1708
    %v1710 = vshrl.u32 %v1662, 16
    %v1712 = vrot.slane %v1710, 4
    %v1713 = vor.u32 %v1712, %v1708
    %v1714 = vrot.slane %v1713, 4
    %v1716 = vshll.u32 %v1663, 16
    %v1718 = vrot.slane %v1716, 5
    %v1719 = vsel %vm516, %v1714, %v1718
    %v1720 = vshrl.u32 %v1663, 16
    %v1722 = vrot.slane %v1720, 4
    %v1723 = vor.u32 %v1722, %v1718
    %v1724 = vrot.slane %v1723, 4
    %v1726 = vshll.u32 %v1664, 16
    %v1728 = vrot.slane %v1726, 5
    %v1729 = vsel %vm516, %v1724, %v1728
    %v1730 = vshrl.u32 %v1664, 16
    %v1732 = vrot.slane %v1730, 4
    %v1733 = vor.u32 %v1732, %v1728
    %v1734 = vrot.slane %v1733, 4
    %v1736 = vshll.u32 %v1665, 16
    %v1738 = vrot.slane %v1736, 5
    %v1739 = vsel %vm516, %v1734, %v1738
    %v1740 = vshrl.u32 %v1665, 16
    %v1742 = vrot.slane %v1740, 4
    %v1743 = vor.u32 %v1742, %v1738
    %v1744 = vrot.slane %v1743, 4
    %v1746 = vshll.u32 %v1666, 16
    %v1748 = vrot.slane %v1746, 5
    %v1749 = vsel %vm516, %v1744, %v1748
    %v1750 = vshrl.u32 %v1666, 16
    %v1752 = vrot.slane %v1750, 4
    %v1753 = vor.u32 %v1752, %v1748
    %v1754 = vrot.slane %v1753, 4
    %v1756 = vshll.u32 %v1667, 16
    %v1758 = vrot.slane %v1756, 5
    %v1759 = vsel %vm516, %v1754, %v1758
    %v1760 = vshrl.u32 %v1667, 16
    %v1762 = vrot.slane %v1760, 4
    %v1763 = vor.u32 %v1762, %v1758
    %v1764 = vrot.slane %v1763, 4
    %v1766 = vshll.u32 %v1668, 16
    %v1768 = vrot.slane %v1766, 5
    %v1769 = vsel %vm516, %v1764, %v1768
    %v1770 = vshrl.u32 %v1668, 16
    %v1772 = vrot.slane %v1770, 4
    %v1773 = vor.u32 %v1772, %v1768
    %v1774 = vrot.slane %v1773, 4
    %v1776 = vshll.u32 %v1669, 16
    %v1778 = vrot.slane %v1776, 5
    %v1779 = vsel %vm516, %v1774, %v1778
    %v1780 = vshrl.u32 %v1669, 16
    %v1782 = vrot.slane %v1780, 4
    %v1783 = vor.u32 %v1782, %v1778
    %v1784 = vrot.slane %v1783, 4
    %v1786 = vshll.u32 %v1670, 16
    %v1788 = vrot.slane %v1786, 5
    %v1789 = vsel %vm516, %v1784, %v1788
    %v1790 = vshrl.u32 %v1670, 16
    %v1792 = vrot.slane %v1790, 4
    %v1793 = vor.u32 %v1792, %v1788
    %v1794 = vrot.slane %v1793, 4
    %v1796 = vshll.u32 %v1671, 16
    %v1798 = vrot.slane %v1796, 5
    %v1799 = vsel %vm516, %v1794, %v1798
    %v1800 = vshrl.u32 %v1671, 16
    %v1802 = vrot.slane %v1800, 4
    %v1803 = vor.u32 %v1802, %v1798
    %v1804 = vrot.slane %v1803, 4
    %v1806 = vshll.u32 %v1672, 16
    %v1808 = vrot.slane %v1806, 5
    %v1809 = vsel %vm516, %v1804, %v1808
    %v1810 = vshrl.u32 %v1672, 16
    %v1812 = vrot.slane %v1810, 4
    %v1813 = vor.u32 %v1812, %v1808
    %v1814 = vrot.slane %v1813, 4
    %v1816 = vshll.u32 %v1673, 16
    %v1818 = vrot.slane %v1816, 5
    %v1819 = vsel %vm516, %v1814, %v1818
    %v1820 = vshrl.u32 %v1673, 16
    %v1822 = vrot.slane %v1820, 4
    %v1823 = vor.u32 %v1822, %v1818
    %v1824 = vrot.slane %v1823, 4
    %v1826 = vshll.u32 %v1674, 16
    %v1828 = vrot.slane %v1826, 5
    %v1829 = vsel %vm516, %v1824, %v1828
    %v1830 = vshrl.u32 %v1674, 16
    %v1832 = vrot.slane %v1830, 4
    %v1833 = vor.u32 %v1832, %v1828
    %v1834 = vrot.slane %v1833, 4
    %v1836 = vshll.u32 %v1675, 16
    %v1838 = vrot.slane %v1836, 5
    %v1839 = vsel %vm516, %v1834, %v1838
    %1840 = vrot.lane.b32.xlu0 %v1689, 64
    %v1841 = vpop.permute.xlu0 %1840
    %1842 = vrot.lane.b32.xlu0 %v1699, 64
    %v1843 = vpop.permute.xlu0 %1842
    %1844 = vrot.lane.b32.xlu0 %v1709, 64
    %v1845 = vpop.permute.xlu0 %1844
    %1846 = vrot.lane.b32.xlu0 %v1719, 64
    %v1847 = vpop.permute.xlu0 %1846
    %1848 = vrot.lane.b32.xlu0 %v1729, 64
    %v1849 = vpop.permute.xlu0 %1848
    %1850 = vrot.lane.b32.xlu0 %v1739, 64
    %v1851 = vpop.permute.xlu0 %1850
    %1852 = vrot.lane.b32.xlu0 %v1749, 64
    %v1853 = vpop.permute.xlu0 %1852
    %1854 = vrot.lane.b32.xlu0 %v1759, 64
    %v1855 = vpop.permute.xlu0 %1854
    %1856 = vrot.lane.b32.xlu0 %v1769, 64
    %v1857 = vpop.permute.xlu0 %1856
    %1858 = vrot.lane.b32.xlu0 %v1779, 64
    %v1859 = vpop.permute.xlu0 %1858
    %1860 = vrot.lane.b32.xlu0 %v1789, 64
    %v1861 = vpop.permute.xlu0 %1860
    %1862 = vrot.lane.b32.xlu0 %v1799, 64
    %v1863 = vpop.permute.xlu0 %1862
    %1864 = vrot.lane.b32.xlu0 %v1809, 64
    %v1865 = vpop.permute.xlu0 %1864
    %1866 = vrot.lane.b32.xlu0 %v1819, 64
    %v1867 = vpop.permute.xlu0 %1866
    %1868 = vrot.lane.b32.xlu0 %v1829, 64
    %v1869 = vpop.permute.xlu0 %1868
    %1870 = vrot.lane.b32.xlu0 %v1839, 64
    %v1871 = vpop.permute.xlu0 %1870
    %vm1888 = vcmask 781824
    %1889 = vst.msk [vmem:[#allocation3] sm:$0xf] %vm1888, %v1841
    %1890 = vst.msk [vmem:[#allocation3 + $0xc] sm:$0xf] %vm1888, %v1843
    %1891 = vst.msk [vmem:[#allocation3 + $0x18] sm:$0xf] %vm1888, %v1845
    %1892 = vst.msk [vmem:[#allocation3 + $0x24] sm:$0xf] %vm1888, %v1847
    %1893 = vst.msk [vmem:[#allocation3 + $0x30] sm:$0xf] %vm1888, %v1849
    %1894 = vst.msk [vmem:[#allocation3 + $0x3c] sm:$0xf] %vm1888, %v1851
    %1895 = vst.msk [vmem:[#allocation3 + $0x48] sm:$0xf] %vm1888, %v1853
    %1896 = vst.msk [vmem:[#allocation3 + $0x54] sm:$0xf] %vm1888, %v1855
    %1897 = vst.msk [vmem:[#allocation3 + $0x60] sm:$0xf] %vm1888, %v1857
    %1898 = vst.msk [vmem:[#allocation3 + $0x6c] sm:$0xf] %vm1888, %v1859
    %1899 = vst.msk [vmem:[#allocation3 + $0x78] sm:$0xf] %vm1888, %v1861
    %1900 = vst.msk [vmem:[#allocation3 + $0x84] sm:$0xf] %vm1888, %v1863
    %1901 = vst.msk [vmem:[#allocation3 + $0x90] sm:$0xf] %vm1888, %v1865
    %1902 = vst.msk [vmem:[#allocation3 + $0x9c] sm:$0xf] %vm1888, %v1867
    %1903 = vst.msk [vmem:[#allocation3 + $0xa8] sm:$0xf] %vm1888, %v1869
    %1904 = vst.msk [vmem:[#allocation3 + $0xb4] sm:$0xf] %vm1888, %v1871
    %v1905 = vld [vmem:[#allocation2 + $0x4] sm:$0x8]
    %v1906 = vld [vmem:[#allocation2 + $0x8] sm:$0xf]
    %v1907 = vld [vmem:[#allocation2 + $0xc] sm:$0xf]
    %v1908 = vld [vmem:[#allocation2 + $0x10] sm:$0xf]
    %v1909 = vld [vmem:[#allocation2 + $0x14] sm:$0xf]
    %v1910 = vld [vmem:[#allocation2 + $0x18] sm:$0xf]
    %v1911 = vld [vmem:[#allocation2 + $0x1c] sm:$0xf]
    %v1912 = vld [vmem:[#allocation2 + $0x20] sm:$0xf]
    %v1913 = vld [vmem:[#allocation2 + $0x24] sm:$0xf]
    %v1914 = vld [vmem:[#allocation2 + $0x28] sm:$0xf]
    %v1915 = vld [vmem:[#allocation2 + $0x2c] sm:$0xf]
    %v1916 = vld [vmem:[#allocation2 + $0x30] sm:$0xf]
    %v1917 = vld [vmem:[#allocation2 + $0x34] sm:$0xf]
    %v1918 = vld [vmem:[#allocation2 + $0x38] sm:$0xf]
    %v1919 = vld [vmem:[#allocation2 + $0x3c] sm:$0xf]
    %v1920 = vld [vmem:[#allocation2 + $0x40] sm:$0xf]
    %v1921 = vld [vmem:[#allocation2 + $0x44] sm:$0xf]
    %v1922 = vld [vmem:[%s1] sm:$0xff]
    %v1923 = vld [vmem:[%s1 + $0x8] sm:$0xff]
    %v1924 = vld [vmem:[%s1 + $0x10] sm:$0xff]
    %v1925 = vld [vmem:[%s1 + $0x18] sm:$0xff]
    %v1926 = vld [vmem:[%s1 + $0x20] sm:$0xff]
    %v1927 = vld [vmem:[%s1 + $0x28] sm:$0xff]
    %v1928 = vld [vmem:[%s1 + $0x30] sm:$0xff]
    %v1929 = vld [vmem:[%s1 + $0x38] sm:$0xff]
    %v1930 = vld [vmem:[%s1 + $0x40] sm:$0xff]
    %v1931 = vld [vmem:[%s1 + $0x48] sm:$0xff]
    %v1932 = vld [vmem:[%s1 + $0x50] sm:$0xff]
    %v1933 = vld [vmem:[%s1 + $0x58] sm:$0xff]
    %v1934 = vld [vmem:[%s1 + $0x60] sm:$0xff]
    %v1935 = vld [vmem:[%s1 + $0x68] sm:$0xff]
    %v1936 = vld [vmem:[%s1 + $0x70] sm:$0xff]
    %v1937 = vld [vmem:[%s1 + $0x78] sm:$0xff]
    %vm1938 = vcmp.gt.f32.partialorder %v1922, 0.0
    %vm1939 = vcmp.gt.f32.partialorder %v1923, 0.0
    %vm1940 = vcmp.gt.f32.partialorder %v1924, 0.0
    %vm1941 = vcmp.gt.f32.partialorder %v1925, 0.0
    %vm1942 = vcmp.gt.f32.partialorder %v1926, 0.0
    %vm1943 = vcmp.gt.f32.partialorder %v1927, 0.0
    %vm1944 = vcmp.gt.f32.partialorder %v1928, 0.0
    %vm1945 = vcmp.gt.f32.partialorder %v1929, 0.0
    %vm1946 = vcmp.gt.f32.partialorder %v1930, 0.0
    %vm1947 = vcmp.gt.f32.partialorder %v1931, 0.0
    %vm1948 = vcmp.gt.f32.partialorder %v1932, 0.0
    %vm1949 = vcmp.gt.f32.partialorder %v1933, 0.0
    %vm1950 = vcmp.gt.f32.partialorder %v1934, 0.0
    %vm1951 = vcmp.gt.f32.partialorder %v1935, 0.0
    %vm1952 = vcmp.gt.f32.partialorder %v1936, 0.0
    %vm1953 = vcmp.gt.f32.partialorder %v1937, 0.0
    %v1954 = vsel %vm1938, 1, 0
    %v1955 = vsel %vm1939, 1, 0
    %v1956 = vsel %vm1940, 1, 0
    %v1957 = vsel %vm1941, 1, 0
    %v1958 = vsel %vm1942, 1, 0
    %v1959 = vsel %vm1943, 1, 0
    %v1960 = vsel %vm1944, 1, 0
    %v1961 = vsel %vm1945, 1, 0
    %v1962 = vsel %vm1946, 1, 0
    %v1963 = vsel %vm1947, 1, 0
    %v1964 = vsel %vm1948, 1, 0
    %v1965 = vsel %vm1949, 1, 0
    %v1966 = vsel %vm1950, 1, 0
    %v1967 = vsel %vm1951, 1, 0
    %v1968 = vsel %vm1952, 1, 0
    %v1969 = vsel %vm1953, 1, 0
    %1970 = vset.pattern.permute.xlu0 3
    %1971 = vperm.xlu0 %1970, %v1954
    %v1972 = vpop.permute.xlu0 %1971
    %1973 = vset.pattern.permute.xlu0 3
    %1974 = vperm.xlu0 %1973, %v1955
    %v1975 = vpop.permute.xlu0 %1974
    %1976 = vset.pattern.permute.xlu0 3
    %1977 = vperm.xlu0 %1976, %v1956
    %v1978 = vpop.permute.xlu0 %1977
    %1979 = vset.pattern.permute.xlu0 3
    %1980 = vperm.xlu0 %1979, %v1957
    %v1981 = vpop.permute.xlu0 %1980
    %1982 = vset.pattern.permute.xlu0 3
    %1983 = vperm.xlu0 %1982, %v1958
    %v1984 = vpop.permute.xlu0 %1983
    %1985 = vset.pattern.permute.xlu0 3
    %1986 = vperm.xlu0 %1985, %v1959
    %v1987 = vpop.permute.xlu0 %1986
    %1988 = vset.pattern.permute.xlu0 3
    %1989 = vperm.xlu0 %1988, %v1960
    %v1990 = vpop.permute.xlu0 %1989
    %1991 = vset.pattern.permute.xlu0 3
    %1992 = vperm.xlu0 %1991, %v1961
    %v1993 = vpop.permute.xlu0 %1992
    %1994 = vset.pattern.permute.xlu0 3
    %1995 = vperm.xlu0 %1994, %v1962
    %v1996 = vpop.permute.xlu0 %1995
    %1997 = vset.pattern.permute.xlu0 3
    %1998 = vperm.xlu0 %1997, %v1963
    %v1999 = vpop.permute.xlu0 %1998
    %2000 = vset.pattern.permute.xlu0 3
    %2001 = vperm.xlu0 %2000, %v1964
    %v2002 = vpop.permute.xlu0 %2001
    %2003 = vset.pattern.permute.xlu0 3
    %2004 = vperm.xlu0 %2003, %v1965
    %v2005 = vpop.permute.xlu0 %2004
    %2006 = vset.pattern.permute.xlu0 3
    %2007 = vperm.xlu0 %2006, %v1966
    %v2008 = vpop.permute.xlu0 %2007
    %2009 = vset.pattern.permute.xlu0 3
    %2010 = vperm.xlu0 %2009, %v1967
    %v2011 = vpop.permute.xlu0 %2010
    %2012 = vset.pattern.permute.xlu0 3
    %2013 = vperm.xlu0 %2012, %v1968
    %v2014 = vpop.permute.xlu0 %2013
    %2015 = vset.pattern.permute.xlu0 3
    %2016 = vperm.xlu0 %2015, %v1969
    %v2017 = vpop.permute.xlu0 %2016
    %vm2018 = vcmp.eq.s32.totalorder %v1972, 1
    %vm2019 = vcmp.eq.s32.totalorder %v1975, 1
    %vm2020 = vcmp.eq.s32.totalorder %v1978, 1
    %vm2021 = vcmp.eq.s32.totalorder %v1981, 1
    %vm2022 = vcmp.eq.s32.totalorder %v1984, 1
    %vm2023 = vcmp.eq.s32.totalorder %v1987, 1
    %vm2024 = vcmp.eq.s32.totalorder %v1990, 1
    %vm2025 = vcmp.eq.s32.totalorder %v1993, 1
    %vm2026 = vcmp.eq.s32.totalorder %v1996, 1
    %vm2027 = vcmp.eq.s32.totalorder %v1999, 1
    %vm2028 = vcmp.eq.s32.totalorder %v2002, 1
    %vm2029 = vcmp.eq.s32.totalorder %v2005, 1
    %vm2030 = vcmp.eq.s32.totalorder %v2008, 1
    %vm2031 = vcmp.eq.s32.totalorder %v2011, 1
    %vm2032 = vcmp.eq.s32.totalorder %v2014, 1
    %vm2033 = vcmp.eq.s32.totalorder %v2017, 1
    %vm2034 = vmpackc.low %vm2018, %vm2018
    %vm2035 = vmpackc.low %vm2019, %vm2019
    %vm2036 = vmpackc.low %vm2020, %vm2020
    %vm2037 = vmpackc.low %vm2021, %vm2021
    %vm2038 = vmpackc.low %vm2022, %vm2022
    %vm2039 = vmpackc.low %vm2023, %vm2023
    %vm2040 = vmpackc.low %vm2024, %vm2024
    %vm2041 = vmpackc.low %vm2025, %vm2025
    %vm2042 = vmpackc.low %vm2026, %vm2026
    %vm2043 = vmpackc.low %vm2027, %vm2027
    %vm2044 = vmpackc.low %vm2028, %vm2028
    %vm2045 = vmpackc.low %vm2029, %vm2029
    %vm2046 = vmpackc.low %vm2030, %vm2030
    %vm2047 = vmpackc.low %vm2031, %vm2031
    %vm2048 = vmpackc.low %vm2032, %vm2032
    %vm2049 = vmpackc.low %vm2033, %vm2033
    %v2050 = vsel %vm2034, 65537, 0
    %v2051 = vsel %vm2035, 65537, 0
    %v2052 = vsel %vm2036, 65537, 0
    %v2053 = vsel %vm2037, 65537, 0
    %v2054 = vsel %vm2038, 65537, 0
    %v2055 = vsel %vm2039, 65537, 0
    %v2056 = vsel %vm2040, 65537, 0
    %v2057 = vsel %vm2041, 65537, 0
    %v2058 = vsel %vm2042, 65537, 0
    %v2059 = vsel %vm2043, 65537, 0
    %v2060 = vsel %vm2044, 65537, 0
    %v2061 = vsel %vm2045, 65537, 0
    %v2062 = vsel %vm2046, 65537, 0
    %v2063 = vsel %vm2047, 65537, 0
    %v2064 = vsel %vm2048, 65537, 0
    %v2065 = vsel %vm2049, 65537, 0
    %v2067 = vshll.u32 %v2050, 16
    %v2069 = vrot.slane %v2067, 5
    %v2070 = vshrl.u32 %v2050, 16
    %v2072 = vrot.slane %v2070, 4
    %v2073 = vor.u32 %v2072, %v2069
    %v2074 = vrot.slane %v2073, 4
    %v2076 = vshll.u32 %v2051, 16
    %v2078 = vrot.slane %v2076, 5
    %v2079 = vsel %vm516, %v2074, %v2078
    %v2080 = vshrl.u32 %v2051, 16
    %v2082 = vrot.slane %v2080, 4
    %v2083 = vor.u32 %v2082, %v2078
    %v2084 = vrot.slane %v2083, 4
    %v2086 = vshll.u32 %v2052, 16
    %v2088 = vrot.slane %v2086, 5
    %v2089 = vsel %vm516, %v2084, %v2088
    %v2090 = vshrl.u32 %v2052, 16
    %v2092 = vrot.slane %v2090, 4
    %v2093 = vor.u32 %v2092, %v2088
    %v2094 = vrot.slane %v2093, 4
    %v2096 = vshll.u32 %v2053, 16
    %v2098 = vrot.slane %v2096, 5
    %v2099 = vsel %vm516, %v2094, %v2098
    %v2100 = vshrl.u32 %v2053, 16
    %v2102 = vrot.slane %v2100, 4
    %v2103 = vor.u32 %v2102, %v2098
    %v2104 = vrot.slane %v2103, 4
    %v2106 = vshll.u32 %v2054, 16
    %v2108 = vrot.slane %v2106, 5
    %v2109 = vsel %vm516, %v2104, %v2108
    %v2110 = vshrl.u32 %v2054, 16
    %v2112 = vrot.slane %v2110, 4
    %v2113 = vor.u32 %v2112, %v2108
    %v2114 = vrot.slane %v2113, 4
    %v2116 = vshll.u32 %v2055, 16
    %v2118 = vrot.slane %v2116, 5
    %v2119 = vsel %vm516, %v2114, %v2118
    %v2120 = vshrl.u32 %v2055, 16
    %v2122 = vrot.slane %v2120, 4
    %v2123 = vor.u32 %v2122, %v2118
    %v2124 = vrot.slane %v2123, 4
    %v2126 = vshll.u32 %v2056, 16
    %v2128 = vrot.slane %v2126, 5
    %v2129 = vsel %vm516, %v2124, %v2128
    %v2130 = vshrl.u32 %v2056, 16
    %v2132 = vrot.slane %v2130, 4
    %v2133 = vor.u32 %v2132, %v2128
    %v2134 = vrot.slane %v2133, 4
    %v2136 = vshll.u32 %v2057, 16
    %v2138 = vrot.slane %v2136, 5
    %v2139 = vsel %vm516, %v2134, %v2138
    %v2140 = vshrl.u32 %v2057, 16
    %v2142 = vrot.slane %v2140, 4
    %v2143 = vor.u32 %v2142, %v2138
    %v2144 = vrot.slane %v2143, 4
    %v2146 = vshll.u32 %v2058, 16
    %v2148 = vrot.slane %v2146, 5
    %v2149 = vsel %vm516, %v2144, %v2148
    %v2150 = vshrl.u32 %v2058, 16
    %v2152 = vrot.slane %v2150, 4
    %v2153 = vor.u32 %v2152, %v2148
    %v2154 = vrot.slane %v2153, 4
    %v2156 = vshll.u32 %v2059, 16
    %v2158 = vrot.slane %v2156, 5
    %v2159 = vsel %vm516, %v2154, %v2158
    %v2160 = vshrl.u32 %v2059, 16
    %v2162 = vrot.slane %v2160, 4
    %v2163 = vor.u32 %v2162, %v2158
    %v2164 = vrot.slane %v2163, 4
    %v2166 = vshll.u32 %v2060, 16
    %v2168 = vrot.slane %v2166, 5
    %v2169 = vsel %vm516, %v2164, %v2168
    %v2170 = vshrl.u32 %v2060, 16
    %v2172 = vrot.slane %v2170, 4
    %v2173 = vor.u32 %v2172, %v2168
    %v2174 = vrot.slane %v2173, 4
    %v2176 = vshll.u32 %v2061, 16
    %v2178 = vrot.slane %v2176, 5
    %v2179 = vsel %vm516, %v2174, %v2178
    %v2180 = vshrl.u32 %v2061, 16
    %v2182 = vrot.slane %v2180, 4
    %v2183 = vor.u32 %v2182, %v2178
    %v2184 = vrot.slane %v2183, 4
    %v2186 = vshll.u32 %v2062, 16
    %v2188 = vrot.slane %v2186, 5
    %v2189 = vsel %vm516, %v2184, %v2188
    %v2190 = vshrl.u32 %v2062, 16
    %v2192 = vrot.slane %v2190, 4
    %v2193 = vor.u32 %v2192, %v2188
    %v2194 = vrot.slane %v2193, 4
    %v2196 = vshll.u32 %v2063, 16
    %v2198 = vrot.slane %v2196, 5
    %v2199 = vsel %vm516, %v2194, %v2198
    %v2200 = vshrl.u32 %v2063, 16
    %v2202 = vrot.slane %v2200, 4
    %v2203 = vor.u32 %v2202, %v2198
    %v2204 = vrot.slane %v2203, 4
    %v2206 = vshll.u32 %v2064, 16
    %v2208 = vrot.slane %v2206, 5
    %v2209 = vsel %vm516, %v2204, %v2208
    %v2210 = vshrl.u32 %v2064, 16
    %v2212 = vrot.slane %v2210, 4
    %v2213 = vor.u32 %v2212, %v2208
    %v2214 = vrot.slane %v2213, 4
    %v2216 = vshll.u32 %v2065, 16
    %v2218 = vrot.slane %v2216, 5
    %v2219 = vsel %vm516, %v2214, %v2218
    %v2220 = vshrl.u32 %v2065, 16
    %v2222 = vrot.slane %v2220, 4
    %v2223 = vor.u32 %v2222, %v2218
    %v2224 = vrot.slane %v2223, 4
    %v2225 = vunpack.c.l.b16 %v2069
    %v2226 = vunpack.c.h.b16 %v2069
    %v2227 = vunpack.c.l.b16 0
    %v2228 = vunpack.c.h.b16 0
    %vm2229 = vcmp.ne.s32.totalorder %v2225, %v2227
    %vm2230 = vcmp.ne.s32.totalorder %v2226, %v2228
    %vm2231 = vmpackc.low %vm2230, %vm2229
    %v2232 = vunpack.c.l.b16 %v2079
    %v2233 = vunpack.c.h.b16 %v2079
    %v2234 = vunpack.c.l.b16 0
    %v2235 = vunpack.c.h.b16 0
    %vm2236 = vcmp.ne.s32.totalorder %v2232, %v2234
    %vm2237 = vcmp.ne.s32.totalorder %v2233, %v2235
    %vm2238 = vmpackc.low %vm2237, %vm2236
    %v2239 = vunpack.c.l.b16 %v2089
    %v2240 = vunpack.c.h.b16 %v2089
    %v2241 = vunpack.c.l.b16 0
    %v2242 = vunpack.c.h.b16 0
    %vm2243 = vcmp.ne.s32.totalorder %v2239, %v2241
    %vm2244 = vcmp.ne.s32.totalorder %v2240, %v2242
    %vm2245 = vmpackc.low %vm2244, %vm2243
    %v2246 = vunpack.c.l.b16 %v2099
    %v2247 = vunpack.c.h.b16 %v2099
    %v2248 = vunpack.c.l.b16 0
    %v2249 = vunpack.c.h.b16 0
    %vm2250 = vcmp.ne.s32.totalorder %v2246, %v2248
    %vm2251 = vcmp.ne.s32.totalorder %v2247, %v2249
    %vm2252 = vmpackc.low %vm2251, %vm2250
    %v2253 = vunpack.c.l.b16 %v2109
    %v2254 = vunpack.c.h.b16 %v2109
    %v2255 = vunpack.c.l.b16 0
    %v2256 = vunpack.c.h.b16 0
    %vm2257 = vcmp.ne.s32.totalorder %v2253, %v2255
    %vm2258 = vcmp.ne.s32.totalorder %v2254, %v2256
    %vm2259 = vmpackc.low %vm2258, %vm2257
    %v2260 = vunpack.c.l.b16 %v2119
    %v2261 = vunpack.c.h.b16 %v2119
    %v2262 = vunpack.c.l.b16 0
    %v2263 = vunpack.c.h.b16 0
    %vm2264 = vcmp.ne.s32.totalorder %v2260, %v2262
    %vm2265 = vcmp.ne.s32.totalorder %v2261, %v2263
    %vm2266 = vmpackc.low %vm2265, %vm2264
    %v2267 = vunpack.c.l.b16 %v2129
    %v2268 = vunpack.c.h.b16 %v2129
    %v2269 = vunpack.c.l.b16 0
    %v2270 = vunpack.c.h.b16 0
    %vm2271 = vcmp.ne.s32.totalorder %v2267, %v2269
    %vm2272 = vcmp.ne.s32.totalorder %v2268, %v2270
    %vm2273 = vmpackc.low %vm2272, %vm2271
    %v2274 = vunpack.c.l.b16 %v2139
    %v2275 = vunpack.c.h.b16 %v2139
    %v2276 = vunpack.c.l.b16 0
    %v2277 = vunpack.c.h.b16 0
    %vm2278 = vcmp.ne.s32.totalorder %v2274, %v2276
    %vm2279 = vcmp.ne.s32.totalorder %v2275, %v2277
    %vm2280 = vmpackc.low %vm2279, %vm2278
    %v2281 = vunpack.c.l.b16 %v2149
    %v2282 = vunpack.c.h.b16 %v2149
    %v2283 = vunpack.c.l.b16 0
    %v2284 = vunpack.c.h.b16 0
    %vm2285 = vcmp.ne.s32.totalorder %v2281, %v2283
    %vm2286 = vcmp.ne.s32.totalorder %v2282, %v2284
    %vm2287 = vmpackc.low %vm2286, %vm2285
    %v2288 = vunpack.c.l.b16 %v2159
    %v2289 = vunpack.c.h.b16 %v2159
    %v2290 = vunpack.c.l.b16 0
    %v2291 = vunpack.c.h.b16 0
    %vm2292 = vcmp.ne.s32.totalorder %v2288, %v2290
    %vm2293 = vcmp.ne.s32.totalorder %v2289, %v2291
    %vm2294 = vmpackc.low %vm2293, %vm2292
    %v2295 = vunpack.c.l.b16 %v2169
    %v2296 = vunpack.c.h.b16 %v2169
    %v2297 = vunpack.c.l.b16 0
    %v2298 = vunpack.c.h.b16 0
    %vm2299 = vcmp.ne.s32.totalorder %v2295, %v2297
    %vm2300 = vcmp.ne.s32.totalorder %v2296, %v2298
    %vm2301 = vmpackc.low %vm2300, %vm2299
    %v2302 = vunpack.c.l.b16 %v2179
    %v2303 = vunpack.c.h.b16 %v2179
    %v2304 = vunpack.c.l.b16 0
    %v2305 = vunpack.c.h.b16 0
    %vm2306 = vcmp.ne.s32.totalorder %v2302, %v2304
    %vm2307 = vcmp.ne.s32.totalorder %v2303, %v2305
    %vm2308 = vmpackc.low %vm2307, %vm2306
    %v2309 = vunpack.c.l.b16 %v2189
    %v2310 = vunpack.c.h.b16 %v2189
    %v2311 = vunpack.c.l.b16 0
    %v2312 = vunpack.c.h.b16 0
    %vm2313 = vcmp.ne.s32.totalorder %v2309, %v2311
    %vm2314 = vcmp.ne.s32.totalorder %v2310, %v2312
    %vm2315 = vmpackc.low %vm2314, %vm2313
    %v2316 = vunpack.c.l.b16 %v2199
    %v2317 = vunpack.c.h.b16 %v2199
    %v2318 = vunpack.c.l.b16 0
    %v2319 = vunpack.c.h.b16 0
    %vm2320 = vcmp.ne.s32.totalorder %v2316, %v2318
    %vm2321 = vcmp.ne.s32.totalorder %v2317, %v2319
    %vm2322 = vmpackc.low %vm2321, %vm2320
    %v2323 = vunpack.c.l.b16 %v2209
    %v2324 = vunpack.c.h.b16 %v2209
    %v2325 = vunpack.c.l.b16 0
    %v2326 = vunpack.c.h.b16 0
    %vm2327 = vcmp.ne.s32.totalorder %v2323, %v2325
    %vm2328 = vcmp.ne.s32.totalorder %v2324, %v2326
    %vm2329 = vmpackc.low %vm2328, %vm2327
    %v2330 = vunpack.c.l.b16 %v2219
    %v2331 = vunpack.c.h.b16 %v2219
    %v2332 = vunpack.c.l.b16 0
    %v2333 = vunpack.c.h.b16 0
    %vm2334 = vcmp.ne.s32.totalorder %v2330, %v2332
    %vm2335 = vcmp.ne.s32.totalorder %v2331, %v2333
    %vm2336 = vmpackc.low %vm2335, %vm2334
    %v2337 = vunpack.c.l.b16 %v2224
    %v2338 = vunpack.c.h.b16 %v2224
    %v2339 = vunpack.c.l.b16 0
    %v2340 = vunpack.c.h.b16 0
    %vm2341 = vcmp.ne.s32.totalorder %v2337, %v2339
    %vm2342 = vcmp.ne.s32.totalorder %v2338, %v2340
    %vm2343 = vmpackc.low %vm2342, %vm2341
    %v2344 = vsel %vm2231, %v1905, 0
    %v2345 = vsel %vm2238, %v1906, 0
    %v2346 = vsel %vm2245, %v1907, 0
    %v2347 = vsel %vm2252, %v1908, 0
    %v2348 = vsel %vm2259, %v1909, 0
    %v2349 = vsel %vm2266, %v1910, 0
    %v2350 = vsel %vm2273, %v1911, 0
    %v2351 = vsel %vm2280, %v1912, 0
    %v2352 = vsel %vm2287, %v1913, 0
    %v2353 = vsel %vm2294, %v1914, 0
    %v2354 = vsel %vm2301, %v1915, 0
    %v2355 = vsel %vm2308, %v1916, 0
    %v2356 = vsel %vm2315, %v1917, 0
    %v2357 = vsel %vm2322, %v1918, 0
    %v2358 = vsel %vm2329, %v1919, 0
    %v2359 = vsel %vm2336, %v1920, 0
    %v2360 = vsel %vm2343, %v1921, 0
    %v2362 = vshrl.u32 %v2344, 16
    %v2364 = vrot.slane %v2362, 7
    %v2365 = vrot.slane %v2364, 4
    %v2367 = vshrl.u32 %v2345, 16
    %v2369 = vrot.slane %v2367, 7
    %v2370 = vshll.u32 %v2345, 16
    %v2372 = vor.u32 %v2369, %v2370
    %v2373 = vsel %vm814, %v2365, %v2372
    %v2374 = vrot.slane %v2369, 4
    %v2376 = vshrl.u32 %v2346, 16
    %v2378 = vrot.slane %v2376, 7
    %v2379 = vshll.u32 %v2346, 16
    %v2381 = vor.u32 %v2378, %v2379
    %v2382 = vsel %vm814, %v2374, %v2381
    %v2383 = vrot.slane %v2378, 4
    %v2385 = vshrl.u32 %v2347, 16
    %v2387 = vrot.slane %v2385, 7
    %v2388 = vshll.u32 %v2347, 16
    %v2390 = vor.u32 %v2387, %v2388
    %v2391 = vsel %vm814, %v2383, %v2390
    %v2392 = vrot.slane %v2387, 4
    %v2394 = vshrl.u32 %v2348, 16
    %v2396 = vrot.slane %v2394, 7
    %v2397 = vshll.u32 %v2348, 16
    %v2399 = vor.u32 %v2396, %v2397
    %v2400 = vsel %vm814, %v2392, %v2399
    %v2401 = vrot.slane %v2396, 4
    %v2403 = vshrl.u32 %v2349, 16
    %v2405 = vrot.slane %v2403, 7
    %v2406 = vshll.u32 %v2349, 16
    %v2408 = vor.u32 %v2405, %v2406
    %v2409 = vsel %vm814, %v2401, %v2408
    %v2410 = vrot.slane %v2405, 4
    %v2412 = vshrl.u32 %v2350, 16
    %v2414 = vrot.slane %v2412, 7
    %v2415 = vshll.u32 %v2350, 16
    %v2417 = vor.u32 %v2414, %v2415
    %v2418 = vsel %vm814, %v2410, %v2417
    %v2419 = vrot.slane %v2414, 4
    %v2421 = vshrl.u32 %v2351, 16
    %v2423 = vrot.slane %v2421, 7
    %v2424 = vshll.u32 %v2351, 16
    %v2426 = vor.u32 %v2423, %v2424
    %v2427 = vsel %vm814, %v2419, %v2426
    %v2428 = vrot.slane %v2423, 4
    %v2430 = vshrl.u32 %v2352, 16
    %v2432 = vrot.slane %v2430, 7
    %v2433 = vshll.u32 %v2352, 16
    %v2435 = vor.u32 %v2432, %v2433
    %v2436 = vsel %vm814, %v2428, %v2435
    %v2437 = vrot.slane %v2432, 4
    %v2439 = vshrl.u32 %v2353, 16
    %v2441 = vrot.slane %v2439, 7
    %v2442 = vshll.u32 %v2353, 16
    %v2444 = vor.u32 %v2441, %v2442
    %v2445 = vsel %vm814, %v2437, %v2444
    %v2446 = vrot.slane %v2441, 4
    %v2448 = vshrl.u32 %v2354, 16
    %v2450 = vrot.slane %v2448, 7
    %v2451 = vshll.u32 %v2354, 16
    %v2453 = vor.u32 %v2450, %v2451
    %v2454 = vsel %vm814, %v2446, %v2453
    %v2455 = vrot.slane %v2450, 4
    %v2457 = vshrl.u32 %v2355, 16
    %v2459 = vrot.slane %v2457, 7
    %v2460 = vshll.u32 %v2355, 16
    %v2462 = vor.u32 %v2459, %v2460
    %v2463 = vsel %vm814, %v2455, %v2462
    %v2464 = vrot.slane %v2459, 4
    %v2466 = vshrl.u32 %v2356, 16
    %v2468 = vrot.slane %v2466, 7
    %v2469 = vshll.u32 %v2356, 16
    %v2471 = vor.u32 %v2468, %v2469
    %v2472 = vsel %vm814, %v2464, %v2471
    %v2473 = vrot.slane %v2468, 4
    %v2475 = vshrl.u32 %v2357, 16
    %v2477 = vrot.slane %v2475, 7
    %v2478 = vshll.u32 %v2357, 16
    %v2480 = vor.u32 %v2477, %v2478
    %v2481 = vsel %vm814, %v2473, %v2480
    %v2482 = vrot.slane %v2477, 4
    %v2484 = vshrl.u32 %v2358, 16
    %v2486 = vrot.slane %v2484, 7
    %v2487 = vshll.u32 %v2358, 16
    %v2489 = vor.u32 %v2486, %v2487
    %v2490 = vsel %vm814, %v2482, %v2489
    %v2491 = vrot.slane %v2486, 4
    %v2493 = vshrl.u32 %v2359, 16
    %v2495 = vrot.slane %v2493, 7
    %v2496 = vshll.u32 %v2359, 16
    %v2498 = vor.u32 %v2495, %v2496
    %v2499 = vsel %vm814, %v2491, %v2498
    %v2500 = vrot.slane %v2495, 4
    %v2502 = vshrl.u32 %v2360, 16
    %v2504 = vrot.slane %v2502, 7
    %v2505 = vshll.u32 %v2360, 16
    %v2507 = vor.u32 %v2504, %v2505
    %v2508 = vsel %vm814, %v2500, %v2507
    %2509 = vrot.lane.b32.xlu0 %v2373, 96
    %v2510 = vpop.permute.xlu0 %2509
    %2511 = vrot.lane.b32.xlu0 %v2382, 96
    %v2512 = vpop.permute.xlu0 %2511
    %2513 = vrot.lane.b32.xlu0 %v2391, 96
    %v2514 = vpop.permute.xlu0 %2513
    %2515 = vrot.lane.b32.xlu0 %v2400, 96
    %v2516 = vpop.permute.xlu0 %2515
    %2517 = vrot.lane.b32.xlu0 %v2409, 96
    %v2518 = vpop.permute.xlu0 %2517
    %2519 = vrot.lane.b32.xlu0 %v2418, 96
    %v2520 = vpop.permute.xlu0 %2519
    %2521 = vrot.lane.b32.xlu0 %v2427, 96
    %v2522 = vpop.permute.xlu0 %2521
    %2523 = vrot.lane.b32.xlu0 %v2436, 96
    %v2524 = vpop.permute.xlu0 %2523
    %2525 = vrot.lane.b32.xlu0 %v2445, 96
    %v2526 = vpop.permute.xlu0 %2525
    %2527 = vrot.lane.b32.xlu0 %v2454, 96
    %v2528 = vpop.permute.xlu0 %2527
    %2529 = vrot.lane.b32.xlu0 %v2463, 96
    %v2530 = vpop.permute.xlu0 %2529
    %2531 = vrot.lane.b32.xlu0 %v2472, 96
    %v2532 = vpop.permute.xlu0 %2531
    %2533 = vrot.lane.b32.xlu0 %v2481, 96
    %v2534 = vpop.permute.xlu0 %2533
    %2535 = vrot.lane.b32.xlu0 %v2490, 96
    %v2536 = vpop.permute.xlu0 %2535
    %2537 = vrot.lane.b32.xlu0 %v2499, 96
    %v2538 = vpop.permute.xlu0 %2537
    %2539 = vrot.lane.b32.xlu0 %v2508, 96
    %v2540 = vpop.permute.xlu0 %2539
    %vm2557 = vcmask 1044224
    %2558 = vst.msk [vmem:[#allocation3] sm:$0xf] %vm2557, %v2510
    %2559 = vst.msk [vmem:[#allocation3 + $0xc] sm:$0xf] %vm2557, %v2512
    %2560 = vst.msk [vmem:[#allocation3 + $0x18] sm:$0xf] %vm2557, %v2514
    %2561 = vst.msk [vmem:[#allocation3 + $0x24] sm:$0xf] %vm2557, %v2516
    %2562 = vst.msk [vmem:[#allocation3 + $0x30] sm:$0xf] %vm2557, %v2518
    %2563 = vst.msk [vmem:[#allocation3 + $0x3c] sm:$0xf] %vm2557, %v2520
    %2564 = vst.msk [vmem:[#allocation3 + $0x48] sm:$0xf] %vm2557, %v2522
    %2565 = vst.msk [vmem:[#allocation3 + $0x54] sm:$0xf] %vm2557, %v2524
    %2566 = vst.msk [vmem:[#allocation3 + $0x60] sm:$0xf] %vm2557, %v2526
    %2567 = vst.msk [vmem:[#allocation3 + $0x6c] sm:$0xf] %vm2557, %v2528
    %2568 = vst.msk [vmem:[#allocation3 + $0x78] sm:$0xf] %vm2557, %v2530
    %2569 = vst.msk [vmem:[#allocation3 + $0x84] sm:$0xf] %vm2557, %v2532
    %2570 = vst.msk [vmem:[#allocation3 + $0x90] sm:$0xf] %vm2557, %v2534
    %2571 = vst.msk [vmem:[#allocation3 + $0x9c] sm:$0xf] %vm2557, %v2536
    %2572 = vst.msk [vmem:[#allocation3 + $0xa8] sm:$0xf] %vm2557, %v2538
    %2573 = vst.msk [vmem:[#allocation3 + $0xb4] sm:$0xf] %vm2557, %v2540
    %v2574 = vld [vmem:[#allocation2 + $0x8] sm:$0xf]
    %v2575 = vld [vmem:[#allocation2 + $0xc] sm:$0xf]
    %v2576 = vld [vmem:[#allocation2 + $0x10] sm:$0xf]
    %v2577 = vld [vmem:[#allocation2 + $0x14] sm:$0xf]
    %v2578 = vld [vmem:[#allocation2 + $0x18] sm:$0xf]
    %v2579 = vld [vmem:[#allocation2 + $0x1c] sm:$0xf]
    %v2580 = vld [vmem:[#allocation2 + $0x20] sm:$0xf]
    %v2581 = vld [vmem:[#allocation2 + $0x24] sm:$0xf]
    %v2582 = vld [vmem:[#allocation2 + $0x28] sm:$0xf]
    %v2583 = vld [vmem:[#allocation2 + $0x2c] sm:$0xf]
    %v2584 = vld [vmem:[#allocation2 + $0x30] sm:$0xf]
    %v2585 = vld [vmem:[#allocation2 + $0x34] sm:$0xf]
    %v2586 = vld [vmem:[#allocation2 + $0x38] sm:$0xf]
    %v2587 = vld [vmem:[#allocation2 + $0x3c] sm:$0xf]
    %v2588 = vld [vmem:[#allocation2 + $0x40] sm:$0xf]
    %v2589 = vld [vmem:[#allocation2 + $0x44] sm:$0xf]
    %v2590 = vld [vmem:[%s1] sm:$0xff]
    %v2591 = vld [vmem:[%s1 + $0x8] sm:$0xff]
    %v2592 = vld [vmem:[%s1 + $0x10] sm:$0xff]
    %v2593 = vld [vmem:[%s1 + $0x18] sm:$0xff]
    %v2594 = vld [vmem:[%s1 + $0x20] sm:$0xff]
    %v2595 = vld [vmem:[%s1 + $0x28] sm:$0xff]
    %v2596 = vld [vmem:[%s1 + $0x30] sm:$0xff]
    %v2597 = vld [vmem:[%s1 + $0x38] sm:$0xff]
    %v2598 = vld [vmem:[%s1 + $0x40] sm:$0xff]
    %v2599 = vld [vmem:[%s1 + $0x48] sm:$0xff]
    %v2600 = vld [vmem:[%s1 + $0x50] sm:$0xff]
    %v2601 = vld [vmem:[%s1 + $0x58] sm:$0xff]
    %v2602 = vld [vmem:[%s1 + $0x60] sm:$0xff]
    %v2603 = vld [vmem:[%s1 + $0x68] sm:$0xff]
    %v2604 = vld [vmem:[%s1 + $0x70] sm:$0xff]
    %v2605 = vld [vmem:[%s1 + $0x78] sm:$0xff]
    %vm2606 = vcmp.gt.f32.partialorder %v2590, 0.0
    %vm2607 = vcmp.gt.f32.partialorder %v2591, 0.0
    %vm2608 = vcmp.gt.f32.partialorder %v2592, 0.0
    %vm2609 = vcmp.gt.f32.partialorder %v2593, 0.0
    %vm2610 = vcmp.gt.f32.partialorder %v2594, 0.0
    %vm2611 = vcmp.gt.f32.partialorder %v2595, 0.0
    %vm2612 = vcmp.gt.f32.partialorder %v2596, 0.0
    %vm2613 = vcmp.gt.f32.partialorder %v2597, 0.0
    %vm2614 = vcmp.gt.f32.partialorder %v2598, 0.0
    %vm2615 = vcmp.gt.f32.partialorder %v2599, 0.0
    %vm2616 = vcmp.gt.f32.partialorder %v2600, 0.0
    %vm2617 = vcmp.gt.f32.partialorder %v2601, 0.0
    %vm2618 = vcmp.gt.f32.partialorder %v2602, 0.0
    %vm2619 = vcmp.gt.f32.partialorder %v2603, 0.0
    %vm2620 = vcmp.gt.f32.partialorder %v2604, 0.0
    %vm2621 = vcmp.gt.f32.partialorder %v2605, 0.0
    %v2622 = vsel %vm2606, 1, 0
    %v2623 = vsel %vm2607, 1, 0
    %v2624 = vsel %vm2608, 1, 0
    %v2625 = vsel %vm2609, 1, 0
    %v2626 = vsel %vm2610, 1, 0
    %v2627 = vsel %vm2611, 1, 0
    %v2628 = vsel %vm2612, 1, 0
    %v2629 = vsel %vm2613, 1, 0
    %v2630 = vsel %vm2614, 1, 0
    %v2631 = vsel %vm2615, 1, 0
    %v2632 = vsel %vm2616, 1, 0
    %v2633 = vsel %vm2617, 1, 0
    %v2634 = vsel %vm2618, 1, 0
    %v2635 = vsel %vm2619, 1, 0
    %v2636 = vsel %vm2620, 1, 0
    %v2637 = vsel %vm2621, 1, 0
    %2638 = vset.pattern.permute.xlu0 4
    %2639 = vperm.xlu0 %2638, %v2622
    %v2640 = vpop.permute.xlu0 %2639
    %2641 = vset.pattern.permute.xlu0 4
    %2642 = vperm.xlu0 %2641, %v2623
    %v2643 = vpop.permute.xlu0 %2642
    %2644 = vset.pattern.permute.xlu0 4
    %2645 = vperm.xlu0 %2644, %v2624
    %v2646 = vpop.permute.xlu0 %2645
    %2647 = vset.pattern.permute.xlu0 4
    %2648 = vperm.xlu0 %2647, %v2625
    %v2649 = vpop.permute.xlu0 %2648
    %2650 = vset.pattern.permute.xlu0 4
    %2651 = vperm.xlu0 %2650, %v2626
    %v2652 = vpop.permute.xlu0 %2651
    %2653 = vset.pattern.permute.xlu0 4
    %2654 = vperm.xlu0 %2653, %v2627
    %v2655 = vpop.permute.xlu0 %2654
    %2656 = vset.pattern.permute.xlu0 4
    %2657 = vperm.xlu0 %2656, %v2628
    %v2658 = vpop.permute.xlu0 %2657
    %2659 = vset.pattern.permute.xlu0 4
    %2660 = vperm.xlu0 %2659, %v2629
    %v2661 = vpop.permute.xlu0 %2660
    %2662 = vset.pattern.permute.xlu0 4
    %2663 = vperm.xlu0 %2662, %v2630
    %v2664 = vpop.permute.xlu0 %2663
    %2665 = vset.pattern.permute.xlu0 4
    %2666 = vperm.xlu0 %2665, %v2631
    %v2667 = vpop.permute.xlu0 %2666
    %2668 = vset.pattern.permute.xlu0 4
    %2669 = vperm.xlu0 %2668, %v2632
    %v2670 = vpop.permute.xlu0 %2669
    %2671 = vset.pattern.permute.xlu0 4
    %2672 = vperm.xlu0 %2671, %v2633
    %v2673 = vpop.permute.xlu0 %2672
    %2674 = vset.pattern.permute.xlu0 4
    %2675 = vperm.xlu0 %2674, %v2634
    %v2676 = vpop.permute.xlu0 %2675
    %2677 = vset.pattern.permute.xlu0 4
    %2678 = vperm.xlu0 %2677, %v2635
    %v2679 = vpop.permute.xlu0 %2678
    %2680 = vset.pattern.permute.xlu0 4
    %2681 = vperm.xlu0 %2680, %v2636
    %v2682 = vpop.permute.xlu0 %2681
    %2683 = vset.pattern.permute.xlu0 4
    %2684 = vperm.xlu0 %2683, %v2637
    %v2685 = vpop.permute.xlu0 %2684
    %vm2686 = vcmp.eq.s32.totalorder %v2640, 1
    %vm2687 = vcmp.eq.s32.totalorder %v2643, 1
    %vm2688 = vcmp.eq.s32.totalorder %v2646, 1
    %vm2689 = vcmp.eq.s32.totalorder %v2649, 1
    %vm2690 = vcmp.eq.s32.totalorder %v2652, 1
    %vm2691 = vcmp.eq.s32.totalorder %v2655, 1
    %vm2692 = vcmp.eq.s32.totalorder %v2658, 1
    %vm2693 = vcmp.eq.s32.totalorder %v2661, 1
    %vm2694 = vcmp.eq.s32.totalorder %v2664, 1
    %vm2695 = vcmp.eq.s32.totalorder %v2667, 1
    %vm2696 = vcmp.eq.s32.totalorder %v2670, 1
    %vm2697 = vcmp.eq.s32.totalorder %v2673, 1
    %vm2698 = vcmp.eq.s32.totalorder %v2676, 1
    %vm2699 = vcmp.eq.s32.totalorder %v2679, 1
    %vm2700 = vcmp.eq.s32.totalorder %v2682, 1
    %vm2701 = vcmp.eq.s32.totalorder %v2685, 1
    %vm2702 = vmpackc.low %vm2686, %vm2686
    %vm2703 = vmpackc.low %vm2687, %vm2687
    %vm2704 = vmpackc.low %vm2688, %vm2688
    %vm2705 = vmpackc.low %vm2689, %vm2689
    %vm2706 = vmpackc.low %vm2690, %vm2690
    %vm2707 = vmpackc.low %vm2691, %vm2691
    %vm2708 = vmpackc.low %vm2692, %vm2692
    %vm2709 = vmpackc.low %vm2693, %vm2693
    %vm2710 = vmpackc.low %vm2694, %vm2694
    %vm2711 = vmpackc.low %vm2695, %vm2695
    %vm2712 = vmpackc.low %vm2696, %vm2696
    %vm2713 = vmpackc.low %vm2697, %vm2697
    %vm2714 = vmpackc.low %vm2698, %vm2698
    %vm2715 = vmpackc.low %vm2699, %vm2699
    %vm2716 = vmpackc.low %vm2700, %vm2700
    %vm2717 = vmpackc.low %vm2701, %vm2701
    %v2718 = vsel %vm2702, %v2574, 0
    %v2719 = vsel %vm2703, %v2575, 0
    %v2720 = vsel %vm2704, %v2576, 0
    %v2721 = vsel %vm2705, %v2577, 0
    %v2722 = vsel %vm2706, %v2578, 0
    %v2723 = vsel %vm2707, %v2579, 0
    %v2724 = vsel %vm2708, %v2580, 0
    %v2725 = vsel %vm2709, %v2581, 0
    %v2726 = vsel %vm2710, %v2582, 0
    %v2727 = vsel %vm2711, %v2583, 0
    %v2728 = vsel %vm2712, %v2584, 0
    %v2729 = vsel %vm2713, %v2585, 0
    %v2730 = vsel %vm2714, %v2586, 0
    %v2731 = vsel %vm2715, %v2587, 0
    %v2732 = vsel %vm2716, %v2588, 0
    %v2733 = vsel %vm2717, %v2589, 0
    %2734 = vst.msk [vmem:[#allocation3 + $0x4] sm:$0xf] %vm336, %v2718
    %2735 = vst.msk [vmem:[#allocation3 + $0x10] sm:$0xf] %vm336, %v2719
    %2736 = vst.msk [vmem:[#allocation3 + $0x1c] sm:$0xf] %vm336, %v2720
    %2737 = vst.msk [vmem:[#allocation3 + $0x28] sm:$0xf] %vm336, %v2721
    %2738 = vst.msk [vmem:[#allocation3 + $0x34] sm:$0xf] %vm336, %v2722
    %2739 = vst.msk [vmem:[#allocation3 + $0x40] sm:$0xf] %vm336, %v2723
    %2740 = vst.msk [vmem:[#allocation3 + $0x4c] sm:$0xf] %vm336, %v2724
    %2741 = vst.msk [vmem:[#allocation3 + $0x58] sm:$0xf] %vm336, %v2725
    %2742 = vst.msk [vmem:[#allocation3 + $0x64] sm:$0xf] %vm336, %v2726
    %2743 = vst.msk [vmem:[#allocation3 + $0x70] sm:$0xf] %vm336, %v2727
    %2744 = vst.msk [vmem:[#allocation3 + $0x7c] sm:$0xf] %vm336, %v2728
    %2745 = vst.msk [vmem:[#allocation3 + $0x88] sm:$0xf] %vm336, %v2729
    %2746 = vst.msk [vmem:[#allocation3 + $0x94] sm:$0xf] %vm336, %v2730
    %2747 = vst.msk [vmem:[#allocation3 + $0xa0] sm:$0xf] %vm336, %v2731
    %2748 = vst.msk [vmem:[#allocation3 + $0xac] sm:$0xf] %vm336, %v2732
    %2749 = vst.msk [vmem:[#allocation3 + $0xb8] sm:$0xf] %vm336, %v2733
    %v2750 = vld [vmem:[#allocation2 + $0x8] sm:$0xf]
    %v2751 = vld [vmem:[#allocation2 + $0xc] sm:$0xf]
    %v2752 = vld [vmem:[#allocation2 + $0x10] sm:$0xf]
    %v2753 = vld [vmem:[#allocation2 + $0x14] sm:$0xf]
    %v2754 = vld [vmem:[#allocation2 + $0x18] sm:$0xf]
    %v2755 = vld [vmem:[#allocation2 + $0x1c] sm:$0xf]
    %v2756 = vld [vmem:[#allocation2 + $0x20] sm:$0xf]
    %v2757 = vld [vmem:[#allocation2 + $0x24] sm:$0xf]
    %v2758 = vld [vmem:[#allocation2 + $0x28] sm:$0xf]
    %v2759 = vld [vmem:[#allocation2 + $0x2c] sm:$0xf]
    %v2760 = vld [vmem:[#allocation2 + $0x30] sm:$0xf]
    %v2761 = vld [vmem:[#allocation2 + $0x34] sm:$0xf]
    %v2762 = vld [vmem:[#allocation2 + $0x38] sm:$0xf]
    %v2763 = vld [vmem:[#allocation2 + $0x3c] sm:$0xf]
    %v2764 = vld [vmem:[#allocation2 + $0x40] sm:$0xf]
    %v2765 = vld [vmem:[#allocation2 + $0x44] sm:$0xf]
    %v2766 = vld [vmem:[#allocation2 + $0x48] sm:$0x1]
    %v2767 = vld [vmem:[%s1] sm:$0xff]
    %v2768 = vld [vmem:[%s1 + $0x8] sm:$0xff]
    %v2769 = vld [vmem:[%s1 + $0x10] sm:$0xff]
    %v2770 = vld [vmem:[%s1 + $0x18] sm:$0xff]
    %v2771 = vld [vmem:[%s1 + $0x20] sm:$0xff]
    %v2772 = vld [vmem:[%s1 + $0x28] sm:$0xff]
    %v2773 = vld [vmem:[%s1 + $0x30] sm:$0xff]
    %v2774 = vld [vmem:[%s1 + $0x38] sm:$0xff]
    %v2775 = vld [vmem:[%s1 + $0x40] sm:$0xff]
    %v2776 = vld [vmem:[%s1 + $0x48] sm:$0xff]
    %v2777 = vld [vmem:[%s1 + $0x50] sm:$0xff]
    %v2778 = vld [vmem:[%s1 + $0x58] sm:$0xff]
    %v2779 = vld [vmem:[%s1 + $0x60] sm:$0xff]
    %v2780 = vld [vmem:[%s1 + $0x68] sm:$0xff]
    %v2781 = vld [vmem:[%s1 + $0x70] sm:$0xff]
    %v2782 = vld [vmem:[%s1 + $0x78] sm:$0xff]
    %vm2783 = vcmp.gt.f32.partialorder %v2767, 0.0
    %vm2784 = vcmp.gt.f32.partialorder %v2768, 0.0
    %vm2785 = vcmp.gt.f32.partialorder %v2769, 0.0
    %vm2786 = vcmp.gt.f32.partialorder %v2770, 0.0
    %vm2787 = vcmp.gt.f32.partialorder %v2771, 0.0
    %vm2788 = vcmp.gt.f32.partialorder %v2772, 0.0
    %vm2789 = vcmp.gt.f32.partialorder %v2773, 0.0
    %vm2790 = vcmp.gt.f32.partialorder %v2774, 0.0
    %vm2791 = vcmp.gt.f32.partialorder %v2775, 0.0
    %vm2792 = vcmp.gt.f32.partialorder %v2776, 0.0
    %vm2793 = vcmp.gt.f32.partialorder %v2777, 0.0
    %vm2794 = vcmp.gt.f32.partialorder %v2778, 0.0
    %vm2795 = vcmp.gt.f32.partialorder %v2779, 0.0
    %vm2796 = vcmp.gt.f32.partialorder %v2780, 0.0
    %vm2797 = vcmp.gt.f32.partialorder %v2781, 0.0
    %vm2798 = vcmp.gt.f32.partialorder %v2782, 0.0
    %v2799 = vsel %vm2783, 1, 0
    %v2800 = vsel %vm2784, 1, 0
    %v2801 = vsel %vm2785, 1, 0
    %v2802 = vsel %vm2786, 1, 0
    %v2803 = vsel %vm2787, 1, 0
    %v2804 = vsel %vm2788, 1, 0
    %v2805 = vsel %vm2789, 1, 0
    %v2806 = vsel %vm2790, 1, 0
    %v2807 = vsel %vm2791, 1, 0
    %v2808 = vsel %vm2792, 1, 0
    %v2809 = vsel %vm2793, 1, 0
    %v2810 = vsel %vm2794, 1, 0
    %v2811 = vsel %vm2795, 1, 0
    %v2812 = vsel %vm2796, 1, 0
    %v2813 = vsel %vm2797, 1, 0
    %v2814 = vsel %vm2798, 1, 0
    %2815 = vset.pattern.permute.xlu0 5
    %2816 = vperm.xlu0 %2815, %v2799
    %v2817 = vpop.permute.xlu0 %2816
    %2818 = vset.pattern.permute.xlu0 5
    %2819 = vperm.xlu0 %2818, %v2800
    %v2820 = vpop.permute.xlu0 %2819
    %2821 = vset.pattern.permute.xlu0 5
    %2822 = vperm.xlu0 %2821, %v2801
    %v2823 = vpop.permute.xlu0 %2822
    %2824 = vset.pattern.permute.xlu0 5
    %2825 = vperm.xlu0 %2824, %v2802
    %v2826 = vpop.permute.xlu0 %2825
    %2827 = vset.pattern.permute.xlu0 5
    %2828 = vperm.xlu0 %2827, %v2803
    %v2829 = vpop.permute.xlu0 %2828
    %2830 = vset.pattern.permute.xlu0 5
    %2831 = vperm.xlu0 %2830, %v2804
    %v2832 = vpop.permute.xlu0 %2831
    %2833 = vset.pattern.permute.xlu0 5
    %2834 = vperm.xlu0 %2833, %v2805
    %v2835 = vpop.permute.xlu0 %2834
    %2836 = vset.pattern.permute.xlu0 5
    %2837 = vperm.xlu0 %2836, %v2806
    %v2838 = vpop.permute.xlu0 %2837
    %2839 = vset.pattern.permute.xlu0 5
    %2840 = vperm.xlu0 %2839, %v2807
    %v2841 = vpop.permute.xlu0 %2840
    %2842 = vset.pattern.permute.xlu0 5
    %2843 = vperm.xlu0 %2842, %v2808
    %v2844 = vpop.permute.xlu0 %2843
    %2845 = vset.pattern.permute.xlu0 5
    %2846 = vperm.xlu0 %2845, %v2809
    %v2847 = vpop.permute.xlu0 %2846
    %2848 = vset.pattern.permute.xlu0 5
    %2849 = vperm.xlu0 %2848, %v2810
    %v2850 = vpop.permute.xlu0 %2849
    %2851 = vset.pattern.permute.xlu0 5
    %2852 = vperm.xlu0 %2851, %v2811
    %v2853 = vpop.permute.xlu0 %2852
    %2854 = vset.pattern.permute.xlu0 5
    %2855 = vperm.xlu0 %2854, %v2812
    %v2856 = vpop.permute.xlu0 %2855
    %2857 = vset.pattern.permute.xlu0 5
    %2858 = vperm.xlu0 %2857, %v2813
    %v2859 = vpop.permute.xlu0 %2858
    %2860 = vset.pattern.permute.xlu0 5
    %2861 = vperm.xlu0 %2860, %v2814
    %v2862 = vpop.permute.xlu0 %2861
    %vm2863 = vcmp.eq.s32.totalorder %v2817, 1
    %vm2864 = vcmp.eq.s32.totalorder %v2820, 1
    %vm2865 = vcmp.eq.s32.totalorder %v2823, 1
    %vm2866 = vcmp.eq.s32.totalorder %v2826, 1
    %vm2867 = vcmp.eq.s32.totalorder %v2829, 1
    %vm2868 = vcmp.eq.s32.totalorder %v2832, 1
    %vm2869 = vcmp.eq.s32.totalorder %v2835, 1
    %vm2870 = vcmp.eq.s32.totalorder %v2838, 1
    %vm2871 = vcmp.eq.s32.totalorder %v2841, 1
    %vm2872 = vcmp.eq.s32.totalorder %v2844, 1
    %vm2873 = vcmp.eq.s32.totalorder %v2847, 1
    %vm2874 = vcmp.eq.s32.totalorder %v2850, 1
    %vm2875 = vcmp.eq.s32.totalorder %v2853, 1
    %vm2876 = vcmp.eq.s32.totalorder %v2856, 1
    %vm2877 = vcmp.eq.s32.totalorder %v2859, 1
    %vm2878 = vcmp.eq.s32.totalorder %v2862, 1
    %vm2879 = vmpackc.low %vm2863, %vm2863
    %vm2880 = vmpackc.low %vm2864, %vm2864
    %vm2881 = vmpackc.low %vm2865, %vm2865
    %vm2882 = vmpackc.low %vm2866, %vm2866
    %vm2883 = vmpackc.low %vm2867, %vm2867
    %vm2884 = vmpackc.low %vm2868, %vm2868
    %vm2885 = vmpackc.low %vm2869, %vm2869
    %vm2886 = vmpackc.low %vm2870, %vm2870
    %vm2887 = vmpackc.low %vm2871, %vm2871
    %vm2888 = vmpackc.low %vm2872, %vm2872
    %vm2889 = vmpackc.low %vm2873, %vm2873
    %vm2890 = vmpackc.low %vm2874, %vm2874
    %vm2891 = vmpackc.low %vm2875, %vm2875
    %vm2892 = vmpackc.low %vm2876, %vm2876
    %vm2893 = vmpackc.low %vm2877, %vm2877
    %vm2894 = vmpackc.low %vm2878, %vm2878
    %v2895 = vsel %vm2879, 65537, 0
    %v2896 = vsel %vm2880, 65537, 0
    %v2897 = vsel %vm2881, 65537, 0
    %v2898 = vsel %vm2882, 65537, 0
    %v2899 = vsel %vm2883, 65537, 0
    %v2900 = vsel %vm2884, 65537, 0
    %v2901 = vsel %vm2885, 65537, 0
    %v2902 = vsel %vm2886, 65537, 0
    %v2903 = vsel %vm2887, 65537, 0
    %v2904 = vsel %vm2888, 65537, 0
    %v2905 = vsel %vm2889, 65537, 0
    %v2906 = vsel %vm2890, 65537, 0
    %v2907 = vsel %vm2891, 65537, 0
    %v2908 = vsel %vm2892, 65537, 0
    %v2909 = vsel %vm2893, 65537, 0
    %v2910 = vsel %vm2894, 65537, 0
    %v2912 = vshrl.u32 %v2895, 16
    %v2914 = vrot.slane %v2912, 7
    %v2915 = vshll.u32 %v2895, 16
    %v2917 = vor.u32 %v2914, %v2915
    %v2918 = vrot.slane %v2914, 4
    %v2920 = vshrl.u32 %v2896, 16
    %v2922 = vrot.slane %v2920, 7
    %v2923 = vshll.u32 %v2896, 16
    %v2925 = vor.u32 %v2922, %v2923
    %v2926 = vsel %vm814, %v2918, %v2925
    %v2927 = vrot.slane %v2922, 4
    %v2929 = vshrl.u32 %v2897, 16
    %v2931 = vrot.slane %v2929, 7
    %v2932 = vshll.u32 %v2897, 16
    %v2934 = vor.u32 %v2931, %v2932
    %v2935 = vsel %vm814, %v2927, %v2934
    %v2936 = vrot.slane %v2931, 4
    %v2938 = vshrl.u32 %v2898, 16
    %v2940 = vrot.slane %v2938, 7
    %v2941 = vshll.u32 %v2898, 16
    %v2943 = vor.u32 %v2940, %v2941
    %v2944 = vsel %vm814, %v2936, %v2943
    %v2945 = vrot.slane %v2940, 4
    %v2947 = vshrl.u32 %v2899, 16
    %v2949 = vrot.slane %v2947, 7
    %v2950 = vshll.u32 %v2899, 16
    %v2952 = vor.u32 %v2949, %v2950
    %v2953 = vsel %vm814, %v2945, %v2952
    %v2954 = vrot.slane %v2949, 4
    %v2956 = vshrl.u32 %v2900, 16
    %v2958 = vrot.slane %v2956, 7
    %v2959 = vshll.u32 %v2900, 16
    %v2961 = vor.u32 %v2958, %v2959
    %v2962 = vsel %vm814, %v2954, %v2961
    %v2963 = vrot.slane %v2958, 4
    %v2965 = vshrl.u32 %v2901, 16
    %v2967 = vrot.slane %v2965, 7
    %v2968 = vshll.u32 %v2901, 16
    %v2970 = vor.u32 %v2967, %v2968
    %v2971 = vsel %vm814, %v2963, %v2970
    %v2972 = vrot.slane %v2967, 4
    %v2974 = vshrl.u32 %v2902, 16
    %v2976 = vrot.slane %v2974, 7
    %v2977 = vshll.u32 %v2902, 16
    %v2979 = vor.u32 %v2976, %v2977
    %v2980 = vsel %vm814, %v2972, %v2979
    %v2981 = vrot.slane %v2976, 4
    %v2983 = vshrl.u32 %v2903, 16
    %v2985 = vrot.slane %v2983, 7
    %v2986 = vshll.u32 %v2903, 16
    %v2988 = vor.u32 %v2985, %v2986
    %v2989 = vsel %vm814, %v2981, %v2988
    %v2990 = vrot.slane %v2985, 4
    %v2992 = vshrl.u32 %v2904, 16
    %v2994 = vrot.slane %v2992, 7
    %v2995 = vshll.u32 %v2904, 16
    %v2997 = vor.u32 %v2994, %v2995
    %v2998 = vsel %vm814, %v2990, %v2997
    %v2999 = vrot.slane %v2994, 4
    %v3001 = vshrl.u32 %v2905, 16
    %v3003 = vrot.slane %v3001, 7
    %v3004 = vshll.u32 %v2905, 16
    %v3006 = vor.u32 %v3003, %v3004
    %v3007 = vsel %vm814, %v2999, %v3006
    %v3008 = vrot.slane %v3003, 4
    %v3010 = vshrl.u32 %v2906, 16
    %v3012 = vrot.slane %v3010, 7
    %v3013 = vshll.u32 %v2906, 16
    %v3015 = vor.u32 %v3012, %v3013
    %v3016 = vsel %vm814, %v3008, %v3015
    %v3017 = vrot.slane %v3012, 4
    %v3019 = vshrl.u32 %v2907, 16
    %v3021 = vrot.slane %v3019, 7
    %v3022 = vshll.u32 %v2907, 16
    %v3024 = vor.u32 %v3021, %v3022
    %v3025 = vsel %vm814, %v3017, %v3024
    %v3026 = vrot.slane %v3021, 4
    %v3028 = vshrl.u32 %v2908, 16
    %v3030 = vrot.slane %v3028, 7
    %v3031 = vshll.u32 %v2908, 16
    %v3033 = vor.u32 %v3030, %v3031
    %v3034 = vsel %vm814, %v3026, %v3033
    %v3035 = vrot.slane %v3030, 4
    %v3037 = vshrl.u32 %v2909, 16
    %v3039 = vrot.slane %v3037, 7
    %v3040 = vshll.u32 %v2909, 16
    %v3042 = vor.u32 %v3039, %v3040
    %v3043 = vsel %vm814, %v3035, %v3042
    %v3044 = vrot.slane %v3039, 4
    %v3046 = vshrl.u32 %v2910, 16
    %v3048 = vrot.slane %v3046, 7
    %v3049 = vshll.u32 %v2910, 16
    %v3051 = vor.u32 %v3048, %v3049
    %v3052 = vsel %vm814, %v3044, %v3051
    %v3053 = vrot.slane %v3048, 4
    %v3054 = vunpack.c.l.b16 %v2917
    %v3055 = vunpack.c.h.b16 %v2917
    %v3056 = vunpack.c.l.b16 0
    %v3057 = vunpack.c.h.b16 0
    %vm3058 = vcmp.ne.s32.totalorder %v3054, %v3056
    %vm3059 = vcmp.ne.s32.totalorder %v3055, %v3057
    %vm3060 = vmpackc.low %vm3059, %vm3058
    %v3061 = vunpack.c.l.b16 %v2926
    %v3062 = vunpack.c.h.b16 %v2926
    %v3063 = vunpack.c.l.b16 0
    %v3064 = vunpack.c.h.b16 0
    %vm3065 = vcmp.ne.s32.totalorder %v3061, %v3063
    %vm3066 = vcmp.ne.s32.totalorder %v3062, %v3064
    %vm3067 = vmpackc.low %vm3066, %vm3065
    %v3068 = vunpack.c.l.b16 %v2935
    %v3069 = vunpack.c.h.b16 %v2935
    %v3070 = vunpack.c.l.b16 0
    %v3071 = vunpack.c.h.b16 0
    %vm3072 = vcmp.ne.s32.totalorder %v3068, %v3070
    %vm3073 = vcmp.ne.s32.totalorder %v3069, %v3071
    %vm3074 = vmpackc.low %vm3073, %vm3072
    %v3075 = vunpack.c.l.b16 %v2944
    %v3076 = vunpack.c.h.b16 %v2944
    %v3077 = vunpack.c.l.b16 0
    %v3078 = vunpack.c.h.b16 0
    %vm3079 = vcmp.ne.s32.totalorder %v3075, %v3077
    %vm3080 = vcmp.ne.s32.totalorder %v3076, %v3078
    %vm3081 = vmpackc.low %vm3080, %vm3079
    %v3082 = vunpack.c.l.b16 %v2953
    %v3083 = vunpack.c.h.b16 %v2953
    %v3084 = vunpack.c.l.b16 0
    %v3085 = vunpack.c.h.b16 0
    %vm3086 = vcmp.ne.s32.totalorder %v3082, %v3084
    %vm3087 = vcmp.ne.s32.totalorder %v3083, %v3085
    %vm3088 = vmpackc.low %vm3087, %vm3086
    %v3089 = vunpack.c.l.b16 %v2962
    %v3090 = vunpack.c.h.b16 %v2962
    %v3091 = vunpack.c.l.b16 0
    %v3092 = vunpack.c.h.b16 0
    %vm3093 = vcmp.ne.s32.totalorder %v3089, %v3091
    %vm3094 = vcmp.ne.s32.totalorder %v3090, %v3092
    %vm3095 = vmpackc.low %vm3094, %vm3093
    %v3096 = vunpack.c.l.b16 %v2971
    %v3097 = vunpack.c.h.b16 %v2971
    %v3098 = vunpack.c.l.b16 0
    %v3099 = vunpack.c.h.b16 0
    %vm3100 = vcmp.ne.s32.totalorder %v3096, %v3098
    %vm3101 = vcmp.ne.s32.totalorder %v3097, %v3099
    %vm3102 = vmpackc.low %vm3101, %vm3100
    %v3103 = vunpack.c.l.b16 %v2980
    %v3104 = vunpack.c.h.b16 %v2980
    %v3105 = vunpack.c.l.b16 0
    %v3106 = vunpack.c.h.b16 0
    %vm3107 = vcmp.ne.s32.totalorder %v3103, %v3105
    %vm3108 = vcmp.ne.s32.totalorder %v3104, %v3106
    %vm3109 = vmpackc.low %vm3108, %vm3107
    %v3110 = vunpack.c.l.b16 %v2989
    %v3111 = vunpack.c.h.b16 %v2989
    %v3112 = vunpack.c.l.b16 0
    %v3113 = vunpack.c.h.b16 0
    %vm3114 = vcmp.ne.s32.totalorder %v3110, %v3112
    %vm3115 = vcmp.ne.s32.totalorder %v3111, %v3113
    %vm3116 = vmpackc.low %vm3115, %vm3114
    %v3117 = vunpack.c.l.b16 %v2998
    %v3118 = vunpack.c.h.b16 %v2998
    %v3119 = vunpack.c.l.b16 0
    %v3120 = vunpack.c.h.b16 0
    %vm3121 = vcmp.ne.s32.totalorder %v3117, %v3119
    %vm3122 = vcmp.ne.s32.totalorder %v3118, %v3120
    %vm3123 = vmpackc.low %vm3122, %vm3121
    %v3124 = vunpack.c.l.b16 %v3007
    %v3125 = vunpack.c.h.b16 %v3007
    %v3126 = vunpack.c.l.b16 0
    %v3127 = vunpack.c.h.b16 0
    %vm3128 = vcmp.ne.s32.totalorder %v3124, %v3126
    %vm3129 = vcmp.ne.s32.totalorder %v3125, %v3127
    %vm3130 = vmpackc.low %vm3129, %vm3128
    %v3131 = vunpack.c.l.b16 %v3016
    %v3132 = vunpack.c.h.b16 %v3016
    %v3133 = vunpack.c.l.b16 0
    %v3134 = vunpack.c.h.b16 0
    %vm3135 = vcmp.ne.s32.totalorder %v3131, %v3133
    %vm3136 = vcmp.ne.s32.totalorder %v3132, %v3134
    %vm3137 = vmpackc.low %vm3136, %vm3135
    %v3138 = vunpack.c.l.b16 %v3025
    %v3139 = vunpack.c.h.b16 %v3025
    %v3140 = vunpack.c.l.b16 0
    %v3141 = vunpack.c.h.b16 0
    %vm3142 = vcmp.ne.s32.totalorder %v3138, %v3140
    %vm3143 = vcmp.ne.s32.totalorder %v3139, %v3141
    %vm3144 = vmpackc.low %vm3143, %vm3142
    %v3145 = vunpack.c.l.b16 %v3034
    %v3146 = vunpack.c.h.b16 %v3034
    %v3147 = vunpack.c.l.b16 0
    %v3148 = vunpack.c.h.b16 0
    %vm3149 = vcmp.ne.s32.totalorder %v3145, %v3147
    %vm3150 = vcmp.ne.s32.totalorder %v3146, %v3148
    %vm3151 = vmpackc.low %vm3150, %vm3149
    %v3152 = vunpack.c.l.b16 %v3043
    %v3153 = vunpack.c.h.b16 %v3043
    %v3154 = vunpack.c.l.b16 0
    %v3155 = vunpack.c.h.b16 0
    %vm3156 = vcmp.ne.s32.totalorder %v3152, %v3154
    %vm3157 = vcmp.ne.s32.totalorder %v3153, %v3155
    %vm3158 = vmpackc.low %vm3157, %vm3156
    %v3159 = vunpack.c.l.b16 %v3052
    %v3160 = vunpack.c.h.b16 %v3052
    %v3161 = vunpack.c.l.b16 0
    %v3162 = vunpack.c.h.b16 0
    %vm3163 = vcmp.ne.s32.totalorder %v3159, %v3161
    %vm3164 = vcmp.ne.s32.totalorder %v3160, %v3162
    %vm3165 = vmpackc.low %vm3164, %vm3163
    %v3166 = vunpack.c.l.b16 %v3053
    %v3167 = vunpack.c.h.b16 %v3053
    %v3168 = vunpack.c.l.b16 0
    %v3169 = vunpack.c.h.b16 0
    %vm3170 = vcmp.ne.s32.totalorder %v3166, %v3168
    %vm3171 = vcmp.ne.s32.totalorder %v3167, %v3169
    %vm3172 = vmpackc.low %vm3171, %vm3170
    %v3173 = vsel %vm3060, %v2750, 0
    %v3174 = vsel %vm3067, %v2751, 0
    %v3175 = vsel %vm3074, %v2752, 0
    %v3176 = vsel %vm3081, %v2753, 0
    %v3177 = vsel %vm3088, %v2754, 0
    %v3178 = vsel %vm3095, %v2755, 0
    %v3179 = vsel %vm3102, %v2756, 0
    %v3180 = vsel %vm3109, %v2757, 0
    %v3181 = vsel %vm3116, %v2758, 0
    %v3182 = vsel %vm3123, %v2759, 0
    %v3183 = vsel %vm3130, %v2760, 0
    %v3184 = vsel %vm3137, %v2761, 0
    %v3185 = vsel %vm3144, %v2762, 0
    %v3186 = vsel %vm3151, %v2763, 0
    %v3187 = vsel %vm3158, %v2764, 0
    %v3188 = vsel %vm3165, %v2765, 0
    %v3189 = vsel %vm3172, %v2766, 0
    %v3191 = vshrl.u32 %v3173, 16
    %v3193 = vrot.slane %v3191, 4
    %v3194 = vshll.u32 %v3173, 16
    %v3196 = vrot.slane %v3194, 5
    %v3197 = vor.u32 %v3193, %v3196
    %v3198 = vrot.slane %v3197, 4
    %v3200 = vshll.u32 %v3174, 16
    %v3202 = vrot.slane %v3200, 5
    %v3203 = vsel %vm516, %v3198, %v3202
    %v3204 = vshrl.u32 %v3174, 16
    %v3206 = vrot.slane %v3204, 4
    %v3207 = vor.u32 %v3206, %v3202
    %v3208 = vrot.slane %v3207, 4
    %v3210 = vshll.u32 %v3175, 16
    %v3212 = vrot.slane %v3210, 5
    %v3213 = vsel %vm516, %v3208, %v3212
    %v3214 = vshrl.u32 %v3175, 16
    %v3216 = vrot.slane %v3214, 4
    %v3217 = vor.u32 %v3216, %v3212
    %v3218 = vrot.slane %v3217, 4
    %v3220 = vshll.u32 %v3176, 16
    %v3222 = vrot.slane %v3220, 5
    %v3223 = vsel %vm516, %v3218, %v3222
    %v3224 = vshrl.u32 %v3176, 16
    %v3226 = vrot.slane %v3224, 4
    %v3227 = vor.u32 %v3226, %v3222
    %v3228 = vrot.slane %v3227, 4
    %v3230 = vshll.u32 %v3177, 16
    %v3232 = vrot.slane %v3230, 5
    %v3233 = vsel %vm516, %v3228, %v3232
    %v3234 = vshrl.u32 %v3177, 16
    %v3236 = vrot.slane %v3234, 4
    %v3237 = vor.u32 %v3236, %v3232
    %v3238 = vrot.slane %v3237, 4
    %v3240 = vshll.u32 %v3178, 16
    %v3242 = vrot.slane %v3240, 5
    %v3243 = vsel %vm516, %v3238, %v3242
    %v3244 = vshrl.u32 %v3178, 16
    %v3246 = vrot.slane %v3244, 4
    %v3247 = vor.u32 %v3246, %v3242
    %v3248 = vrot.slane %v3247, 4
    %v3250 = vshll.u32 %v3179, 16
    %v3252 = vrot.slane %v3250, 5
    %v3253 = vsel %vm516, %v3248, %v3252
    %v3254 = vshrl.u32 %v3179, 16
    %v3256 = vrot.slane %v3254, 4
    %v3257 = vor.u32 %v3256, %v3252
    %v3258 = vrot.slane %v3257, 4
    %v3260 = vshll.u32 %v3180, 16
    %v3262 = vrot.slane %v3260, 5
    %v3263 = vsel %vm516, %v3258, %v3262
    %v3264 = vshrl.u32 %v3180, 16
    %v3266 = vrot.slane %v3264, 4
    %v3267 = vor.u32 %v3266, %v3262
    %v3268 = vrot.slane %v3267, 4
    %v3270 = vshll.u32 %v3181, 16
    %v3272 = vrot.slane %v3270, 5
    %v3273 = vsel %vm516, %v3268, %v3272
    %v3274 = vshrl.u32 %v3181, 16
    %v3276 = vrot.slane %v3274, 4
    %v3277 = vor.u32 %v3276, %v3272
    %v3278 = vrot.slane %v3277, 4
    %v3280 = vshll.u32 %v3182, 16
    %v3282 = vrot.slane %v3280, 5
    %v3283 = vsel %vm516, %v3278, %v3282
    %v3284 = vshrl.u32 %v3182, 16
    %v3286 = vrot.slane %v3284, 4
    %v3287 = vor.u32 %v3286, %v3282
    %v3288 = vrot.slane %v3287, 4
    %v3290 = vshll.u32 %v3183, 16
    %v3292 = vrot.slane %v3290, 5
    %v3293 = vsel %vm516, %v3288, %v3292
    %v3294 = vshrl.u32 %v3183, 16
    %v3296 = vrot.slane %v3294, 4
    %v3297 = vor.u32 %v3296, %v3292
    %v3298 = vrot.slane %v3297, 4
    %v3300 = vshll.u32 %v3184, 16
    %v3302 = vrot.slane %v3300, 5
    %v3303 = vsel %vm516, %v3298, %v3302
    %v3304 = vshrl.u32 %v3184, 16
    %v3306 = vrot.slane %v3304, 4
    %v3307 = vor.u32 %v3306, %v3302
    %v3308 = vrot.slane %v3307, 4
    %v3310 = vshll.u32 %v3185, 16
    %v3312 = vrot.slane %v3310, 5
    %v3313 = vsel %vm516, %v3308, %v3312
    %v3314 = vshrl.u32 %v3185, 16
    %v3316 = vrot.slane %v3314, 4
    %v3317 = vor.u32 %v3316, %v3312
    %v3318 = vrot.slane %v3317, 4
    %v3320 = vshll.u32 %v3186, 16
    %v3322 = vrot.slane %v3320, 5
    %v3323 = vsel %vm516, %v3318, %v3322
    %v3324 = vshrl.u32 %v3186, 16
    %v3326 = vrot.slane %v3324, 4
    %v3327 = vor.u32 %v3326, %v3322
    %v3328 = vrot.slane %v3327, 4
    %v3330 = vshll.u32 %v3187, 16
    %v3332 = vrot.slane %v3330, 5
    %v3333 = vsel %vm516, %v3328, %v3332
    %v3334 = vshrl.u32 %v3187, 16
    %v3336 = vrot.slane %v3334, 4
    %v3337 = vor.u32 %v3336, %v3332
    %v3338 = vrot.slane %v3337, 4
    %v3340 = vshll.u32 %v3188, 16
    %v3342 = vrot.slane %v3340, 5
    %v3343 = vsel %vm516, %v3338, %v3342
    %v3344 = vshrl.u32 %v3188, 16
    %v3346 = vrot.slane %v3344, 4
    %v3347 = vor.u32 %v3346, %v3342
    %v3348 = vrot.slane %v3347, 4
    %v3350 = vshll.u32 %v3189, 16
    %v3352 = vrot.slane %v3350, 5
    %v3353 = vsel %vm516, %v3348, %v3352
    %3354 = vrot.lane.b32.xlu0 %v3203, 32
    %v3355 = vpop.permute.xlu0 %3354
    %3356 = vrot.lane.b32.xlu0 %v3213, 32
    %v3357 = vpop.permute.xlu0 %3356
    %3358 = vrot.lane.b32.xlu0 %v3223, 32
    %v3359 = vpop.permute.xlu0 %3358
    %3360 = vrot.lane.b32.xlu0 %v3233, 32
    %v3361 = vpop.permute.xlu0 %3360
    %3362 = vrot.lane.b32.xlu0 %v3243, 32
    %v3363 = vpop.permute.xlu0 %3362
    %3364 = vrot.lane.b32.xlu0 %v3253, 32
    %v3365 = vpop.permute.xlu0 %3364
    %3366 = vrot.lane.b32.xlu0 %v3263, 32
    %v3367 = vpop.permute.xlu0 %3366
    %3368 = vrot.lane.b32.xlu0 %v3273, 32
    %v3369 = vpop.permute.xlu0 %3368
    %3370 = vrot.lane.b32.xlu0 %v3283, 32
    %v3371 = vpop.permute.xlu0 %3370
    %3372 = vrot.lane.b32.xlu0 %v3293, 32
    %v3373 = vpop.permute.xlu0 %3372
    %3374 = vrot.lane.b32.xlu0 %v3303, 32
    %v3375 = vpop.permute.xlu0 %3374
    %3376 = vrot.lane.b32.xlu0 %v3313, 32
    %v3377 = vpop.permute.xlu0 %3376
    %3378 = vrot.lane.b32.xlu0 %v3323, 32
    %v3379 = vpop.permute.xlu0 %3378
    %3380 = vrot.lane.b32.xlu0 %v3333, 32
    %v3381 = vpop.permute.xlu0 %3380
    %3382 = vrot.lane.b32.xlu0 %v3343, 32
    %v3383 = vpop.permute.xlu0 %3382
    %3384 = vrot.lane.b32.xlu0 %v3353, 32
    %v3385 = vpop.permute.xlu0 %3384
    %3402 = vst.msk [vmem:[#allocation3 + $0x4] sm:$0xf] %vm1219, %v3355
    %3403 = vst.msk [vmem:[#allocation3 + $0x10] sm:$0xf] %vm1219, %v3357
    %3404 = vst.msk [vmem:[#allocation3 + $0x1c] sm:$0xf] %vm1219, %v3359
    %3405 = vst.msk [vmem:[#allocation3 + $0x28] sm:$0xf] %vm1219, %v3361
    %3406 = vst.msk [vmem:[#allocation3 + $0x34] sm:$0xf] %vm1219, %v3363
    %3407 = vst.msk [vmem:[#allocation3 + $0x40] sm:$0xf] %vm1219, %v3365
    %3408 = vst.msk [vmem:[#allocation3 + $0x4c] sm:$0xf] %vm1219, %v3367
    %3409 = vst.msk [vmem:[#allocation3 + $0x58] sm:$0xf] %vm1219, %v3369
    %3410 = vst.msk [vmem:[#allocation3 + $0x64] sm:$0xf] %vm1219, %v3371
    %3411 = vst.msk [vmem:[#allocation3 + $0x70] sm:$0xf] %vm1219, %v3373
    %3412 = vst.msk [vmem:[#allocation3 + $0x7c] sm:$0xf] %vm1219, %v3375
    %3413 = vst.msk [vmem:[#allocation3 + $0x88] sm:$0xf] %vm1219, %v3377
    %3414 = vst.msk [vmem:[#allocation3 + $0x94] sm:$0xf] %vm1219, %v3379
    %3415 = vst.msk [vmem:[#allocation3 + $0xa0] sm:$0xf] %vm1219, %v3381
    %3416 = vst.msk [vmem:[#allocation3 + $0xac] sm:$0xf] %vm1219, %v3383
    %3417 = vst.msk [vmem:[#allocation3 + $0xb8] sm:$0xf] %vm1219, %v3385
    %v3418 = vld [vmem:[#allocation2 + $0x8] sm:$0x8]
    %v3419 = vld [vmem:[#allocation2 + $0xc] sm:$0xf]
    %v3420 = vld [vmem:[#allocation2 + $0x10] sm:$0xf]
    %v3421 = vld [vmem:[#allocation2 + $0x14] sm:$0xf]
    %v3422 = vld [vmem:[#allocation2 + $0x18] sm:$0xf]
    %v3423 = vld [vmem:[#allocation2 + $0x1c] sm:$0xf]
    %v3424 = vld [vmem:[#allocation2 + $0x20] sm:$0xf]
    %v3425 = vld [vmem:[#allocation2 + $0x24] sm:$0xf]
    %v3426 = vld [vmem:[#allocation2 + $0x28] sm:$0xf]
    %v3427 = vld [vmem:[#allocation2 + $0x2c] sm:$0xf]
    %v3428 = vld [vmem:[#allocation2 + $0x30] sm:$0xf]
    %v3429 = vld [vmem:[#allocation2 + $0x34] sm:$0xf]
    %v3430 = vld [vmem:[#allocation2 + $0x38] sm:$0xf]
    %v3431 = vld [vmem:[#allocation2 + $0x3c] sm:$0xf]
    %v3432 = vld [vmem:[#allocation2 + $0x40] sm:$0xf]
    %v3433 = vld [vmem:[#allocation2 + $0x44] sm:$0xf]
    %v3434 = vld [vmem:[#allocation2 + $0x48] sm:$0xf]
    %v3435 = vld [vmem:[%s1] sm:$0xff]
    %v3436 = vld [vmem:[%s1 + $0x8] sm:$0xff]
    %v3437 = vld [vmem:[%s1 + $0x10] sm:$0xff]
    %v3438 = vld [vmem:[%s1 + $0x18] sm:$0xff]
    %v3439 = vld [vmem:[%s1 + $0x20] sm:$0xff]
    %v3440 = vld [vmem:[%s1 + $0x28] sm:$0xff]
    %v3441 = vld [vmem:[%s1 + $0x30] sm:$0xff]
    %v3442 = vld [vmem:[%s1 + $0x38] sm:$0xff]
    %v3443 = vld [vmem:[%s1 + $0x40] sm:$0xff]
    %v3444 = vld [vmem:[%s1 + $0x48] sm:$0xff]
    %v3445 = vld [vmem:[%s1 + $0x50] sm:$0xff]
    %v3446 = vld [vmem:[%s1 + $0x58] sm:$0xff]
    %v3447 = vld [vmem:[%s1 + $0x60] sm:$0xff]
    %v3448 = vld [vmem:[%s1 + $0x68] sm:$0xff]
    %v3449 = vld [vmem:[%s1 + $0x70] sm:$0xff]
    %v3450 = vld [vmem:[%s1 + $0x78] sm:$0xff]
    %vm3451 = vcmp.gt.f32.partialorder %v3435, 0.0
    %vm3452 = vcmp.gt.f32.partialorder %v3436, 0.0
    %vm3453 = vcmp.gt.f32.partialorder %v3437, 0.0
    %vm3454 = vcmp.gt.f32.partialorder %v3438, 0.0
    %vm3455 = vcmp.gt.f32.partialorder %v3439, 0.0
    %vm3456 = vcmp.gt.f32.partialorder %v3440, 0.0
    %vm3457 = vcmp.gt.f32.partialorder %v3441, 0.0
    %vm3458 = vcmp.gt.f32.partialorder %v3442, 0.0
    %vm3459 = vcmp.gt.f32.partialorder %v3443, 0.0
    %vm3460 = vcmp.gt.f32.partialorder %v3444, 0.0
    %vm3461 = vcmp.gt.f32.partialorder %v3445, 0.0
    %vm3462 = vcmp.gt.f32.partialorder %v3446, 0.0
    %vm3463 = vcmp.gt.f32.partialorder %v3447, 0.0
    %vm3464 = vcmp.gt.f32.partialorder %v3448, 0.0
    %vm3465 = vcmp.gt.f32.partialorder %v3449, 0.0
    %vm3466 = vcmp.gt.f32.partialorder %v3450, 0.0
    %v3467 = vsel %vm3451, 1, 0
    %v3468 = vsel %vm3452, 1, 0
    %v3469 = vsel %vm3453, 1, 0
    %v3470 = vsel %vm3454, 1, 0
    %v3471 = vsel %vm3455, 1, 0
    %v3472 = vsel %vm3456, 1, 0
    %v3473 = vsel %vm3457, 1, 0
    %v3474 = vsel %vm3458, 1, 0
    %v3475 = vsel %vm3459, 1, 0
    %v3476 = vsel %vm3460, 1, 0
    %v3477 = vsel %vm3461, 1, 0
    %v3478 = vsel %vm3462, 1, 0
    %v3479 = vsel %vm3463, 1, 0
    %v3480 = vsel %vm3464, 1, 0
    %v3481 = vsel %vm3465, 1, 0
    %v3482 = vsel %vm3466, 1, 0
    %3483 = vset.pattern.permute.xlu0 6
    %3484 = vperm.xlu0 %3483, %v3467
    %v3485 = vpop.permute.xlu0 %3484
    %3486 = vset.pattern.permute.xlu0 6
    %3487 = vperm.xlu0 %3486, %v3468
    %v3488 = vpop.permute.xlu0 %3487
    %3489 = vset.pattern.permute.xlu0 6
    %3490 = vperm.xlu0 %3489, %v3469
    %v3491 = vpop.permute.xlu0 %3490
    %3492 = vset.pattern.permute.xlu0 6
    %3493 = vperm.xlu0 %3492, %v3470
    %v3494 = vpop.permute.xlu0 %3493
    %3495 = vset.pattern.permute.xlu0 6
    %3496 = vperm.xlu0 %3495, %v3471
    %v3497 = vpop.permute.xlu0 %3496
    %3498 = vset.pattern.permute.xlu0 6
    %3499 = vperm.xlu0 %3498, %v3472
    %v3500 = vpop.permute.xlu0 %3499
    %3501 = vset.pattern.permute.xlu0 6
    %3502 = vperm.xlu0 %3501, %v3473
    %v3503 = vpop.permute.xlu0 %3502
    %3504 = vset.pattern.permute.xlu0 6
    %3505 = vperm.xlu0 %3504, %v3474
    %v3506 = vpop.permute.xlu0 %3505
    %3507 = vset.pattern.permute.xlu0 6
    %3508 = vperm.xlu0 %3507, %v3475
    %v3509 = vpop.permute.xlu0 %3508
    %3510 = vset.pattern.permute.xlu0 6
    %3511 = vperm.xlu0 %3510, %v3476
    %v3512 = vpop.permute.xlu0 %3511
    %3513 = vset.pattern.permute.xlu0 6
    %3514 = vperm.xlu0 %3513, %v3477
    %v3515 = vpop.permute.xlu0 %3514
    %3516 = vset.pattern.permute.xlu0 6
    %3517 = vperm.xlu0 %3516, %v3478
    %v3518 = vpop.permute.xlu0 %3517
    %3519 = vset.pattern.permute.xlu0 6
    %3520 = vperm.xlu0 %3519, %v3479
    %v3521 = vpop.permute.xlu0 %3520
    %3522 = vset.pattern.permute.xlu0 6
    %3523 = vperm.xlu0 %3522, %v3480
    %v3524 = vpop.permute.xlu0 %3523
    %3525 = vset.pattern.permute.xlu0 6
    %3526 = vperm.xlu0 %3525, %v3481
    %v3527 = vpop.permute.xlu0 %3526
    %3528 = vset.pattern.permute.xlu0 6
    %3529 = vperm.xlu0 %3528, %v3482
    %v3530 = vpop.permute.xlu0 %3529
    %vm3531 = vcmp.eq.s32.totalorder %v3485, 1
    %vm3532 = vcmp.eq.s32.totalorder %v3488, 1
    %vm3533 = vcmp.eq.s32.totalorder %v3491, 1
    %vm3534 = vcmp.eq.s32.totalorder %v3494, 1
    %vm3535 = vcmp.eq.s32.totalorder %v3497, 1
    %vm3536 = vcmp.eq.s32.totalorder %v3500, 1
    %vm3537 = vcmp.eq.s32.totalorder %v3503, 1
    %vm3538 = vcmp.eq.s32.totalorder %v3506, 1
    %vm3539 = vcmp.eq.s32.totalorder %v3509, 1
    %vm3540 = vcmp.eq.s32.totalorder %v3512, 1
    %vm3541 = vcmp.eq.s32.totalorder %v3515, 1
    %vm3542 = vcmp.eq.s32.totalorder %v3518, 1
    %vm3543 = vcmp.eq.s32.totalorder %v3521, 1
    %vm3544 = vcmp.eq.s32.totalorder %v3524, 1
    %vm3545 = vcmp.eq.s32.totalorder %v3527, 1
    %vm3546 = vcmp.eq.s32.totalorder %v3530, 1
    %vm3547 = vmpackc.low %vm3531, %vm3531
    %vm3548 = vmpackc.low %vm3532, %vm3532
    %vm3549 = vmpackc.low %vm3533, %vm3533
    %vm3550 = vmpackc.low %vm3534, %vm3534
    %vm3551 = vmpackc.low %vm3535, %vm3535
    %vm3552 = vmpackc.low %vm3536, %vm3536
    %vm3553 = vmpackc.low %vm3537, %vm3537
    %vm3554 = vmpackc.low %vm3538, %vm3538
    %vm3555 = vmpackc.low %vm3539, %vm3539
    %vm3556 = vmpackc.low %vm3540, %vm3540
    %vm3557 = vmpackc.low %vm3541, %vm3541
    %vm3558 = vmpackc.low %vm3542, %vm3542
    %vm3559 = vmpackc.low %vm3543, %vm3543
    %vm3560 = vmpackc.low %vm3544, %vm3544
    %vm3561 = vmpackc.low %vm3545, %vm3545
    %vm3562 = vmpackc.low %vm3546, %vm3546
    %v3563 = vsel %vm3547, 65537, 0
    %v3564 = vsel %vm3548, 65537, 0
    %v3565 = vsel %vm3549, 65537, 0
    %v3566 = vsel %vm3550, 65537, 0
    %v3567 = vsel %vm3551, 65537, 0
    %v3568 = vsel %vm3552, 65537, 0
    %v3569 = vsel %vm3553, 65537, 0
    %v3570 = vsel %vm3554, 65537, 0
    %v3571 = vsel %vm3555, 65537, 0
    %v3572 = vsel %vm3556, 65537, 0
    %v3573 = vsel %vm3557, 65537, 0
    %v3574 = vsel %vm3558, 65537, 0
    %v3575 = vsel %vm3559, 65537, 0
    %v3576 = vsel %vm3560, 65537, 0
    %v3577 = vsel %vm3561, 65537, 0
    %v3578 = vsel %vm3562, 65537, 0
    %v3580 = vshll.u32 %v3563, 16
    %v3582 = vrot.slane %v3580, 5
    %v3583 = vshrl.u32 %v3563, 16
    %v3585 = vrot.slane %v3583, 4
    %v3586 = vor.u32 %v3585, %v3582
    %v3587 = vrot.slane %v3586, 4
    %v3589 = vshll.u32 %v3564, 16
    %v3591 = vrot.slane %v3589, 5
    %v3592 = vsel %vm516, %v3587, %v3591
    %v3593 = vshrl.u32 %v3564, 16
    %v3595 = vrot.slane %v3593, 4
    %v3596 = vor.u32 %v3595, %v3591
    %v3597 = vrot.slane %v3596, 4
    %v3599 = vshll.u32 %v3565, 16
    %v3601 = vrot.slane %v3599, 5
    %v3602 = vsel %vm516, %v3597, %v3601
    %v3603 = vshrl.u32 %v3565, 16
    %v3605 = vrot.slane %v3603, 4
    %v3606 = vor.u32 %v3605, %v3601
    %v3607 = vrot.slane %v3606, 4
    %v3609 = vshll.u32 %v3566, 16
    %v3611 = vrot.slane %v3609, 5
    %v3612 = vsel %vm516, %v3607, %v3611
    %v3613 = vshrl.u32 %v3566, 16
    %v3615 = vrot.slane %v3613, 4
    %v3616 = vor.u32 %v3615, %v3611
    %v3617 = vrot.slane %v3616, 4
    %v3619 = vshll.u32 %v3567, 16
    %v3621 = vrot.slane %v3619, 5
    %v3622 = vsel %vm516, %v3617, %v3621
    %v3623 = vshrl.u32 %v3567, 16
    %v3625 = vrot.slane %v3623, 4
    %v3626 = vor.u32 %v3625, %v3621
    %v3627 = vrot.slane %v3626, 4
    %v3629 = vshll.u32 %v3568, 16
    %v3631 = vrot.slane %v3629, 5
    %v3632 = vsel %vm516, %v3627, %v3631
    %v3633 = vshrl.u32 %v3568, 16
    %v3635 = vrot.slane %v3633, 4
    %v3636 = vor.u32 %v3635, %v3631
    %v3637 = vrot.slane %v3636, 4
    %v3639 = vshll.u32 %v3569, 16
    %v3641 = vrot.slane %v3639, 5
    %v3642 = vsel %vm516, %v3637, %v3641
    %v3643 = vshrl.u32 %v3569, 16
    %v3645 = vrot.slane %v3643, 4
    %v3646 = vor.u32 %v3645, %v3641
    %v3647 = vrot.slane %v3646, 4
    %v3649 = vshll.u32 %v3570, 16
    %v3651 = vrot.slane %v3649, 5
    %v3652 = vsel %vm516, %v3647, %v3651
    %v3653 = vshrl.u32 %v3570, 16
    %v3655 = vrot.slane %v3653, 4
    %v3656 = vor.u32 %v3655, %v3651
    %v3657 = vrot.slane %v3656, 4
    %v3659 = vshll.u32 %v3571, 16
    %v3661 = vrot.slane %v3659, 5
    %v3662 = vsel %vm516, %v3657, %v3661
    %v3663 = vshrl.u32 %v3571, 16
    %v3665 = vrot.slane %v3663, 4
    %v3666 = vor.u32 %v3665, %v3661
    %v3667 = vrot.slane %v3666, 4
    %v3669 = vshll.u32 %v3572, 16
    %v3671 = vrot.slane %v3669, 5
    %v3672 = vsel %vm516, %v3667, %v3671
    %v3673 = vshrl.u32 %v3572, 16
    %v3675 = vrot.slane %v3673, 4
    %v3676 = vor.u32 %v3675, %v3671
    %v3677 = vrot.slane %v3676, 4
    %v3679 = vshll.u32 %v3573, 16
    %v3681 = vrot.slane %v3679, 5
    %v3682 = vsel %vm516, %v3677, %v3681
    %v3683 = vshrl.u32 %v3573, 16
    %v3685 = vrot.slane %v3683, 4
    %v3686 = vor.u32 %v3685, %v3681
    %v3687 = vrot.slane %v3686, 4
    %v3689 = vshll.u32 %v3574, 16
    %v3691 = vrot.slane %v3689, 5
    %v3692 = vsel %vm516, %v3687, %v3691
    %v3693 = vshrl.u32 %v3574, 16
    %v3695 = vrot.slane %v3693, 4
    %v3696 = vor.u32 %v3695, %v3691
    %v3697 = vrot.slane %v3696, 4
    %v3699 = vshll.u32 %v3575, 16
    %v3701 = vrot.slane %v3699, 5
    %v3702 = vsel %vm516, %v3697, %v3701
    %v3703 = vshrl.u32 %v3575, 16
    %v3705 = vrot.slane %v3703, 4
    %v3706 = vor.u32 %v3705, %v3701
    %v3707 = vrot.slane %v3706, 4
    %v3709 = vshll.u32 %v3576, 16
    %v3711 = vrot.slane %v3709, 5
    %v3712 = vsel %vm516, %v3707, %v3711
    %v3713 = vshrl.u32 %v3576, 16
    %v3715 = vrot.slane %v3713, 4
    %v3716 = vor.u32 %v3715, %v3711
    %v3717 = vrot.slane %v3716, 4
    %v3719 = vshll.u32 %v3577, 16
    %v3721 = vrot.slane %v3719, 5
    %v3722 = vsel %vm516, %v3717, %v3721
    %v3723 = vshrl.u32 %v3577, 16
    %v3725 = vrot.slane %v3723, 4
    %v3726 = vor.u32 %v3725, %v3721
    %v3727 = vrot.slane %v3726, 4
    %v3729 = vshll.u32 %v3578, 16
    %v3731 = vrot.slane %v3729, 5
    %v3732 = vsel %vm516, %v3727, %v3731
    %v3733 = vshrl.u32 %v3578, 16
    %v3735 = vrot.slane %v3733, 4
    %v3736 = vor.u32 %v3735, %v3731
    %v3737 = vrot.slane %v3736, 4
    %v3738 = vunpack.c.l.b16 %v3582
    %v3739 = vunpack.c.h.b16 %v3582
    %v3740 = vunpack.c.l.b16 0
    %v3741 = vunpack.c.h.b16 0
    %vm3742 = vcmp.ne.s32.totalorder %v3738, %v3740
    %vm3743 = vcmp.ne.s32.totalorder %v3739, %v3741
    %vm3744 = vmpackc.low %vm3743, %vm3742
    %v3745 = vunpack.c.l.b16 %v3592
    %v3746 = vunpack.c.h.b16 %v3592
    %v3747 = vunpack.c.l.b16 0
    %v3748 = vunpack.c.h.b16 0
    %vm3749 = vcmp.ne.s32.totalorder %v3745, %v3747
    %vm3750 = vcmp.ne.s32.totalorder %v3746, %v3748
    %vm3751 = vmpackc.low %vm3750, %vm3749
    %v3752 = vunpack.c.l.b16 %v3602
    %v3753 = vunpack.c.h.b16 %v3602
    %v3754 = vunpack.c.l.b16 0
    %v3755 = vunpack.c.h.b16 0
    %vm3756 = vcmp.ne.s32.totalorder %v3752, %v3754
    %vm3757 = vcmp.ne.s32.totalorder %v3753, %v3755
    %vm3758 = vmpackc.low %vm3757, %vm3756
    %v3759 = vunpack.c.l.b16 %v3612
    %v3760 = vunpack.c.h.b16 %v3612
    %v3761 = vunpack.c.l.b16 0
    %v3762 = vunpack.c.h.b16 0
    %vm3763 = vcmp.ne.s32.totalorder %v3759, %v3761
    %vm3764 = vcmp.ne.s32.totalorder %v3760, %v3762
    %vm3765 = vmpackc.low %vm3764, %vm3763
    %v3766 = vunpack.c.l.b16 %v3622
    %v3767 = vunpack.c.h.b16 %v3622
    %v3768 = vunpack.c.l.b16 0
    %v3769 = vunpack.c.h.b16 0
    %vm3770 = vcmp.ne.s32.totalorder %v3766, %v3768
    %vm3771 = vcmp.ne.s32.totalorder %v3767, %v3769
    %vm3772 = vmpackc.low %vm3771, %vm3770
    %v3773 = vunpack.c.l.b16 %v3632
    %v3774 = vunpack.c.h.b16 %v3632
    %v3775 = vunpack.c.l.b16 0
    %v3776 = vunpack.c.h.b16 0
    %vm3777 = vcmp.ne.s32.totalorder %v3773, %v3775
    %vm3778 = vcmp.ne.s32.totalorder %v3774, %v3776
    %vm3779 = vmpackc.low %vm3778, %vm3777
    %v3780 = vunpack.c.l.b16 %v3642
    %v3781 = vunpack.c.h.b16 %v3642
    %v3782 = vunpack.c.l.b16 0
    %v3783 = vunpack.c.h.b16 0
    %vm3784 = vcmp.ne.s32.totalorder %v3780, %v3782
    %vm3785 = vcmp.ne.s32.totalorder %v3781, %v3783
    %vm3786 = vmpackc.low %vm3785, %vm3784
    %v3787 = vunpack.c.l.b16 %v3652
    %v3788 = vunpack.c.h.b16 %v3652
    %v3789 = vunpack.c.l.b16 0
    %v3790 = vunpack.c.h.b16 0
    %vm3791 = vcmp.ne.s32.totalorder %v3787, %v3789
    %vm3792 = vcmp.ne.s32.totalorder %v3788, %v3790
    %vm3793 = vmpackc.low %vm3792, %vm3791
    %v3794 = vunpack.c.l.b16 %v3662
    %v3795 = vunpack.c.h.b16 %v3662
    %v3796 = vunpack.c.l.b16 0
    %v3797 = vunpack.c.h.b16 0
    %vm3798 = vcmp.ne.s32.totalorder %v3794, %v3796
    %vm3799 = vcmp.ne.s32.totalorder %v3795, %v3797
    %vm3800 = vmpackc.low %vm3799, %vm3798
    %v3801 = vunpack.c.l.b16 %v3672
    %v3802 = vunpack.c.h.b16 %v3672
    %v3803 = vunpack.c.l.b16 0
    %v3804 = vunpack.c.h.b16 0
    %vm3805 = vcmp.ne.s32.totalorder %v3801, %v3803
    %vm3806 = vcmp.ne.s32.totalorder %v3802, %v3804
    %vm3807 = vmpackc.low %vm3806, %vm3805
    %v3808 = vunpack.c.l.b16 %v3682
    %v3809 = vunpack.c.h.b16 %v3682
    %v3810 = vunpack.c.l.b16 0
    %v3811 = vunpack.c.h.b16 0
    %vm3812 = vcmp.ne.s32.totalorder %v3808, %v3810
    %vm3813 = vcmp.ne.s32.totalorder %v3809, %v3811
    %vm3814 = vmpackc.low %vm3813, %vm3812
    %v3815 = vunpack.c.l.b16 %v3692
    %v3816 = vunpack.c.h.b16 %v3692
    %v3817 = vunpack.c.l.b16 0
    %v3818 = vunpack.c.h.b16 0
    %vm3819 = vcmp.ne.s32.totalorder %v3815, %v3817
    %vm3820 = vcmp.ne.s32.totalorder %v3816, %v3818
    %vm3821 = vmpackc.low %vm3820, %vm3819
    %v3822 = vunpack.c.l.b16 %v3702
    %v3823 = vunpack.c.h.b16 %v3702
    %v3824 = vunpack.c.l.b16 0
    %v3825 = vunpack.c.h.b16 0
    %vm3826 = vcmp.ne.s32.totalorder %v3822, %v3824
    %vm3827 = vcmp.ne.s32.totalorder %v3823, %v3825
    %vm3828 = vmpackc.low %vm3827, %vm3826
    %v3829 = vunpack.c.l.b16 %v3712
    %v3830 = vunpack.c.h.b16 %v3712
    %v3831 = vunpack.c.l.b16 0
    %v3832 = vunpack.c.h.b16 0
    %vm3833 = vcmp.ne.s32.totalorder %v3829, %v3831
    %vm3834 = vcmp.ne.s32.totalorder %v3830, %v3832
    %vm3835 = vmpackc.low %vm3834, %vm3833
    %v3836 = vunpack.c.l.b16 %v3722
    %v3837 = vunpack.c.h.b16 %v3722
    %v3838 = vunpack.c.l.b16 0
    %v3839 = vunpack.c.h.b16 0
    %vm3840 = vcmp.ne.s32.totalorder %v3836, %v3838
    %vm3841 = vcmp.ne.s32.totalorder %v3837, %v3839
    %vm3842 = vmpackc.low %vm3841, %vm3840
    %v3843 = vunpack.c.l.b16 %v3732
    %v3844 = vunpack.c.h.b16 %v3732
    %v3845 = vunpack.c.l.b16 0
    %v3846 = vunpack.c.h.b16 0
    %vm3847 = vcmp.ne.s32.totalorder %v3843, %v3845
    %vm3848 = vcmp.ne.s32.totalorder %v3844, %v3846
    %vm3849 = vmpackc.low %vm3848, %vm3847
    %v3850 = vunpack.c.l.b16 %v3737
    %v3851 = vunpack.c.h.b16 %v3737
    %v3852 = vunpack.c.l.b16 0
    %v3853 = vunpack.c.h.b16 0
    %vm3854 = vcmp.ne.s32.totalorder %v3850, %v3852
    %vm3855 = vcmp.ne.s32.totalorder %v3851, %v3853
    %vm3856 = vmpackc.low %vm3855, %vm3854
    %v3857 = vsel %vm3744, %v3418, 0
    %v3858 = vsel %vm3751, %v3419, 0
    %v3859 = vsel %vm3758, %v3420, 0
    %v3860 = vsel %vm3765, %v3421, 0
    %v3861 = vsel %vm3772, %v3422, 0
    %v3862 = vsel %vm3779, %v3423, 0
    %v3863 = vsel %vm3786, %v3424, 0
    %v3864 = vsel %vm3793, %v3425, 0
    %v3865 = vsel %vm3800, %v3426, 0
    %v3866 = vsel %vm3807, %v3427, 0
    %v3867 = vsel %vm3814, %v3428, 0
    %v3868 = vsel %vm3821, %v3429, 0
    %v3869 = vsel %vm3828, %v3430, 0
    %v3870 = vsel %vm3835, %v3431, 0
    %v3871 = vsel %vm3842, %v3432, 0
    %v3872 = vsel %vm3849, %v3433, 0
    %v3873 = vsel %vm3856, %v3434, 0
    %v3875 = vshrl.u32 %v3857, 16
    %v3877 = vrot.slane %v3875, 7
    %v3878 = vrot.slane %v3877, 4
    %v3880 = vshrl.u32 %v3858, 16
    %v3882 = vrot.slane %v3880, 7
    %v3883 = vshll.u32 %v3858, 16
    %v3885 = vor.u32 %v3882, %v3883
    %v3886 = vsel %vm814, %v3878, %v3885
    %v3887 = vrot.slane %v3882, 4
    %v3889 = vshrl.u32 %v3859, 16
    %v3891 = vrot.slane %v3889, 7
    %v3892 = vshll.u32 %v3859, 16
    %v3894 = vor.u32 %v3891, %v3892
    %v3895 = vsel %vm814, %v3887, %v3894
    %v3896 = vrot.slane %v3891, 4
    %v3898 = vshrl.u32 %v3860, 16
    %v3900 = vrot.slane %v3898, 7
    %v3901 = vshll.u32 %v3860, 16
    %v3903 = vor.u32 %v3900, %v3901
    %v3904 = vsel %vm814, %v3896, %v3903
    %v3905 = vrot.slane %v3900, 4
    %v3907 = vshrl.u32 %v3861, 16
    %v3909 = vrot.slane %v3907, 7
    %v3910 = vshll.u32 %v3861, 16
    %v3912 = vor.u32 %v3909, %v3910
    %v3913 = vsel %vm814, %v3905, %v3912
    %v3914 = vrot.slane %v3909, 4
    %v3916 = vshrl.u32 %v3862, 16
    %v3918 = vrot.slane %v3916, 7
    %v3919 = vshll.u32 %v3862, 16
    %v3921 = vor.u32 %v3918, %v3919
    %v3922 = vsel %vm814, %v3914, %v3921
    %v3923 = vrot.slane %v3918, 4
    %v3925 = vshrl.u32 %v3863, 16
    %v3927 = vrot.slane %v3925, 7
    %v3928 = vshll.u32 %v3863, 16
    %v3930 = vor.u32 %v3927, %v3928
    %v3931 = vsel %vm814, %v3923, %v3930
    %v3932 = vrot.slane %v3927, 4
    %v3934 = vshrl.u32 %v3864, 16
    %v3936 = vrot.slane %v3934, 7
    %v3937 = vshll.u32 %v3864, 16
    %v3939 = vor.u32 %v3936, %v3937
    %v3940 = vsel %vm814, %v3932, %v3939
    %v3941 = vrot.slane %v3936, 4
    %v3943 = vshrl.u32 %v3865, 16
    %v3945 = vrot.slane %v3943, 7
    %v3946 = vshll.u32 %v3865, 16
    %v3948 = vor.u32 %v3945, %v3946
    %v3949 = vsel %vm814, %v3941, %v3948
    %v3950 = vrot.slane %v3945, 4
    %v3952 = vshrl.u32 %v3866, 16
    %v3954 = vrot.slane %v3952, 7
    %v3955 = vshll.u32 %v3866, 16
    %v3957 = vor.u32 %v3954, %v3955
    %v3958 = vsel %vm814, %v3950, %v3957
    %v3959 = vrot.slane %v3954, 4
    %v3961 = vshrl.u32 %v3867, 16
    %v3963 = vrot.slane %v3961, 7
    %v3964 = vshll.u32 %v3867, 16
    %v3966 = vor.u32 %v3963, %v3964
    %v3967 = vsel %vm814, %v3959, %v3966
    %v3968 = vrot.slane %v3963, 4
    %v3970 = vshrl.u32 %v3868, 16
    %v3972 = vrot.slane %v3970, 7
    %v3973 = vshll.u32 %v3868, 16
    %v3975 = vor.u32 %v3972, %v3973
    %v3976 = vsel %vm814, %v3968, %v3975
    %v3977 = vrot.slane %v3972, 4
    %v3979 = vshrl.u32 %v3869, 16
    %v3981 = vrot.slane %v3979, 7
    %v3982 = vshll.u32 %v3869, 16
    %v3984 = vor.u32 %v3981, %v3982
    %v3985 = vsel %vm814, %v3977, %v3984
    %v3986 = vrot.slane %v3981, 4
    %v3988 = vshrl.u32 %v3870, 16
    %v3990 = vrot.slane %v3988, 7
    %v3991 = vshll.u32 %v3870, 16
    %v3993 = vor.u32 %v3990, %v3991
    %v3994 = vsel %vm814, %v3986, %v3993
    %v3995 = vrot.slane %v3990, 4
    %v3997 = vshrl.u32 %v3871, 16
    %v3999 = vrot.slane %v3997, 7
    %v4000 = vshll.u32 %v3871, 16
    %v4002 = vor.u32 %v3999, %v4000
    %v4003 = vsel %vm814, %v3995, %v4002
    %v4004 = vrot.slane %v3999, 4
    %v4006 = vshrl.u32 %v3872, 16
    %v4008 = vrot.slane %v4006, 7
    %v4009 = vshll.u32 %v3872, 16
    %v4011 = vor.u32 %v4008, %v4009
    %v4012 = vsel %vm814, %v4004, %v4011
    %v4013 = vrot.slane %v4008, 4
    %v4015 = vshrl.u32 %v3873, 16
    %v4017 = vrot.slane %v4015, 7
    %v4018 = vshll.u32 %v3873, 16
    %v4020 = vor.u32 %v4017, %v4018
    %v4021 = vsel %vm814, %v4013, %v4020
    %4022 = vrot.lane.b32.xlu0 %v3886, 64
    %v4023 = vpop.permute.xlu0 %4022
    %4024 = vrot.lane.b32.xlu0 %v3895, 64
    %v4025 = vpop.permute.xlu0 %4024
    %4026 = vrot.lane.b32.xlu0 %v3904, 64
    %v4027 = vpop.permute.xlu0 %4026
    %4028 = vrot.lane.b32.xlu0 %v3913, 64
    %v4029 = vpop.permute.xlu0 %4028
    %4030 = vrot.lane.b32.xlu0 %v3922, 64
    %v4031 = vpop.permute.xlu0 %4030
    %4032 = vrot.lane.b32.xlu0 %v3931, 64
    %v4033 = vpop.permute.xlu0 %4032
    %4034 = vrot.lane.b32.xlu0 %v3940, 64
    %v4035 = vpop.permute.xlu0 %4034
    %4036 = vrot.lane.b32.xlu0 %v3949, 64
    %v4037 = vpop.permute.xlu0 %4036
    %4038 = vrot.lane.b32.xlu0 %v3958, 64
    %v4039 = vpop.permute.xlu0 %4038
    %4040 = vrot.lane.b32.xlu0 %v3967, 64
    %v4041 = vpop.permute.xlu0 %4040
    %4042 = vrot.lane.b32.xlu0 %v3976, 64
    %v4043 = vpop.permute.xlu0 %4042
    %4044 = vrot.lane.b32.xlu0 %v3985, 64
    %v4045 = vpop.permute.xlu0 %4044
    %4046 = vrot.lane.b32.xlu0 %v3994, 64
    %v4047 = vpop.permute.xlu0 %4046
    %4048 = vrot.lane.b32.xlu0 %v4003, 64
    %v4049 = vpop.permute.xlu0 %4048
    %4050 = vrot.lane.b32.xlu0 %v4012, 64
    %v4051 = vpop.permute.xlu0 %4050
    %4052 = vrot.lane.b32.xlu0 %v4021, 64
    %v4053 = vpop.permute.xlu0 %4052
    %4070 = vst.msk [vmem:[#allocation3 + $0x4] sm:$0xf] %vm1888, %v4023
    %4071 = vst.msk [vmem:[#allocation3 + $0x10] sm:$0xf] %vm1888, %v4025
    %4072 = vst.msk [vmem:[#allocation3 + $0x1c] sm:$0xf] %vm1888, %v4027
    %4073 = vst.msk [vmem:[#allocation3 + $0x28] sm:$0xf] %vm1888, %v4029
    %4074 = vst.msk [vmem:[#allocation3 + $0x34] sm:$0xf] %vm1888, %v4031
    %4075 = vst.msk [vmem:[#allocation3 + $0x40] sm:$0xf] %vm1888, %v4033
    %4076 = vst.msk [vmem:[#allocation3 + $0x4c] sm:$0xf] %vm1888, %v4035
    %4077 = vst.msk [vmem:[#allocation3 + $0x58] sm:$0xf] %vm1888, %v4037
    %4078 = vst.msk [vmem:[#allocation3 + $0x64] sm:$0xf] %vm1888, %v4039
    %4079 = vst.msk [vmem:[#allocation3 + $0x70] sm:$0xf] %vm1888, %v4041
    %4080 = vst.msk [vmem:[#allocation3 + $0x7c] sm:$0xf] %vm1888, %v4043
    %4081 = vst.msk [vmem:[#allocation3 + $0x88] sm:$0xf] %vm1888, %v4045
    %4082 = vst.msk [vmem:[#allocation3 + $0x94] sm:$0xf] %vm1888, %v4047
    %4083 = vst.msk [vmem:[#allocation3 + $0xa0] sm:$0xf] %vm1888, %v4049
    %4084 = vst.msk [vmem:[#allocation3 + $0xac] sm:$0xf] %vm1888, %v4051
    %4085 = vst.msk [vmem:[#allocation3 + $0xb8] sm:$0xf] %vm1888, %v4053
    %v4086 = vld [vmem:[#allocation2 + $0xc] sm:$0xf]
    %v4087 = vld [vmem:[#allocation2 + $0x10] sm:$0xf]
    %v4088 = vld [vmem:[#allocation2 + $0x14] sm:$0xf]
    %v4089 = vld [vmem:[#allocation2 + $0x18] sm:$0xf]
    %v4090 = vld [vmem:[#allocation2 + $0x1c] sm:$0xf]
    %v4091 = vld [vmem:[#allocation2 + $0x20] sm:$0xf]
    %v4092 = vld [vmem:[#allocation2 + $0x24] sm:$0xf]
    %v4093 = vld [vmem:[#allocation2 + $0x28] sm:$0xf]
    %v4094 = vld [vmem:[#allocation2 + $0x2c] sm:$0xf]
    %v4095 = vld [vmem:[#allocation2 + $0x30] sm:$0xf]
    %v4096 = vld [vmem:[#allocation2 + $0x34] sm:$0xf]
    %v4097 = vld [vmem:[#allocation2 + $0x38] sm:$0xf]
    %v4098 = vld [vmem:[#allocation2 + $0x3c] sm:$0xf]
    %v4099 = vld [vmem:[#allocation2 + $0x40] sm:$0xf]
    %v4100 = vld [vmem:[#allocation2 + $0x44] sm:$0xf]
    %v4101 = vld [vmem:[#allocation2 + $0x48] sm:$0xf]
    %v4102 = vld [vmem:[%s1] sm:$0xff]
    %v4103 = vld [vmem:[%s1 + $0x8] sm:$0xff]
    %v4104 = vld [vmem:[%s1 + $0x10] sm:$0xff]
    %v4105 = vld [vmem:[%s1 + $0x18] sm:$0xff]
    %v4106 = vld [vmem:[%s1 + $0x20] sm:$0xff]
    %v4107 = vld [vmem:[%s1 + $0x28] sm:$0xff]
    %v4108 = vld [vmem:[%s1 + $0x30] sm:$0xff]
    %v4109 = vld [vmem:[%s1 + $0x38] sm:$0xff]
    %v4110 = vld [vmem:[%s1 + $0x40] sm:$0xff]
    %v4111 = vld [vmem:[%s1 + $0x48] sm:$0xff]
    %v4112 = vld [vmem:[%s1 + $0x50] sm:$0xff]
    %v4113 = vld [vmem:[%s1 + $0x58] sm:$0xff]
    %v4114 = vld [vmem:[%s1 + $0x60] sm:$0xff]
    %v4115 = vld [vmem:[%s1 + $0x68] sm:$0xff]
    %v4116 = vld [vmem:[%s1 + $0x70] sm:$0xff]
    %v4117 = vld [vmem:[%s1 + $0x78] sm:$0xff]
    %vm4118 = vcmp.gt.f32.partialorder %v4102, 0.0
    %vm4119 = vcmp.gt.f32.partialorder %v4103, 0.0
    %vm4120 = vcmp.gt.f32.partialorder %v4104, 0.0
    %vm4121 = vcmp.gt.f32.partialorder %v4105, 0.0
    %vm4122 = vcmp.gt.f32.partialorder %v4106, 0.0
    %vm4123 = vcmp.gt.f32.partialorder %v4107, 0.0
    %vm4124 = vcmp.gt.f32.partialorder %v4108, 0.0
    %vm4125 = vcmp.gt.f32.partialorder %v4109, 0.0
    %vm4126 = vcmp.gt.f32.partialorder %v4110, 0.0
    %vm4127 = vcmp.gt.f32.partialorder %v4111, 0.0
    %vm4128 = vcmp.gt.f32.partialorder %v4112, 0.0
    %vm4129 = vcmp.gt.f32.partialorder %v4113, 0.0
    %vm4130 = vcmp.gt.f32.partialorder %v4114, 0.0
    %vm4131 = vcmp.gt.f32.partialorder %v4115, 0.0
    %vm4132 = vcmp.gt.f32.partialorder %v4116, 0.0
    %vm4133 = vcmp.gt.f32.partialorder %v4117, 0.0
    %v4134 = vsel %vm4118, 1, 0
    %v4135 = vsel %vm4119, 1, 0
    %v4136 = vsel %vm4120, 1, 0
    %v4137 = vsel %vm4121, 1, 0
    %v4138 = vsel %vm4122, 1, 0
    %v4139 = vsel %vm4123, 1, 0
    %v4140 = vsel %vm4124, 1, 0
    %v4141 = vsel %vm4125, 1, 0
    %v4142 = vsel %vm4126, 1, 0
    %v4143 = vsel %vm4127, 1, 0
    %v4144 = vsel %vm4128, 1, 0
    %v4145 = vsel %vm4129, 1, 0
    %v4146 = vsel %vm4130, 1, 0
    %v4147 = vsel %vm4131, 1, 0
    %v4148 = vsel %vm4132, 1, 0
    %v4149 = vsel %vm4133, 1, 0
    %4150 = vset.pattern.permute.xlu0 7
    %4151 = vperm.xlu0 %4150, %v4134
    %v4152 = vpop.permute.xlu0 %4151
    %4153 = vset.pattern.permute.xlu0 7
    %4154 = vperm.xlu0 %4153, %v4135
    %v4155 = vpop.permute.xlu0 %4154
    %4156 = vset.pattern.permute.xlu0 7
    %4157 = vperm.xlu0 %4156, %v4136
    %v4158 = vpop.permute.xlu0 %4157
    %4159 = vset.pattern.permute.xlu0 7
    %4160 = vperm.xlu0 %4159, %v4137
    %v4161 = vpop.permute.xlu0 %4160
    %4162 = vset.pattern.permute.xlu0 7
    %4163 = vperm.xlu0 %4162, %v4138
    %v4164 = vpop.permute.xlu0 %4163
    %4165 = vset.pattern.permute.xlu0 7
    %4166 = vperm.xlu0 %4165, %v4139
    %v4167 = vpop.permute.xlu0 %4166
    %4168 = vset.pattern.permute.xlu0 7
    %4169 = vperm.xlu0 %4168, %v4140
    %v4170 = vpop.permute.xlu0 %4169
    %4171 = vset.pattern.permute.xlu0 7
    %4172 = vperm.xlu0 %4171, %v4141
    %v4173 = vpop.permute.xlu0 %4172
    %4174 = vset.pattern.permute.xlu0 7
    %4175 = vperm.xlu0 %4174, %v4142
    %v4176 = vpop.permute.xlu0 %4175
    %4177 = vset.pattern.permute.xlu0 7
    %4178 = vperm.xlu0 %4177, %v4143
    %v4179 = vpop.permute.xlu0 %4178
    %4180 = vset.pattern.permute.xlu0 7
    %4181 = vperm.xlu0 %4180, %v4144
    %v4182 = vpop.permute.xlu0 %4181
    %4183 = vset.pattern.permute.xlu0 7
    %4184 = vperm.xlu0 %4183, %v4145
    %v4185 = vpop.permute.xlu0 %4184
    %4186 = vset.pattern.permute.xlu0 7
    %4187 = vperm.xlu0 %4186, %v4146
    %v4188 = vpop.permute.xlu0 %4187
    %4189 = vset.pattern.permute.xlu0 7
    %4190 = vperm.xlu0 %4189, %v4147
    %v4191 = vpop.permute.xlu0 %4190
    %4192 = vset.pattern.permute.xlu0 7
    %4193 = vperm.xlu0 %4192, %v4148
    %v4194 = vpop.permute.xlu0 %4193
    %4195 = vset.pattern.permute.xlu0 7
    %4196 = vperm.xlu0 %4195, %v4149
    %v4197 = vpop.permute.xlu0 %4196
    %vm4198 = vcmp.eq.s32.totalorder %v4152, 1
    %vm4199 = vcmp.eq.s32.totalorder %v4155, 1
    %vm4200 = vcmp.eq.s32.totalorder %v4158, 1
    %vm4201 = vcmp.eq.s32.totalorder %v4161, 1
    %vm4202 = vcmp.eq.s32.totalorder %v4164, 1
    %vm4203 = vcmp.eq.s32.totalorder %v4167, 1
    %vm4204 = vcmp.eq.s32.totalorder %v4170, 1
    %vm4205 = vcmp.eq.s32.totalorder %v4173, 1
    %vm4206 = vcmp.eq.s32.totalorder %v4176, 1
    %vm4207 = vcmp.eq.s32.totalorder %v4179, 1
    %vm4208 = vcmp.eq.s32.totalorder %v4182, 1
    %vm4209 = vcmp.eq.s32.totalorder %v4185, 1
    %vm4210 = vcmp.eq.s32.totalorder %v4188, 1
    %vm4211 = vcmp.eq.s32.totalorder %v4191, 1
    %vm4212 = vcmp.eq.s32.totalorder %v4194, 1
    %vm4213 = vcmp.eq.s32.totalorder %v4197, 1
    %vm4214 = vmpackc.low %vm4198, %vm4198
    %vm4215 = vmpackc.low %vm4199, %vm4199
    %vm4216 = vmpackc.low %vm4200, %vm4200
    %vm4217 = vmpackc.low %vm4201, %vm4201
    %vm4218 = vmpackc.low %vm4202, %vm4202
    %vm4219 = vmpackc.low %vm4203, %vm4203
    %vm4220 = vmpackc.low %vm4204, %vm4204
    %vm4221 = vmpackc.low %vm4205, %vm4205
    %vm4222 = vmpackc.low %vm4206, %vm4206
    %vm4223 = vmpackc.low %vm4207, %vm4207
    %vm4224 = vmpackc.low %vm4208, %vm4208
    %vm4225 = vmpackc.low %vm4209, %vm4209
    %vm4226 = vmpackc.low %vm4210, %vm4210
    %vm4227 = vmpackc.low %vm4211, %vm4211
    %vm4228 = vmpackc.low %vm4212, %vm4212
    %vm4229 = vmpackc.low %vm4213, %vm4213
    %v4230 = vsel %vm4214, %v4086, 0
    %v4231 = vsel %vm4215, %v4087, 0
    %v4232 = vsel %vm4216, %v4088, 0
    %v4233 = vsel %vm4217, %v4089, 0
    %v4234 = vsel %vm4218, %v4090, 0
    %v4235 = vsel %vm4219, %v4091, 0
    %v4236 = vsel %vm4220, %v4092, 0
    %v4237 = vsel %vm4221, %v4093, 0
    %v4238 = vsel %vm4222, %v4094, 0
    %v4239 = vsel %vm4223, %v4095, 0
    %v4240 = vsel %vm4224, %v4096, 0
    %v4241 = vsel %vm4225, %v4097, 0
    %v4242 = vsel %vm4226, %v4098, 0
    %v4243 = vsel %vm4227, %v4099, 0
    %v4244 = vsel %vm4228, %v4100, 0
    %v4245 = vsel %vm4229, %v4101, 0
    %4262 = vrot.lane.b32.xlu0 %v4230, 96
    %v4263 = vpop.permute.xlu0 %4262
    %4264 = vrot.lane.b32.xlu0 %v4231, 96
    %v4265 = vpop.permute.xlu0 %4264
    %4266 = vrot.lane.b32.xlu0 %v4232, 96
    %v4267 = vpop.permute.xlu0 %4266
    %4268 = vrot.lane.b32.xlu0 %v4233, 96
    %v4269 = vpop.permute.xlu0 %4268
    %4270 = vrot.lane.b32.xlu0 %v4234, 96
    %v4271 = vpop.permute.xlu0 %4270
    %4272 = vrot.lane.b32.xlu0 %v4235, 96
    %v4273 = vpop.permute.xlu0 %4272
    %4274 = vrot.lane.b32.xlu0 %v4236, 96
    %v4275 = vpop.permute.xlu0 %4274
    %4276 = vrot.lane.b32.xlu0 %v4237, 96
    %v4277 = vpop.permute.xlu0 %4276
    %4278 = vrot.lane.b32.xlu0 %v4238, 96
    %v4279 = vpop.permute.xlu0 %4278
    %4280 = vrot.lane.b32.xlu0 %v4239, 96
    %v4281 = vpop.permute.xlu0 %4280
    %4282 = vrot.lane.b32.xlu0 %v4240, 96
    %v4283 = vpop.permute.xlu0 %4282
    %4284 = vrot.lane.b32.xlu0 %v4241, 96
    %v4285 = vpop.permute.xlu0 %4284
    %4286 = vrot.lane.b32.xlu0 %v4242, 96
    %v4287 = vpop.permute.xlu0 %4286
    %4288 = vrot.lane.b32.xlu0 %v4243, 96
    %v4289 = vpop.permute.xlu0 %4288
    %4290 = vrot.lane.b32.xlu0 %v4244, 96
    %v4291 = vpop.permute.xlu0 %4290
    %4292 = vrot.lane.b32.xlu0 %v4245, 96
    %v4293 = vpop.permute.xlu0 %4292
    %4310 = vst.msk [vmem:[#allocation3 + $0x4] sm:$0xf] %vm2557, %v4263
    %4311 = vst.msk [vmem:[#allocation3 + $0x10] sm:$0xf] %vm2557, %v4265
    %4312 = vst.msk [vmem:[#allocation3 + $0x1c] sm:$0xf] %vm2557, %v4267
    %4313 = vst.msk [vmem:[#allocation3 + $0x28] sm:$0xf] %vm2557, %v4269
    %4314 = vst.msk [vmem:[#allocation3 + $0x34] sm:$0xf] %vm2557, %v4271
    %4315 = vst.msk [vmem:[#allocation3 + $0x40] sm:$0xf] %vm2557, %v4273
    %4316 = vst.msk [vmem:[#allocation3 + $0x4c] sm:$0xf] %vm2557, %v4275
    %4317 = vst.msk [vmem:[#allocation3 + $0x58] sm:$0xf] %vm2557, %v4277
    %4318 = vst.msk [vmem:[#allocation3 + $0x64] sm:$0xf] %vm2557, %v4279
    %4319 = vst.msk [vmem:[#allocation3 + $0x70] sm:$0xf] %vm2557, %v4281
    %4320 = vst.msk [vmem:[#allocation3 + $0x7c] sm:$0xf] %vm2557, %v4283
    %4321 = vst.msk [vmem:[#allocation3 + $0x88] sm:$0xf] %vm2557, %v4285
    %4322 = vst.msk [vmem:[#allocation3 + $0x94] sm:$0xf] %vm2557, %v4287
    %4323 = vst.msk [vmem:[#allocation3 + $0xa0] sm:$0xf] %vm2557, %v4289
    %4324 = vst.msk [vmem:[#allocation3 + $0xac] sm:$0xf] %vm2557, %v4291
    %4325 = vst.msk [vmem:[#allocation3 + $0xb8] sm:$0xf] %vm2557, %v4293
    %v4326 = vld [vmem:[#allocation2 + $0xc] sm:$0xf]
    %v4327 = vld [vmem:[#allocation2 + $0x10] sm:$0xf]
    %v4328 = vld [vmem:[#allocation2 + $0x14] sm:$0xf]
    %v4329 = vld [vmem:[#allocation2 + $0x18] sm:$0xf]
    %v4330 = vld [vmem:[#allocation2 + $0x1c] sm:$0xf]
    %v4331 = vld [vmem:[#allocation2 + $0x20] sm:$0xf]
    %v4332 = vld [vmem:[#allocation2 + $0x24] sm:$0xf]
    %v4333 = vld [vmem:[#allocation2 + $0x28] sm:$0xf]
    %v4334 = vld [vmem:[#allocation2 + $0x2c] sm:$0xf]
    %v4335 = vld [vmem:[#allocation2 + $0x30] sm:$0xf]
    %v4336 = vld [vmem:[#allocation2 + $0x34] sm:$0xf]
    %v4337 = vld [vmem:[#allocation2 + $0x38] sm:$0xf]
    %v4338 = vld [vmem:[#allocation2 + $0x3c] sm:$0xf]
    %v4339 = vld [vmem:[#allocation2 + $0x40] sm:$0xf]
    %v4340 = vld [vmem:[#allocation2 + $0x44] sm:$0xf]
    %v4341 = vld [vmem:[#allocation2 + $0x48] sm:$0xf]
    %v4342 = vld [vmem:[#allocation2 + $0x4c] sm:$0x1]
    %v4343 = vld [vmem:[%s1] sm:$0xff]
    %v4344 = vld [vmem:[%s1 + $0x8] sm:$0xff]
    %v4345 = vld [vmem:[%s1 + $0x10] sm:$0xff]
    %v4346 = vld [vmem:[%s1 + $0x18] sm:$0xff]
    %v4347 = vld [vmem:[%s1 + $0x20] sm:$0xff]
    %v4348 = vld [vmem:[%s1 + $0x28] sm:$0xff]
    %v4349 = vld [vmem:[%s1 + $0x30] sm:$0xff]
    %v4350 = vld [vmem:[%s1 + $0x38] sm:$0xff]
    %v4351 = vld [vmem:[%s1 + $0x40] sm:$0xff]
    %v4352 = vld [vmem:[%s1 + $0x48] sm:$0xff]
    %v4353 = vld [vmem:[%s1 + $0x50] sm:$0xff]
    %v4354 = vld [vmem:[%s1 + $0x58] sm:$0xff]
    %v4355 = vld [vmem:[%s1 + $0x60] sm:$0xff]
    %v4356 = vld [vmem:[%s1 + $0x68] sm:$0xff]
    %v4357 = vld [vmem:[%s1 + $0x70] sm:$0xff]
    %v4358 = vld [vmem:[%s1 + $0x78] sm:$0xff]
    %vm4359 = vcmp.gt.f32.partialorder %v4343, 0.0
    %vm4360 = vcmp.gt.f32.partialorder %v4344, 0.0
    %vm4361 = vcmp.gt.f32.partialorder %v4345, 0.0
    %vm4362 = vcmp.gt.f32.partialorder %v4346, 0.0
    %vm4363 = vcmp.gt.f32.partialorder %v4347, 0.0
    %vm4364 = vcmp.gt.f32.partialorder %v4348, 0.0
    %vm4365 = vcmp.gt.f32.partialorder %v4349, 0.0
    %vm4366 = vcmp.gt.f32.partialorder %v4350, 0.0
    %vm4367 = vcmp.gt.f32.partialorder %v4351, 0.0
    %vm4368 = vcmp.gt.f32.partialorder %v4352, 0.0
    %vm4369 = vcmp.gt.f32.partialorder %v4353, 0.0
    %vm4370 = vcmp.gt.f32.partialorder %v4354, 0.0
    %vm4371 = vcmp.gt.f32.partialorder %v4355, 0.0
    %vm4372 = vcmp.gt.f32.partialorder %v4356, 0.0
    %vm4373 = vcmp.gt.f32.partialorder %v4357, 0.0
    %vm4374 = vcmp.gt.f32.partialorder %v4358, 0.0
    %v4375 = vsel %vm4359, 1, 0
    %v4376 = vsel %vm4360, 1, 0
    %v4377 = vsel %vm4361, 1, 0
    %v4378 = vsel %vm4362, 1, 0
    %v4379 = vsel %vm4363, 1, 0
    %v4380 = vsel %vm4364, 1, 0
    %v4381 = vsel %vm4365, 1, 0
    %v4382 = vsel %vm4366, 1, 0
    %v4383 = vsel %vm4367, 1, 0
    %v4384 = vsel %vm4368, 1, 0
    %v4385 = vsel %vm4369, 1, 0
    %v4386 = vsel %vm4370, 1, 0
    %v4387 = vsel %vm4371, 1, 0
    %v4388 = vsel %vm4372, 1, 0
    %v4389 = vsel %vm4373, 1, 0
    %v4390 = vsel %vm4374, 1, 0
    %4391 = vset.pattern.permute.xlu0 8
    %4392 = vperm.xlu0 %4391, %v4375
    %v4393 = vpop.permute.xlu0 %4392
    %4394 = vset.pattern.permute.xlu0 8
    %4395 = vperm.xlu0 %4394, %v4376
    %v4396 = vpop.permute.xlu0 %4395
    %4397 = vset.pattern.permute.xlu0 8
    %4398 = vperm.xlu0 %4397, %v4377
    %v4399 = vpop.permute.xlu0 %4398
    %4400 = vset.pattern.permute.xlu0 8
    %4401 = vperm.xlu0 %4400, %v4378
    %v4402 = vpop.permute.xlu0 %4401
    %4403 = vset.pattern.permute.xlu0 8
    %4404 = vperm.xlu0 %4403, %v4379
    %v4405 = vpop.permute.xlu0 %4404
    %4406 = vset.pattern.permute.xlu0 8
    %4407 = vperm.xlu0 %4406, %v4380
    %v4408 = vpop.permute.xlu0 %4407
    %4409 = vset.pattern.permute.xlu0 8
    %4410 = vperm.xlu0 %4409, %v4381
    %v4411 = vpop.permute.xlu0 %4410
    %4412 = vset.pattern.permute.xlu0 8
    %4413 = vperm.xlu0 %4412, %v4382
    %v4414 = vpop.permute.xlu0 %4413
    %4415 = vset.pattern.permute.xlu0 8
    %4416 = vperm.xlu0 %4415, %v4383
    %v4417 = vpop.permute.xlu0 %4416
    %4418 = vset.pattern.permute.xlu0 8
    %4419 = vperm.xlu0 %4418, %v4384
    %v4420 = vpop.permute.xlu0 %4419
    %4421 = vset.pattern.permute.xlu0 8
    %4422 = vperm.xlu0 %4421, %v4385
    %v4423 = vpop.permute.xlu0 %4422
    %4424 = vset.pattern.permute.xlu0 8
    %4425 = vperm.xlu0 %4424, %v4386
    %v4426 = vpop.permute.xlu0 %4425
    %4427 = vset.pattern.permute.xlu0 8
    %4428 = vperm.xlu0 %4427, %v4387
    %v4429 = vpop.permute.xlu0 %4428
    %4430 = vset.pattern.permute.xlu0 8
    %4431 = vperm.xlu0 %4430, %v4388
    %v4432 = vpop.permute.xlu0 %4431
    %4433 = vset.pattern.permute.xlu0 8
    %4434 = vperm.xlu0 %4433, %v4389
    %v4435 = vpop.permute.xlu0 %4434
    %4436 = vset.pattern.permute.xlu0 8
    %4437 = vperm.xlu0 %4436, %v4390
    %v4438 = vpop.permute.xlu0 %4437
    %vm4439 = vcmp.eq.s32.totalorder %v4393, 1
    %vm4440 = vcmp.eq.s32.totalorder %v4396, 1
    %vm4441 = vcmp.eq.s32.totalorder %v4399, 1
    %vm4442 = vcmp.eq.s32.totalorder %v4402, 1
    %vm4443 = vcmp.eq.s32.totalorder %v4405, 1
    %vm4444 = vcmp.eq.s32.totalorder %v4408, 1
    %vm4445 = vcmp.eq.s32.totalorder %v4411, 1
    %vm4446 = vcmp.eq.s32.totalorder %v4414, 1
    %vm4447 = vcmp.eq.s32.totalorder %v4417, 1
    %vm4448 = vcmp.eq.s32.totalorder %v4420, 1
    %vm4449 = vcmp.eq.s32.totalorder %v4423, 1
    %vm4450 = vcmp.eq.s32.totalorder %v4426, 1
    %vm4451 = vcmp.eq.s32.totalorder %v4429, 1
    %vm4452 = vcmp.eq.s32.totalorder %v4432, 1
    %vm4453 = vcmp.eq.s32.totalorder %v4435, 1
    %vm4454 = vcmp.eq.s32.totalorder %v4438, 1
    %vm4455 = vmpackc.low %vm4439, %vm4439
    %vm4456 = vmpackc.low %vm4440, %vm4440
    %vm4457 = vmpackc.low %vm4441, %vm4441
    %vm4458 = vmpackc.low %vm4442, %vm4442
    %vm4459 = vmpackc.low %vm4443, %vm4443
    %vm4460 = vmpackc.low %vm4444, %vm4444
    %vm4461 = vmpackc.low %vm4445, %vm4445
    %vm4462 = vmpackc.low %vm4446, %vm4446
    %vm4463 = vmpackc.low %vm4447, %vm4447
    %vm4464 = vmpackc.low %vm4448, %vm4448
    %vm4465 = vmpackc.low %vm4449, %vm4449
    %vm4466 = vmpackc.low %vm4450, %vm4450
    %vm4467 = vmpackc.low %vm4451, %vm4451
    %vm4468 = vmpackc.low %vm4452, %vm4452
    %vm4469 = vmpackc.low %vm4453, %vm4453
    %vm4470 = vmpackc.low %vm4454, %vm4454
    %v4471 = vsel %vm4455, 65537, 0
    %v4472 = vsel %vm4456, 65537, 0
    %v4473 = vsel %vm4457, 65537, 0
    %v4474 = vsel %vm4458, 65537, 0
    %v4475 = vsel %vm4459, 65537, 0
    %v4476 = vsel %vm4460, 65537, 0
    %v4477 = vsel %vm4461, 65537, 0
    %v4478 = vsel %vm4462, 65537, 0
    %v4479 = vsel %vm4463, 65537, 0
    %v4480 = vsel %vm4464, 65537, 0
    %v4481 = vsel %vm4465, 65537, 0
    %v4482 = vsel %vm4466, 65537, 0
    %v4483 = vsel %vm4467, 65537, 0
    %v4484 = vsel %vm4468, 65537, 0
    %v4485 = vsel %vm4469, 65537, 0
    %v4486 = vsel %vm4470, 65537, 0
    %v4488 = vshrl.u32 %v4471, 16
    %v4490 = vrot.slane %v4488, 7
    %v4491 = vshll.u32 %v4471, 16
    %v4493 = vor.u32 %v4490, %v4491
    %v4494 = vrot.slane %v4490, 4
    %v4496 = vshrl.u32 %v4472, 16
    %v4498 = vrot.slane %v4496, 7
    %v4499 = vshll.u32 %v4472, 16
    %v4501 = vor.u32 %v4498, %v4499
    %v4502 = vsel %vm814, %v4494, %v4501
    %v4503 = vrot.slane %v4498, 4
    %v4505 = vshrl.u32 %v4473, 16
    %v4507 = vrot.slane %v4505, 7
    %v4508 = vshll.u32 %v4473, 16
    %v4510 = vor.u32 %v4507, %v4508
    %v4511 = vsel %vm814, %v4503, %v4510
    %v4512 = vrot.slane %v4507, 4
    %v4514 = vshrl.u32 %v4474, 16
    %v4516 = vrot.slane %v4514, 7
    %v4517 = vshll.u32 %v4474, 16
    %v4519 = vor.u32 %v4516, %v4517
    %v4520 = vsel %vm814, %v4512, %v4519
    %v4521 = vrot.slane %v4516, 4
    %v4523 = vshrl.u32 %v4475, 16
    %v4525 = vrot.slane %v4523, 7
    %v4526 = vshll.u32 %v4475, 16
    %v4528 = vor.u32 %v4525, %v4526
    %v4529 = vsel %vm814, %v4521, %v4528
    %v4530 = vrot.slane %v4525, 4
    %v4532 = vshrl.u32 %v4476, 16
    %v4534 = vrot.slane %v4532, 7
    %v4535 = vshll.u32 %v4476, 16
    %v4537 = vor.u32 %v4534, %v4535
    %v4538 = vsel %vm814, %v4530, %v4537
    %v4539 = vrot.slane %v4534, 4
    %v4541 = vshrl.u32 %v4477, 16
    %v4543 = vrot.slane %v4541, 7
    %v4544 = vshll.u32 %v4477, 16
    %v4546 = vor.u32 %v4543, %v4544
    %v4547 = vsel %vm814, %v4539, %v4546
    %v4548 = vrot.slane %v4543, 4
    %v4550 = vshrl.u32 %v4478, 16
    %v4552 = vrot.slane %v4550, 7
    %v4553 = vshll.u32 %v4478, 16
    %v4555 = vor.u32 %v4552, %v4553
    %v4556 = vsel %vm814, %v4548, %v4555
    %v4557 = vrot.slane %v4552, 4
    %v4559 = vshrl.u32 %v4479, 16
    %v4561 = vrot.slane %v4559, 7
    %v4562 = vshll.u32 %v4479, 16
    %v4564 = vor.u32 %v4561, %v4562
    %v4565 = vsel %vm814, %v4557, %v4564
    %v4566 = vrot.slane %v4561, 4
    %v4568 = vshrl.u32 %v4480, 16
    %v4570 = vrot.slane %v4568, 7
    %v4571 = vshll.u32 %v4480, 16
    %v4573 = vor.u32 %v4570, %v4571
    %v4574 = vsel %vm814, %v4566, %v4573
    %v4575 = vrot.slane %v4570, 4
    %v4577 = vshrl.u32 %v4481, 16
    %v4579 = vrot.slane %v4577, 7
    %v4580 = vshll.u32 %v4481, 16
    %v4582 = vor.u32 %v4579, %v4580
    %v4583 = vsel %vm814, %v4575, %v4582
    %v4584 = vrot.slane %v4579, 4
    %v4586 = vshrl.u32 %v4482, 16
    %v4588 = vrot.slane %v4586, 7
    %v4589 = vshll.u32 %v4482, 16
    %v4591 = vor.u32 %v4588, %v4589
    %v4592 = vsel %vm814, %v4584, %v4591
    %v4593 = vrot.slane %v4588, 4
    %v4595 = vshrl.u32 %v4483, 16
    %v4597 = vrot.slane %v4595, 7
    %v4598 = vshll.u32 %v4483, 16
    %v4600 = vor.u32 %v4597, %v4598
    %v4601 = vsel %vm814, %v4593, %v4600
    %v4602 = vrot.slane %v4597, 4
    %v4604 = vshrl.u32 %v4484, 16
    %v4606 = vrot.slane %v4604, 7
    %v4607 = vshll.u32 %v4484, 16
    %v4609 = vor.u32 %v4606, %v4607
    %v4610 = vsel %vm814, %v4602, %v4609
    %v4611 = vrot.slane %v4606, 4
    %v4613 = vshrl.u32 %v4485, 16
    %v4615 = vrot.slane %v4613, 7
    %v4616 = vshll.u32 %v4485, 16
    %v4618 = vor.u32 %v4615, %v4616
    %v4619 = vsel %vm814, %v4611, %v4618
    %v4620 = vrot.slane %v4615, 4
    %v4622 = vshrl.u32 %v4486, 16
    %v4624 = vrot.slane %v4622, 7
    %v4625 = vshll.u32 %v4486, 16
    %v4627 = vor.u32 %v4624, %v4625
    %v4628 = vsel %vm814, %v4620, %v4627
    %v4629 = vrot.slane %v4624, 4
    %v4630 = vunpack.c.l.b16 %v4493
    %v4631 = vunpack.c.h.b16 %v4493
    %v4632 = vunpack.c.l.b16 0
    %v4633 = vunpack.c.h.b16 0
    %vm4634 = vcmp.ne.s32.totalorder %v4630, %v4632
    %vm4635 = vcmp.ne.s32.totalorder %v4631, %v4633
    %vm4636 = vmpackc.low %vm4635, %vm4634
    %v4637 = vunpack.c.l.b16 %v4502
    %v4638 = vunpack.c.h.b16 %v4502
    %v4639 = vunpack.c.l.b16 0
    %v4640 = vunpack.c.h.b16 0
    %vm4641 = vcmp.ne.s32.totalorder %v4637, %v4639
    %vm4642 = vcmp.ne.s32.totalorder %v4638, %v4640
    %vm4643 = vmpackc.low %vm4642, %vm4641
    %v4644 = vunpack.c.l.b16 %v4511
    %v4645 = vunpack.c.h.b16 %v4511
    %v4646 = vunpack.c.l.b16 0
    %v4647 = vunpack.c.h.b16 0
    %vm4648 = vcmp.ne.s32.totalorder %v4644, %v4646
    %vm4649 = vcmp.ne.s32.totalorder %v4645, %v4647
    %vm4650 = vmpackc.low %vm4649, %vm4648
    %v4651 = vunpack.c.l.b16 %v4520
    %v4652 = vunpack.c.h.b16 %v4520
    %v4653 = vunpack.c.l.b16 0
    %v4654 = vunpack.c.h.b16 0
    %vm4655 = vcmp.ne.s32.totalorder %v4651, %v4653
    %vm4656 = vcmp.ne.s32.totalorder %v4652, %v4654
    %vm4657 = vmpackc.low %vm4656, %vm4655
    %v4658 = vunpack.c.l.b16 %v4529
    %v4659 = vunpack.c.h.b16 %v4529
    %v4660 = vunpack.c.l.b16 0
    %v4661 = vunpack.c.h.b16 0
    %vm4662 = vcmp.ne.s32.totalorder %v4658, %v4660
    %vm4663 = vcmp.ne.s32.totalorder %v4659, %v4661
    %vm4664 = vmpackc.low %vm4663, %vm4662
    %v4665 = vunpack.c.l.b16 %v4538
    %v4666 = vunpack.c.h.b16 %v4538
    %v4667 = vunpack.c.l.b16 0
    %v4668 = vunpack.c.h.b16 0
    %vm4669 = vcmp.ne.s32.totalorder %v4665, %v4667
    %vm4670 = vcmp.ne.s32.totalorder %v4666, %v4668
    %vm4671 = vmpackc.low %vm4670, %vm4669
    %v4672 = vunpack.c.l.b16 %v4547
    %v4673 = vunpack.c.h.b16 %v4547
    %v4674 = vunpack.c.l.b16 0
    %v4675 = vunpack.c.h.b16 0
    %vm4676 = vcmp.ne.s32.totalorder %v4672, %v4674
    %vm4677 = vcmp.ne.s32.totalorder %v4673, %v4675
    %vm4678 = vmpackc.low %vm4677, %vm4676
    %v4679 = vunpack.c.l.b16 %v4556
    %v4680 = vunpack.c.h.b16 %v4556
    %v4681 = vunpack.c.l.b16 0
    %v4682 = vunpack.c.h.b16 0
    %vm4683 = vcmp.ne.s32.totalorder %v4679, %v4681
    %vm4684 = vcmp.ne.s32.totalorder %v4680, %v4682
    %vm4685 = vmpackc.low %vm4684, %vm4683
    %v4686 = vunpack.c.l.b16 %v4565
    %v4687 = vunpack.c.h.b16 %v4565
    %v4688 = vunpack.c.l.b16 0
    %v4689 = vunpack.c.h.b16 0
    %vm4690 = vcmp.ne.s32.totalorder %v4686, %v4688
    %vm4691 = vcmp.ne.s32.totalorder %v4687, %v4689
    %vm4692 = vmpackc.low %vm4691, %vm4690
    %v4693 = vunpack.c.l.b16 %v4574
    %v4694 = vunpack.c.h.b16 %v4574
    %v4695 = vunpack.c.l.b16 0
    %v4696 = vunpack.c.h.b16 0
    %vm4697 = vcmp.ne.s32.totalorder %v4693, %v4695
    %vm4698 = vcmp.ne.s32.totalorder %v4694, %v4696
    %vm4699 = vmpackc.low %vm4698, %vm4697
    %v4700 = vunpack.c.l.b16 %v4583
    %v4701 = vunpack.c.h.b16 %v4583
    %v4702 = vunpack.c.l.b16 0
    %v4703 = vunpack.c.h.b16 0
    %vm4704 = vcmp.ne.s32.totalorder %v4700, %v4702
    %vm4705 = vcmp.ne.s32.totalorder %v4701, %v4703
    %vm4706 = vmpackc.low %vm4705, %vm4704
    %v4707 = vunpack.c.l.b16 %v4592
    %v4708 = vunpack.c.h.b16 %v4592
    %v4709 = vunpack.c.l.b16 0
    %v4710 = vunpack.c.h.b16 0
    %vm4711 = vcmp.ne.s32.totalorder %v4707, %v4709
    %vm4712 = vcmp.ne.s32.totalorder %v4708, %v4710
    %vm4713 = vmpackc.low %vm4712, %vm4711
    %v4714 = vunpack.c.l.b16 %v4601
    %v4715 = vunpack.c.h.b16 %v4601
    %v4716 = vunpack.c.l.b16 0
    %v4717 = vunpack.c.h.b16 0
    %vm4718 = vcmp.ne.s32.totalorder %v4714, %v4716
    %vm4719 = vcmp.ne.s32.totalorder %v4715, %v4717
    %vm4720 = vmpackc.low %vm4719, %vm4718
    %v4721 = vunpack.c.l.b16 %v4610
    %v4722 = vunpack.c.h.b16 %v4610
    %v4723 = vunpack.c.l.b16 0
    %v4724 = vunpack.c.h.b16 0
    %vm4725 = vcmp.ne.s32.totalorder %v4721, %v4723
    %vm4726 = vcmp.ne.s32.totalorder %v4722, %v4724
    %vm4727 = vmpackc.low %vm4726, %vm4725
    %v4728 = vunpack.c.l.b16 %v4619
    %v4729 = vunpack.c.h.b16 %v4619
    %v4730 = vunpack.c.l.b16 0
    %v4731 = vunpack.c.h.b16 0
    %vm4732 = vcmp.ne.s32.totalorder %v4728, %v4730
    %vm4733 = vcmp.ne.s32.totalorder %v4729, %v4731
    %vm4734 = vmpackc.low %vm4733, %vm4732
    %v4735 = vunpack.c.l.b16 %v4628
    %v4736 = vunpack.c.h.b16 %v4628
    %v4737 = vunpack.c.l.b16 0
    %v4738 = vunpack.c.h.b16 0
    %vm4739 = vcmp.ne.s32.totalorder %v4735, %v4737
    %vm4740 = vcmp.ne.s32.totalorder %v4736, %v4738
    %vm4741 = vmpackc.low %vm4740, %vm4739
    %v4742 = vunpack.c.l.b16 %v4629
    %v4743 = vunpack.c.h.b16 %v4629
    %v4744 = vunpack.c.l.b16 0
    %v4745 = vunpack.c.h.b16 0
    %vm4746 = vcmp.ne.s32.totalorder %v4742, %v4744
    %vm4747 = vcmp.ne.s32.totalorder %v4743, %v4745
    %vm4748 = vmpackc.low %vm4747, %vm4746
    %v4749 = vsel %vm4636, %v4326, 0
    %v4750 = vsel %vm4643, %v4327, 0
    %v4751 = vsel %vm4650, %v4328, 0
    %v4752 = vsel %vm4657, %v4329, 0
    %v4753 = vsel %vm4664, %v4330, 0
    %v4754 = vsel %vm4671, %v4331, 0
    %v4755 = vsel %vm4678, %v4332, 0
    %v4756 = vsel %vm4685, %v4333, 0
    %v4757 = vsel %vm4692, %v4334, 0
    %v4758 = vsel %vm4699, %v4335, 0
    %v4759 = vsel %vm4706, %v4336, 0
    %v4760 = vsel %vm4713, %v4337, 0
    %v4761 = vsel %vm4720, %v4338, 0
    %v4762 = vsel %vm4727, %v4339, 0
    %v4763 = vsel %vm4734, %v4340, 0
    %v4764 = vsel %vm4741, %v4341, 0
    %v4765 = vsel %vm4748, %v4342, 0
    %v4767 = vshrl.u32 %v4749, 16
    %v4769 = vrot.slane %v4767, 4
    %v4770 = vshll.u32 %v4749, 16
    %v4772 = vrot.slane %v4770, 5
    %v4773 = vor.u32 %v4769, %v4772
    %v4774 = vrot.slane %v4773, 4
    %v4776 = vshll.u32 %v4750, 16
    %v4778 = vrot.slane %v4776, 5
    %v4779 = vsel %vm516, %v4774, %v4778
    %v4780 = vshrl.u32 %v4750, 16
    %v4782 = vrot.slane %v4780, 4
    %v4783 = vor.u32 %v4782, %v4778
    %v4784 = vrot.slane %v4783, 4
    %v4786 = vshll.u32 %v4751, 16
    %v4788 = vrot.slane %v4786, 5
    %v4789 = vsel %vm516, %v4784, %v4788
    %v4790 = vshrl.u32 %v4751, 16
    %v4792 = vrot.slane %v4790, 4
    %v4793 = vor.u32 %v4792, %v4788
    %v4794 = vrot.slane %v4793, 4
    %v4796 = vshll.u32 %v4752, 16
    %v4798 = vrot.slane %v4796, 5
    %v4799 = vsel %vm516, %v4794, %v4798
    %v4800 = vshrl.u32 %v4752, 16
    %v4802 = vrot.slane %v4800, 4
    %v4803 = vor.u32 %v4802, %v4798
    %v4804 = vrot.slane %v4803, 4
    %v4806 = vshll.u32 %v4753, 16
    %v4808 = vrot.slane %v4806, 5
    %v4809 = vsel %vm516, %v4804, %v4808
    %v4810 = vshrl.u32 %v4753, 16
    %v4812 = vrot.slane %v4810, 4
    %v4813 = vor.u32 %v4812, %v4808
    %v4814 = vrot.slane %v4813, 4
    %v4816 = vshll.u32 %v4754, 16
    %v4818 = vrot.slane %v4816, 5
    %v4819 = vsel %vm516, %v4814, %v4818
    %v4820 = vshrl.u32 %v4754, 16
    %v4822 = vrot.slane %v4820, 4
    %v4823 = vor.u32 %v4822, %v4818
    %v4824 = vrot.slane %v4823, 4
    %v4826 = vshll.u32 %v4755, 16
    %v4828 = vrot.slane %v4826, 5
    %v4829 = vsel %vm516, %v4824, %v4828
    %v4830 = vshrl.u32 %v4755, 16
    %v4832 = vrot.slane %v4830, 4
    %v4833 = vor.u32 %v4832, %v4828
    %v4834 = vrot.slane %v4833, 4
    %v4836 = vshll.u32 %v4756, 16
    %v4838 = vrot.slane %v4836, 5
    %v4839 = vsel %vm516, %v4834, %v4838
    %v4840 = vshrl.u32 %v4756, 16
    %v4842 = vrot.slane %v4840, 4
    %v4843 = vor.u32 %v4842, %v4838
    %v4844 = vrot.slane %v4843, 4
    %v4846 = vshll.u32 %v4757, 16
    %v4848 = vrot.slane %v4846, 5
    %v4849 = vsel %vm516, %v4844, %v4848
    %v4850 = vshrl.u32 %v4757, 16
    %v4852 = vrot.slane %v4850, 4
    %v4853 = vor.u32 %v4852, %v4848
    %v4854 = vrot.slane %v4853, 4
    %v4856 = vshll.u32 %v4758, 16
    %v4858 = vrot.slane %v4856, 5
    %v4859 = vsel %vm516, %v4854, %v4858
    %v4860 = vshrl.u32 %v4758, 16
    %v4862 = vrot.slane %v4860, 4
    %v4863 = vor.u32 %v4862, %v4858
    %v4864 = vrot.slane %v4863, 4
    %v4866 = vshll.u32 %v4759, 16
    %v4868 = vrot.slane %v4866, 5
    %v4869 = vsel %vm516, %v4864, %v4868
    %v4870 = vshrl.u32 %v4759, 16
    %v4872 = vrot.slane %v4870, 4
    %v4873 = vor.u32 %v4872, %v4868
    %v4874 = vrot.slane %v4873, 4
    %v4876 = vshll.u32 %v4760, 16
    %v4878 = vrot.slane %v4876, 5
    %v4879 = vsel %vm516, %v4874, %v4878
    %v4880 = vshrl.u32 %v4760, 16
    %v4882 = vrot.slane %v4880, 4
    %v4883 = vor.u32 %v4882, %v4878
    %v4884 = vrot.slane %v4883, 4
    %v4886 = vshll.u32 %v4761, 16
    %v4888 = vrot.slane %v4886, 5
    %v4889 = vsel %vm516, %v4884, %v4888
    %v4890 = vshrl.u32 %v4761, 16
    %v4892 = vrot.slane %v4890, 4
    %v4893 = vor.u32 %v4892, %v4888
    %v4894 = vrot.slane %v4893, 4
    %v4896 = vshll.u32 %v4762, 16
    %v4898 = vrot.slane %v4896, 5
    %v4899 = vsel %vm516, %v4894, %v4898
    %v4900 = vshrl.u32 %v4762, 16
    %v4902 = vrot.slane %v4900, 4
    %v4903 = vor.u32 %v4902, %v4898
    %v4904 = vrot.slane %v4903, 4
    %v4906 = vshll.u32 %v4763, 16
    %v4908 = vrot.slane %v4906, 5
    %v4909 = vsel %vm516, %v4904, %v4908
    %v4910 = vshrl.u32 %v4763, 16
    %v4912 = vrot.slane %v4910, 4
    %v4913 = vor.u32 %v4912, %v4908
    %v4914 = vrot.slane %v4913, 4
    %v4916 = vshll.u32 %v4764, 16
    %v4918 = vrot.slane %v4916, 5
    %v4919 = vsel %vm516, %v4914, %v4918
    %v4920 = vshrl.u32 %v4764, 16
    %v4922 = vrot.slane %v4920, 4
    %v4923 = vor.u32 %v4922, %v4918
    %v4924 = vrot.slane %v4923, 4
    %v4926 = vshll.u32 %v4765, 16
    %v4928 = vrot.slane %v4926, 5
    %v4929 = vsel %vm516, %v4924, %v4928
    %4946 = vst.msk [vmem:[#allocation3 + $0x8] sm:$0xf] %vm336, %v4779
    %4947 = vst.msk [vmem:[#allocation3 + $0x14] sm:$0xf] %vm336, %v4789
    %4948 = vst.msk [vmem:[#allocation3 + $0x20] sm:$0xf] %vm336, %v4799
    %4949 = vst.msk [vmem:[#allocation3 + $0x2c] sm:$0xf] %vm336, %v4809
    %4950 = vst.msk [vmem:[#allocation3 + $0x38] sm:$0xf] %vm336, %v4819
    %4951 = vst.msk [vmem:[#allocation3 + $0x44] sm:$0xf] %vm336, %v4829
    %4952 = vst.msk [vmem:[#allocation3 + $0x50] sm:$0xf] %vm336, %v4839
    %4953 = vst.msk [vmem:[#allocation3 + $0x5c] sm:$0xf] %vm336, %v4849
    %4954 = vst.msk [vmem:[#allocation3 + $0x68] sm:$0xf] %vm336, %v4859
    %4955 = vst.msk [vmem:[#allocation3 + $0x74] sm:$0xf] %vm336, %v4869
    %4956 = vst.msk [vmem:[#allocation3 + $0x80] sm:$0xf] %vm336, %v4879
    %4957 = vst.msk [vmem:[#allocation3 + $0x8c] sm:$0xf] %vm336, %v4889
    %4958 = vst.msk [vmem:[#allocation3 + $0x98] sm:$0xf] %vm336, %v4899
    %4959 = vst.msk [vmem:[#allocation3 + $0xa4] sm:$0xf] %vm336, %v4909
    %4960 = vst.msk [vmem:[#allocation3 + $0xb0] sm:$0xf] %vm336, %v4919
    %4961 = vst.msk [vmem:[#allocation3 + $0xbc] sm:$0xf] %vm336, %v4929
    %v4962 = vld [vmem:[#allocation3] sm:$0xff]
    %v4963 = vld [vmem:[#allocation3 + $0x8] sm:$0xf]
    %v4964 = vld [vmem:[#allocation3 + $0xc] sm:$0xff]
    %v4965 = vld [vmem:[#allocation3 + $0x14] sm:$0xf]
    %v4966 = vld [vmem:[#allocation3 + $0x18] sm:$0xff]
    %v4967 = vld [vmem:[#allocation3 + $0x20] sm:$0xf]
    %v4968 = vld [vmem:[#allocation3 + $0x24] sm:$0xff]
    %v4969 = vld [vmem:[#allocation3 + $0x2c] sm:$0xf]
    %v4970 = vld [vmem:[#allocation3 + $0x30] sm:$0xff]
    %v4971 = vld [vmem:[#allocation3 + $0x38] sm:$0xf]
    %v4972 = vld [vmem:[#allocation3 + $0x3c] sm:$0xff]
    %v4973 = vld [vmem:[#allocation3 + $0x44] sm:$0xf]
    %v4974 = vld [vmem:[#allocation3 + $0x48] sm:$0xff]
    %v4975 = vld [vmem:[#allocation3 + $0x50] sm:$0xf]
    %v4976 = vld [vmem:[#allocation3 + $0x54] sm:$0xff]
    %v4977 = vld [vmem:[#allocation3 + $0x5c] sm:$0xf]
    %v4978 = vld [vmem:[#allocation3 + $0x60] sm:$0xff]
    %v4979 = vld [vmem:[#allocation3 + $0x68] sm:$0xf]
    %v4980 = vld [vmem:[#allocation3 + $0x6c] sm:$0xff]
    %v4981 = vld [vmem:[#allocation3 + $0x74] sm:$0xf]
    %v4982 = vld [vmem:[#allocation3 + $0x78] sm:$0xff]
    %v4983 = vld [vmem:[#allocation3 + $0x80] sm:$0xf]
    %v4984 = vld [vmem:[#allocation3 + $0x84] sm:$0xff]
    %v4985 = vld [vmem:[#allocation3 + $0x8c] sm:$0xf]
    %v4986 = vld [vmem:[#allocation3 + $0x90] sm:$0xff]
    %v4987 = vld [vmem:[#allocation3 + $0x98] sm:$0xf]
    %v4988 = vld [vmem:[#allocation3 + $0x9c] sm:$0xff]
    %v4989 = vld [vmem:[#allocation3 + $0xa4] sm:$0xf]
    %v4990 = vld [vmem:[#allocation3 + $0xa8] sm:$0xff]
    %v4991 = vld [vmem:[#allocation3 + $0xb0] sm:$0xf]
    %v4992 = vld [vmem:[#allocation3 + $0xb4] sm:$0xff]
    %v4993 = vld [vmem:[#allocation3 + $0xbc] sm:$0xf]
    %v4994 = vld [vmem:[%s4] sm:$0xf]
    %v4995 = vld [vmem:[%s4 + $0x4] sm:$0xf]
    %v4996 = vld [vmem:[%s4 + $0x8] sm:$0xf]
    %v4997 = vld [vmem:[%s4 + $0xc] sm:$0xf]
    %v4998 = vld [vmem:[%s4 + $0x10] sm:$0xf]
    %v4999 = vld [vmem:[%s4 + $0x14] sm:$0xf]
    %v5000 = vld [vmem:[%s4 + $0x18] sm:$0xf]
    %v5001 = vld [vmem:[%s4 + $0x1c] sm:$0xf]
    %v5002 = vld [vmem:[%s4 + $0x20] sm:$0xf]
    %v5003 = vld [vmem:[%s4 + $0x24] sm:$0xf]
    %v5004 = vld [vmem:[%s4 + $0x28] sm:$0xf]
    %v5005 = vld [vmem:[%s4 + $0x2c] sm:$0xf]
    %v5006 = vld [vmem:[%s4 + $0x30] sm:$0xf]
    %v5007 = vld [vmem:[%s4 + $0x34] sm:$0xf]
    %v5008 = vld [vmem:[%s4 + $0x38] sm:$0xf]
    %v5009 = vld [vmem:[%s4 + $0x3c] sm:$0xf]
    %v5010 = vld [vmem:[%s4 + $0x40] sm:$0xf]
    %v5011 = vld [vmem:[%s4 + $0x44] sm:$0xf]
    %v5012 = vld [vmem:[%s4 + $0x48] sm:$0xf]
    %v5013 = vld [vmem:[%s4 + $0x4c] sm:$0xf]
    %v5014 = vld [vmem:[%s4 + $0x50] sm:$0xf]
    %v5015 = vld [vmem:[%s4 + $0x54] sm:$0xf]
    %v5016 = vld [vmem:[%s4 + $0x58] sm:$0xf]
    %v5017 = vld [vmem:[%s4 + $0x5c] sm:$0xf]
    %v5018 = vld [vmem:[%s4 + $0x60] sm:$0xf]
    %v5019 = vld [vmem:[%s4 + $0x64] sm:$0xf]
    %v5020 = vld [vmem:[%s4 + $0x68] sm:$0xf]
    %v5021 = vld [vmem:[%s4 + $0x6c] sm:$0xf]
    %v5022 = vld [vmem:[%s4 + $0x70] sm:$0xf]
    %v5023 = vld [vmem:[%s4 + $0x74] sm:$0xf]
    %v5024 = vld [vmem:[%s4 + $0x78] sm:$0xf]
    %v5025 = vld [vmem:[%s4 + $0x7c] sm:$0xf]
    %v5026 = vld [vmem:[%s4 + $0x80] sm:$0xf]
    %v5027 = vld [vmem:[%s4 + $0x84] sm:$0xf]
    %v5028 = vld [vmem:[%s4 + $0x88] sm:$0xf]
    %v5029 = vld [vmem:[%s4 + $0x8c] sm:$0xf]
    %v5030 = vld [vmem:[%s5] sm:$0x1]
    %v5032 = vperm.slane %v5030, 0
    %v5066 = vunpack.c.l.b16 %v4962
    %v5067 = vunpack.c.h.b16 %v4962
    %v5068 = vunpack.c.l.b16 %v4963
    %v5069 = vunpack.c.l.b16 %v4964
    %v5070 = vunpack.c.h.b16 %v4964
    %v5071 = vunpack.c.l.b16 %v4965
    %v5072 = vunpack.c.l.b16 %v4966
    %v5073 = vunpack.c.h.b16 %v4966
    %v5074 = vunpack.c.l.b16 %v4967
    %v5075 = vunpack.c.l.b16 %v4968
    %v5076 = vunpack.c.h.b16 %v4968
    %v5077 = vunpack.c.l.b16 %v4969
    %v5078 = vunpack.c.l.b16 %v4970
    %v5079 = vunpack.c.h.b16 %v4970
    %v5080 = vunpack.c.l.b16 %v4971
    %v5081 = vunpack.c.l.b16 %v4972
    %v5082 = vunpack.c.h.b16 %v4972
    %v5083 = vunpack.c.l.b16 %v4973
    %v5084 = vunpack.c.l.b16 %v4974
    %v5085 = vunpack.c.h.b16 %v4974
    %v5086 = vunpack.c.l.b16 %v4975
    %v5087 = vunpack.c.l.b16 %v4976
    %v5088 = vunpack.c.h.b16 %v4976
    %v5089 = vunpack.c.l.b16 %v4977
    %v5090 = vunpack.c.l.b16 %v4978
    %v5091 = vunpack.c.h.b16 %v4978
    %v5092 = vunpack.c.l.b16 %v4979
    %v5093 = vunpack.c.l.b16 %v4980
    %v5094 = vunpack.c.h.b16 %v4980
    %v5095 = vunpack.c.l.b16 %v4981
    %v5096 = vunpack.c.l.b16 %v4982
    %v5097 = vunpack.c.h.b16 %v4982
    %v5098 = vunpack.c.l.b16 %v4983
    %v5099 = vunpack.c.l.b16 %v4984
    %v5100 = vunpack.c.h.b16 %v4984
    %v5101 = vunpack.c.l.b16 %v4985
    %v5102 = vunpack.c.l.b16 %v4986
    %v5103 = vunpack.c.h.b16 %v4986
    %v5104 = vunpack.c.l.b16 %v4987
    %v5105 = vunpack.c.l.b16 %v4988
    %v5106 = vunpack.c.h.b16 %v4988
    %v5107 = vunpack.c.l.b16 %v4989
    %v5108 = vunpack.c.l.b16 %v4990
    %v5109 = vunpack.c.h.b16 %v4990
    %v5110 = vunpack.c.l.b16 %v4991
    %v5111 = vunpack.c.l.b16 %v4992
    %v5112 = vunpack.c.h.b16 %v4992
    %v5113 = vunpack.c.l.b16 %v4993
    %v5114 = vpack.c.b16 %v5069, %v5066
    %v5115 = vpack.c.b16 %v5070, %v5067
    %v5116 = vpack.c.b16 %v5071, %v5068
    %v5117 = vpack.c.b16 %v5075, %v5072
    %v5118 = vpack.c.b16 %v5076, %v5073
    %v5119 = vpack.c.b16 %v5077, %v5074
    %v5120 = vpack.c.b16 %v5081, %v5078
    %v5121 = vpack.c.b16 %v5082, %v5079
    %v5122 = vpack.c.b16 %v5083, %v5080
    %v5123 = vpack.c.b16 %v5087, %v5084
    %v5124 = vpack.c.b16 %v5088, %v5085
    %v5125 = vpack.c.b16 %v5089, %v5086
    %v5126 = vpack.c.b16 %v5093, %v5090
    %v5127 = vpack.c.b16 %v5094, %v5091
    %v5128 = vpack.c.b16 %v5095, %v5092
    %v5129 = vpack.c.b16 %v5099, %v5096
    %v5130 = vpack.c.b16 %v5100, %v5097
    %v5131 = vpack.c.b16 %v5101, %v5098
    %v5132 = vpack.c.b16 %v5105, %v5102
    %v5133 = vpack.c.b16 %v5106, %v5103
    %v5134 = vpack.c.b16 %v5107, %v5104
    %v5135 = vpack.c.b16 %v5111, %v5108
    %v5136 = vpack.c.b16 %v5112, %v5109
    %v5137 = vpack.c.b16 %v5113, %v5110
    %v5190 = vunpack.c.l.b16 %v4994
    %v5191 = vunpack.c.l.b16 %v4995
    %v5192 = vunpack.c.l.b16 %v4996
    %v5193 = vunpack.c.l.b16 %v4997
    %v5194 = vunpack.c.l.b16 %v4998
    %v5195 = vunpack.c.l.b16 %v4999
    %v5196 = vunpack.c.l.b16 %v5000
    %v5197 = vunpack.c.l.b16 %v5001
    %v5198 = vunpack.c.l.b16 %v5002
    %v5199 = vunpack.c.l.b16 %v5003
    %v5200 = vunpack.c.l.b16 %v5004
    %v5201 = vunpack.c.l.b16 %v5005
    %v5202 = vunpack.c.l.b16 %v5006
    %v5203 = vunpack.c.l.b16 %v5007
    %v5204 = vunpack.c.l.b16 %v5008
    %v5205 = vunpack.c.l.b16 %v5009
    %v5206 = vunpack.c.l.b16 %v5010
    %v5207 = vunpack.c.l.b16 %v5011
    %v5208 = vunpack.c.l.b16 %v5012
    %v5209 = vunpack.c.l.b16 %v5013
    %v5210 = vunpack.c.l.b16 %v5014
    %v5211 = vunpack.c.l.b16 %v5015
    %v5212 = vunpack.c.l.b16 %v5016
    %v5213 = vunpack.c.l.b16 %v5017
    %v5214 = vunpack.c.l.b16 %v5018
    %v5215 = vunpack.c.l.b16 %v5019
    %v5216 = vunpack.c.l.b16 %v5020
    %v5217 = vunpack.c.l.b16 %v5021
    %v5218 = vunpack.c.l.b16 %v5022
    %v5219 = vunpack.c.l.b16 %v5023
    %v5220 = vunpack.c.l.b16 %v5024
    %v5221 = vunpack.c.l.b16 %v5025
    %v5222 = vunpack.c.l.b16 %v5026
    %v5223 = vunpack.c.l.b16 %v5027
    %v5224 = vunpack.c.l.b16 %v5028
    %v5225 = vunpack.c.l.b16 %v5029
    %v5226 = vpack.c.b16 %v5191, %v5190
    %v5227 = vpack.c.b16 %v5193, %v5192
    %v5228 = vpack.c.b16 %v5195, %v5194
    %v5229 = vpack.c.b16 %v5197, %v5196
    %v5230 = vpack.c.b16 %v5199, %v5198
    %v5231 = vpack.c.b16 %v5201, %v5200
    %v5232 = vpack.c.b16 %v5203, %v5202
    %v5233 = vpack.c.b16 %v5205, %v5204
    %v5234 = vpack.c.b16 %v5207, %v5206
    %v5235 = vpack.c.b16 %v5209, %v5208
    %v5236 = vpack.c.b16 %v5211, %v5210
    %v5237 = vpack.c.b16 %v5213, %v5212
    %v5238 = vpack.c.b16 %v5215, %v5214
    %v5239 = vpack.c.b16 %v5217, %v5216
    %v5240 = vpack.c.b16 %v5219, %v5218
    %v5241 = vpack.c.b16 %v5221, %v5220
    %v5242 = vpack.c.b16 %v5223, %v5222
    %v5243 = vpack.c.b16 %v5225, %v5224
    %v5263 = vsel %vm254, %v5116, 0
    %v5266 = vsel %vm254, %v5119, 0
    %v5269 = vsel %vm254, %v5122, 0
    %v5272 = vsel %vm254, %v5125, 0
    %v5275 = vsel %vm254, %v5128, 0
    %v5278 = vsel %vm254, %v5131, 0
    %v5281 = vsel %vm254, %v5134, 0
    %v5284 = vsel %vm254, %v5137, 0
    %5286 = vmatpush.bf16.msra.mxu0 %v5233
    %5287 = vmatpush.bf16.msra.mxu0 %v5232
    %5288 = vmatpush.bf16.msra.mxu0 %v5231
    %5289 = vmatpush.bf16.msra.mxu0 %v5230
    %5290 = vmatpush.bf16.msra.mxu0 %v5229
    %5291 = vmatpush.bf16.msra.mxu0 %v5228
    %5292 = vmatpush.bf16.msra.mxu0 %v5227
    %5293 = vmatpush.bf16.msra.mxu0 %v5226
    %5294 = vmatmul.bf16.gmra.mxu0 %v5114
    %v5295 = vpop.f32.mrf.mxu0
    %v5296 = vadd.f32 %v5032, %v5295
    %v5297 = vpop.f32.mrf.mxu0
    %v5298 = vadd.f32 %v5032, %v5297
    %5299 = vmatmul.bf16.gmra.mxu0 %v5117
    %v5300 = vpop.f32.mrf.mxu0
    %v5301 = vadd.f32 %v5032, %v5300
    %v5302 = vpop.f32.mrf.mxu0
    %v5303 = vadd.f32 %v5032, %v5302
    %5304 = vmatmul.bf16.gmra.mxu0 %v5120
    %v5305 = vpop.f32.mrf.mxu0
    %v5306 = vadd.f32 %v5032, %v5305
    %v5307 = vpop.f32.mrf.mxu0
    %v5308 = vadd.f32 %v5032, %v5307
    %5309 = vmatmul.bf16.gmra.mxu0 %v5123
    %v5310 = vpop.f32.mrf.mxu0
    %v5311 = vadd.f32 %v5032, %v5310
    %v5312 = vpop.f32.mrf.mxu0
    %v5313 = vadd.f32 %v5032, %v5312
    %5314 = vmatmul.bf16.gmra.mxu0 %v5126
    %v5315 = vpop.f32.mrf.mxu0
    %v5316 = vadd.f32 %v5032, %v5315
    %v5317 = vpop.f32.mrf.mxu0
    %v5318 = vadd.f32 %v5032, %v5317
    %5319 = vmatmul.bf16.gmra.mxu0 %v5129
    %v5320 = vpop.f32.mrf.mxu0
    %v5321 = vadd.f32 %v5032, %v5320
    %v5322 = vpop.f32.mrf.mxu0
    %v5323 = vadd.f32 %v5032, %v5322
    %5324 = vmatmul.bf16.gmra.mxu0 %v5132
    %v5325 = vpop.f32.mrf.mxu0
    %v5326 = vadd.f32 %v5032, %v5325
    %v5327 = vpop.f32.mrf.mxu0
    %v5328 = vadd.f32 %v5032, %v5327
    %5329 = vmatmul.bf16.gmra.mxu0 %v5135
    %v5330 = vpop.f32.mrf.mxu0
    %v5331 = vadd.f32 %v5032, %v5330
    %v5332 = vpop.f32.mrf.mxu0
    %v5333 = vadd.f32 %v5032, %v5332
    %5334 = vdwg.mxu0
    %5335 = vmatpush.bf16.msra.mxu0 %v5241
    %5336 = vmatpush.bf16.msra.mxu0 %v5240
    %5337 = vmatpush.bf16.msra.mxu0 %v5239
    %5338 = vmatpush.bf16.msra.mxu0 %v5238
    %5339 = vmatpush.bf16.msra.mxu0 %v5237
    %5340 = vmatpush.bf16.msra.mxu0 %v5236
    %5341 = vmatpush.bf16.msra.mxu0 %v5235
    %5342 = vmatpush.bf16.msra.mxu0 %v5234
    %5343 = vmatmul.bf16.gmra.mxu0 %v5115
    %v5344 = vpop.f32.mrf.mxu0
    %v5345 = vadd.f32 %v5296, %v5344
    %v5346 = vpop.f32.mrf.mxu0
    %v5347 = vadd.f32 %v5298, %v5346
    %5348 = vmatmul.bf16.gmra.mxu0 %v5118
    %v5349 = vpop.f32.mrf.mxu0
    %v5350 = vadd.f32 %v5301, %v5349
    %v5351 = vpop.f32.mrf.mxu0
    %v5352 = vadd.f32 %v5303, %v5351
    %5353 = vmatmul.bf16.gmra.mxu0 %v5121
    %v5354 = vpop.f32.mrf.mxu0
    %v5355 = vadd.f32 %v5306, %v5354
    %v5356 = vpop.f32.mrf.mxu0
    %v5357 = vadd.f32 %v5308, %v5356
    %5358 = vmatmul.bf16.gmra.mxu0 %v5124
    %v5359 = vpop.f32.mrf.mxu0
    %v5360 = vadd.f32 %v5311, %v5359
    %v5361 = vpop.f32.mrf.mxu0
    %v5362 = vadd.f32 %v5313, %v5361
    %5363 = vmatmul.bf16.gmra.mxu0 %v5127
    %v5364 = vpop.f32.mrf.mxu0
    %v5365 = vadd.f32 %v5316, %v5364
    %v5366 = vpop.f32.mrf.mxu0
    %v5367 = vadd.f32 %v5318, %v5366
    %5368 = vmatmul.bf16.gmra.mxu0 %v5130
    %v5369 = vpop.f32.mrf.mxu0
    %v5370 = vadd.f32 %v5321, %v5369
    %v5371 = vpop.f32.mrf.mxu0
    %v5372 = vadd.f32 %v5323, %v5371
    %5373 = vmatmul.bf16.gmra.mxu0 %v5133
    %v5374 = vpop.f32.mrf.mxu0
    %v5375 = vadd.f32 %v5326, %v5374
    %v5376 = vpop.f32.mrf.mxu0
    %v5377 = vadd.f32 %v5328, %v5376
    %5378 = vmatmul.bf16.gmra.mxu0 %v5136
    %v5379 = vpop.f32.mrf.mxu0
    %v5380 = vadd.f32 %v5331, %v5379
    %v5381 = vpop.f32.mrf.mxu0
    %v5382 = vadd.f32 %v5333, %v5381
    %5383 = vdwg.mxu0
    %5384 = vmatpush.bf16.msra.mxu0 0
    %5385 = vmatpush.bf16.msra.mxu0 0
    %5386 = vmatpush.bf16.msra.mxu0 0
    %5387 = vmatpush.bf16.msra.mxu0 0
    %5388 = vmatpush.bf16.msra.mxu0 0
    %5389 = vmatpush.bf16.msra.mxu0 0
    %5390 = vmatpush.bf16.msra.mxu0 %v5243
    %5391 = vmatpush.bf16.msra.mxu0 %v5242
    %5392 = vmatmul.bf16.gmra.mxu0 %v5263
    %v5393 = vpop.f32.mrf.mxu0
    %v5394 = vadd.f32 %v5345, %v5393
    %v5395 = vpop.f32.mrf.mxu0
    %v5396 = vadd.f32 %v5347, %v5395
    %5397 = vmatmul.bf16.gmra.mxu0 %v5266
    %v5398 = vpop.f32.mrf.mxu0
    %v5399 = vadd.f32 %v5350, %v5398
    %v5400 = vpop.f32.mrf.mxu0
    %v5401 = vadd.f32 %v5352, %v5400
    %5402 = vmatmul.bf16.gmra.mxu0 %v5269
    %v5403 = vpop.f32.mrf.mxu0
    %v5404 = vadd.f32 %v5355, %v5403
    %v5405 = vpop.f32.mrf.mxu0
    %v5406 = vadd.f32 %v5357, %v5405
    %5407 = vmatmul.bf16.gmra.mxu0 %v5272
    %v5408 = vpop.f32.mrf.mxu0
    %v5409 = vadd.f32 %v5360, %v5408
    %v5410 = vpop.f32.mrf.mxu0
    %v5411 = vadd.f32 %v5362, %v5410
    %5412 = vmatmul.bf16.gmra.mxu0 %v5275
    %v5413 = vpop.f32.mrf.mxu0
    %v5414 = vadd.f32 %v5365, %v5413
    %v5415 = vpop.f32.mrf.mxu0
    %v5416 = vadd.f32 %v5367, %v5415
    %5417 = vmatmul.bf16.gmra.mxu0 %v5278
    %v5418 = vpop.f32.mrf.mxu0
    %v5419 = vadd.f32 %v5370, %v5418
    %v5420 = vpop.f32.mrf.mxu0
    %v5421 = vadd.f32 %v5372, %v5420
    %5422 = vmatmul.bf16.gmra.mxu0 %v5281
    %v5423 = vpop.f32.mrf.mxu0
    %v5424 = vadd.f32 %v5375, %v5423
    %v5425 = vpop.f32.mrf.mxu0
    %v5426 = vadd.f32 %v5377, %v5425
    %5427 = vmatmul.bf16.gmra.mxu0 %v5284
    %v5428 = vpop.f32.mrf.mxu0
    %v5429 = vadd.f32 %v5380, %v5428
    %v5430 = vpop.f32.mrf.mxu0
    %v5431 = vadd.f32 %v5382, %v5430
    %5432 = vdwg.mxu0
    %v5433 = vld [vmem:[#allocation4] sm:$0xff]
    %v5434 = vld [vmem:[#allocation4 + $0x8] sm:$0xff]
    %v5435 = vld [vmem:[#allocation4 + $0x10] sm:$0xff]
    %v5436 = vld [vmem:[#allocation4 + $0x18] sm:$0xff]
    %v5437 = vld [vmem:[#allocation4 + $0x20] sm:$0xff]
    %v5438 = vld [vmem:[#allocation4 + $0x28] sm:$0xff]
    %v5439 = vld [vmem:[#allocation4 + $0x30] sm:$0xff]
    %v5440 = vld [vmem:[#allocation4 + $0x38] sm:$0xff]
    %v5441 = vld [vmem:[#allocation4 + $0x40] sm:$0xff]
    %v5442 = vld [vmem:[#allocation4 + $0x48] sm:$0xff]
    %v5443 = vld [vmem:[#allocation4 + $0x50] sm:$0xff]
    %v5444 = vld [vmem:[#allocation4 + $0x58] sm:$0xff]
    %v5445 = vld [vmem:[#allocation4 + $0x60] sm:$0xff]
    %v5446 = vld [vmem:[#allocation4 + $0x68] sm:$0xff]
    %v5447 = vld [vmem:[#allocation4 + $0x70] sm:$0xff]
    %v5448 = vld [vmem:[#allocation4 + $0x78] sm:$0xff]
    %v5449 = vadd.f32 %v5394, %v5433
    %v5450 = vadd.f32 %v5396, %v5434
    %v5451 = vadd.f32 %v5399, %v5435
    %v5452 = vadd.f32 %v5401, %v5436
    %v5453 = vadd.f32 %v5404, %v5437
    %v5454 = vadd.f32 %v5406, %v5438
    %v5455 = vadd.f32 %v5409, %v5439
    %v5456 = vadd.f32 %v5411, %v5440
    %v5457 = vadd.f32 %v5414, %v5441
    %v5458 = vadd.f32 %v5416, %v5442
    %v5459 = vadd.f32 %v5419, %v5443
    %v5460 = vadd.f32 %v5421, %v5444
    %v5461 = vadd.f32 %v5424, %v5445
    %v5462 = vadd.f32 %v5426, %v5446
    %v5463 = vadd.f32 %v5429, %v5447
    %v5464 = vadd.f32 %v5431, %v5448
    %5465 = vxpose.xlu0.b32.start [1/16] %v5449, 128
    %5466 = vxpose.xlu0.b32.cont [2/16] %v5450, 128
    %5467 = vxpose.xlu0.b32.cont [3/16] %v5451, 128
    %5468 = vxpose.xlu0.b32.cont [4/16] %v5452, 128
    %5469 = vxpose.xlu0.b32.cont [5/16] %v5453, 128
    %5470 = vxpose.xlu0.b32.cont [6/16] %v5454, 128
    %5471 = vxpose.xlu0.b32.cont [7/16] %v5455, 128
    %5472 = vxpose.xlu0.b32.cont [8/16] %v5456, 128
    %5473 = vxpose.xlu0.b32.cont [9/16] 0.0, 128
    %5474 = vxpose.xlu0.b32.cont [10/16] 0.0, 128
    %5475 = vxpose.xlu0.b32.cont [11/16] 0.0, 128
    %5476 = vxpose.xlu0.b32.cont [12/16] 0.0, 128
    %5477 = vxpose.xlu0.b32.cont [13/16] 0.0, 128
    %5478 = vxpose.xlu0.b32.cont [14/16] 0.0, 128
    %5479 = vxpose.xlu0.b32.cont [15/16] 0.0, 128
    %5480 = vxpose.xlu0.b32.end [16/16] 0.0, 128
    %v5481 = vpop.trf.xlu0
    %v5482 = vpop.trf.xlu0
    %v5483 = vpop.trf.xlu0
    %v5484 = vpop.trf.xlu0
    %v5485 = vpop.trf.xlu0
    %v5486 = vpop.trf.xlu0
    %v5487 = vpop.trf.xlu0
    %v5488 = vpop.trf.xlu0
    %v5489 = vpop.trf.xlu0
    %v5490 = vpop.trf.xlu0
    %v5491 = vpop.trf.xlu0
    %v5492 = vpop.trf.xlu0
    %v5493 = vpop.trf.xlu0
    %v5494 = vpop.trf.xlu0
    %v5495 = vpop.trf.xlu0
    %v5496 = vpop.trf.xlu0
    %vm5497 = vcmask 523264
    %v5498 = vsel %vm5497, %v5481, 0.0
    %5499 = vadd.xlane.f32.xlu0 %v5498
    %v5500 = vpop.xlane.xlu0 %5499
    %v5501 = vsel %vm5497, %v5482, 0.0
    %5502 = vadd.xlane.f32.xlu0 %v5501
    %v5503 = vpop.xlane.xlu0 %5502
    %v5504 = vsel %vm5497, %v5483, 0.0
    %5505 = vadd.xlane.f32.xlu0 %v5504
    %v5506 = vpop.xlane.xlu0 %5505
    %v5507 = vsel %vm5497, %v5484, 0.0
    %5508 = vadd.xlane.f32.xlu0 %v5507
    %v5509 = vpop.xlane.xlu0 %5508
    %v5510 = vrcp.pop 64.0
    %v5511 = vmul.f32 64.0, %v5510
    %v5512 = vsub.f32 1.0, %v5511
    %v5513 = vmul.f32 %v5510, %v5512
    %v5514 = vadd.f32 %v5510, %v5513
    %vm5515 = vweird.f32 %v5510
    %v5516 = vsel %vm5515, %v5510, %v5514
    %v5517 = vmul.f32 %v5500, %v5516
    %v5518 = vmul.f32 %v5503, %v5516
    %v5519 = vmul.f32 %v5506, %v5516
    %v5520 = vmul.f32 %v5509, %v5516
    %v5521 = vsub.f32 %v5481, %v5517
    %v5522 = vsub.f32 %v5482, %v5518
    %v5523 = vsub.f32 %v5483, %v5519
    %v5524 = vsub.f32 %v5484, %v5520
    %v5525 = vmul.f32 %v5521, %v5521
    %v5526 = vmul.f32 %v5522, %v5522
    %v5527 = vmul.f32 %v5523, %v5523
    %v5528 = vmul.f32 %v5524, %v5524
    %v5529 = vsel %vm5497, %v5525, 0.0
    %5530 = vadd.xlane.f32.xlu0 %v5529
    %v5531 = vpop.xlane.xlu0 %5530
    %v5532 = vsel %vm5497, %v5526, 0.0
    %5533 = vadd.xlane.f32.xlu0 %v5532
    %v5534 = vpop.xlane.xlu0 %5533
    %v5535 = vsel %vm5497, %v5527, 0.0
    %5536 = vadd.xlane.f32.xlu0 %v5535
    %v5537 = vpop.xlane.xlu0 %5536
    %v5538 = vsel %vm5497, %v5528, 0.0
    %5539 = vadd.xlane.f32.xlu0 %v5538
    %v5540 = vpop.xlane.xlu0 %5539
    %v5541 = vmul.f32 %v5531, %v5516
    %v5542 = vmul.f32 %v5534, %v5516
    %v5543 = vmul.f32 %v5537, %v5516
    %v5544 = vmul.f32 %v5540, %v5516
    %v5545 = vadd.f32 %v5541, 1e-05
    %v5546 = vadd.f32 %v5542, 1e-05
    %v5547 = vadd.f32 %v5543, 1e-05
    %v5548 = vadd.f32 %v5544, 1e-05
    %v5549 = vrsqrt.pop %v5545
    %v5550 = vmul.f32 %v5549, %v5545
    %v5551 = vmul.f32 %v5550, %v5549
    %v5552 = vmul.f32 0.5, %v5551
    %v5553 = vsub.f32 1.5, %v5552
    %v5554 = vmul.f32 %v5549, %v5553
    %vm5555 = vweird.f32 %v5545
    %vm5556 = vweird.f32 %v5549
    %vm5557 = vmor %vm5555, %vm5556
    %v5558 = vsel %vm5557, %v5549, %v5554
    %v5559 = vrsqrt.pop %v5546
    %v5560 = vmul.f32 %v5559, %v5546
    %v5561 = vmul.f32 %v5560, %v5559
    %v5562 = vmul.f32 0.5, %v5561
    %v5563 = vsub.f32 1.5, %v5562
    %v5564 = vmul.f32 %v5559, %v5563
    %vm5565 = vweird.f32 %v5546
    %vm5566 = vweird.f32 %v5559
    %vm5567 = vmor %vm5565, %vm5566
    %v5568 = vsel %vm5567, %v5559, %v5564
    %v5569 = vrsqrt.pop %v5547
    %v5570 = vmul.f32 %v5569, %v5547
    %v5571 = vmul.f32 %v5570, %v5569
    %v5572 = vmul.f32 0.5, %v5571
    %v5573 = vsub.f32 1.5, %v5572
    %v5574 = vmul.f32 %v5569, %v5573
    %vm5575 = vweird.f32 %v5547
    %vm5576 = vweird.f32 %v5569
    %vm5577 = vmor %vm5575, %vm5576
    %v5578 = vsel %vm5577, %v5569, %v5574
    %v5579 = vrsqrt.pop %v5548
    %v5580 = vmul.f32 %v5579, %v5548
    %v5581 = vmul.f32 %v5580, %v5579
    %v5582 = vmul.f32 0.5, %v5581
    %v5583 = vsub.f32 1.5, %v5582
    %v5584 = vmul.f32 %v5579, %v5583
    %vm5585 = vweird.f32 %v5548
    %vm5586 = vweird.f32 %v5579
    %vm5587 = vmor %vm5585, %vm5586
    %v5588 = vsel %vm5587, %v5579, %v5584
    %v5589 = vmul.f32 %v5521, %v5558
    %v5590 = vmul.f32 %v5522, %v5568
    %v5591 = vmul.f32 %v5523, %v5578
    %v5592 = vmul.f32 %v5524, %v5588
    %vm5593 = vcmp.ge.f32.partialorder %v5589, 0.0
    %vm5594 = vcmp.ge.f32.partialorder %v5590, 0.0
    %vm5595 = vcmp.ge.f32.partialorder %v5591, 0.0
    %vm5596 = vcmp.ge.f32.partialorder %v5592, 0.0
    %v5597 = vmul.f32 %v287, %v5589
    %v5598 = vmul.f32 %v287, %v5590
    %v5599 = vmul.f32 %v287, %v5591
    %v5600 = vmul.f32 %v287, %v5592
    %v5601 = vsel %vm5593, %v5589, %v5597
    %v5602 = vsel %vm5594, %v5590, %v5598
    %v5603 = vsel %vm5595, %v5591, %v5599
    %v5604 = vsel %vm5596, %v5592, %v5600
    %5605 = vst.msk [vmem:[#allocation6] sm:$0xff] %vm5497, %v5601
    %5606 = vst.msk [vmem:[#allocation6 + $0x8] sm:$0xff] %vm5497, %v5602
    %5607 = vst.msk [vmem:[#allocation6 + $0x10] sm:$0xff] %vm5497, %v5603
    %5608 = vst.msk [vmem:[#allocation6 + $0x18] sm:$0xff] %vm5497, %v5604
    %5609 = vxpose.xlu0.b32.start [1/16] %v5457, 128
    %5610 = vxpose.xlu0.b32.cont [2/16] %v5458, 128
    %5611 = vxpose.xlu0.b32.cont [3/16] %v5459, 128
    %5612 = vxpose.xlu0.b32.cont [4/16] %v5460, 128
    %5613 = vxpose.xlu0.b32.cont [5/16] %v5461, 128
    %5614 = vxpose.xlu0.b32.cont [6/16] %v5462, 128
    %5615 = vxpose.xlu0.b32.cont [7/16] %v5463, 128
    %5616 = vxpose.xlu0.b32.cont [8/16] %v5464, 128
    %5617 = vxpose.xlu0.b32.cont [9/16] 0.0, 128
    %5618 = vxpose.xlu0.b32.cont [10/16] 0.0, 128
    %5619 = vxpose.xlu0.b32.cont [11/16] 0.0, 128
    %5620 = vxpose.xlu0.b32.cont [12/16] 0.0, 128
    %5621 = vxpose.xlu0.b32.cont [13/16] 0.0, 128
    %5622 = vxpose.xlu0.b32.cont [14/16] 0.0, 128
    %5623 = vxpose.xlu0.b32.cont [15/16] 0.0, 128
    %5624 = vxpose.xlu0.b32.end [16/16] 0.0, 128
    %v5625 = vpop.trf.xlu0
    %v5626 = vpop.trf.xlu0
    %v5627 = vpop.trf.xlu0
    %v5628 = vpop.trf.xlu0
    %v5629 = vpop.trf.xlu0
    %v5630 = vpop.trf.xlu0
    %v5631 = vpop.trf.xlu0
    %v5632 = vpop.trf.xlu0
    %v5633 = vpop.trf.xlu0
    %v5634 = vpop.trf.xlu0
    %v5635 = vpop.trf.xlu0
    %v5636 = vpop.trf.xlu0
    %v5637 = vpop.trf.xlu0
    %v5638 = vpop.trf.xlu0
    %v5639 = vpop.trf.xlu0
    %v5640 = vpop.trf.xlu0
    %v5641 = vsel %vm5497, %v5625, 0.0
    %5642 = vadd.xlane.f32.xlu0 %v5641
    %v5643 = vpop.xlane.xlu0 %5642
    %v5644 = vsel %vm5497, %v5626, 0.0
    %5645 = vadd.xlane.f32.xlu0 %v5644
    %v5646 = vpop.xlane.xlu0 %5645
    %v5647 = vsel %vm5497, %v5627, 0.0
    %5648 = vadd.xlane.f32.xlu0 %v5647
    %v5649 = vpop.xlane.xlu0 %5648
    %v5650 = vsel %vm5497, %v5628, 0.0
    %5651 = vadd.xlane.f32.xlu0 %v5650
    %v5652 = vpop.xlane.xlu0 %5651
    %v5653 = vmul.f32 %v5643, %v5516
    %v5654 = vmul.f32 %v5646, %v5516
    %v5655 = vmul.f32 %v5649, %v5516
    %v5656 = vmul.f32 %v5652, %v5516
    %v5657 = vsub.f32 %v5625, %v5653
    %v5658 = vsub.f32 %v5626, %v5654
    %v5659 = vsub.f32 %v5627, %v5655
    %v5660 = vsub.f32 %v5628, %v5656
    %v5661 = vmul.f32 %v5657, %v5657
    %v5662 = vmul.f32 %v5658, %v5658
    %v5663 = vmul.f32 %v5659, %v5659
    %v5664 = vmul.f32 %v5660, %v5660
    %v5665 = vsel %vm5497, %v5661, 0.0
    %5666 = vadd.xlane.f32.xlu0 %v5665
    %v5667 = vpop.xlane.xlu0 %5666
    %v5668 = vsel %vm5497, %v5662, 0.0
    %5669 = vadd.xlane.f32.xlu0 %v5668
    %v5670 = vpop.xlane.xlu0 %5669
    %v5671 = vsel %vm5497, %v5663, 0.0
    %5672 = vadd.xlane.f32.xlu0 %v5671
    %v5673 = vpop.xlane.xlu0 %5672
    %v5674 = vsel %vm5497, %v5664, 0.0
    %5675 = vadd.xlane.f32.xlu0 %v5674
    %v5676 = vpop.xlane.xlu0 %5675
    %v5677 = vmul.f32 %v5667, %v5516
    %v5678 = vmul.f32 %v5670, %v5516
    %v5679 = vmul.f32 %v5673, %v5516
    %v5680 = vmul.f32 %v5676, %v5516
    %v5681 = vadd.f32 %v5677, 1e-05
    %v5682 = vadd.f32 %v5678, 1e-05
    %v5683 = vadd.f32 %v5679, 1e-05
    %v5684 = vadd.f32 %v5680, 1e-05
    %v5685 = vrsqrt.pop %v5681
    %v5686 = vmul.f32 %v5685, %v5681
    %v5687 = vmul.f32 %v5686, %v5685
    %v5688 = vmul.f32 0.5, %v5687
    %v5689 = vsub.f32 1.5, %v5688
    %v5690 = vmul.f32 %v5685, %v5689
    %vm5691 = vweird.f32 %v5681
    %vm5692 = vweird.f32 %v5685
    %vm5693 = vmor %vm5691, %vm5692
    %v5694 = vsel %vm5693, %v5685, %v5690
    %v5695 = vrsqrt.pop %v5682
    %v5696 = vmul.f32 %v5695, %v5682
    %v5697 = vmul.f32 %v5696, %v5695
    %v5698 = vmul.f32 0.5, %v5697
    %v5699 = vsub.f32 1.5, %v5698
    %v5700 = vmul.f32 %v5695, %v5699
    %vm5701 = vweird.f32 %v5682
    %vm5702 = vweird.f32 %v5695
    %vm5703 = vmor %vm5701, %vm5702
    %v5704 = vsel %vm5703, %v5695, %v5700
    %v5705 = vrsqrt.pop %v5683
    %v5706 = vmul.f32 %v5705, %v5683
    %v5707 = vmul.f32 %v5706, %v5705
    %v5708 = vmul.f32 0.5, %v5707
    %v5709 = vsub.f32 1.5, %v5708
    %v5710 = vmul.f32 %v5705, %v5709
    %vm5711 = vweird.f32 %v5683
    %vm5712 = vweird.f32 %v5705
    %vm5713 = vmor %vm5711, %vm5712
    %v5714 = vsel %vm5713, %v5705, %v5710
    %v5715 = vrsqrt.pop %v5684
    %v5716 = vmul.f32 %v5715, %v5684
    %v5717 = vmul.f32 %v5716, %v5715
    %v5718 = vmul.f32 0.5, %v5717
    %v5719 = vsub.f32 1.5, %v5718
    %v5720 = vmul.f32 %v5715, %v5719
    %vm5721 = vweird.f32 %v5684
    %vm5722 = vweird.f32 %v5715
    %vm5723 = vmor %vm5721, %vm5722
    %v5724 = vsel %vm5723, %v5715, %v5720
    %v5725 = vmul.f32 %v5657, %v5694
    %v5726 = vmul.f32 %v5658, %v5704
    %v5727 = vmul.f32 %v5659, %v5714
    %v5728 = vmul.f32 %v5660, %v5724
    %vm5729 = vcmp.ge.f32.partialorder %v5725, 0.0
    %vm5730 = vcmp.ge.f32.partialorder %v5726, 0.0
    %vm5731 = vcmp.ge.f32.partialorder %v5727, 0.0
    %vm5732 = vcmp.ge.f32.partialorder %v5728, 0.0
    %v5733 = vmul.f32 %v287, %v5725
    %v5734 = vmul.f32 %v287, %v5726
    %v5735 = vmul.f32 %v287, %v5727
    %v5736 = vmul.f32 %v287, %v5728
    %v5737 = vsel %vm5729, %v5725, %v5733
    %v5738 = vsel %vm5730, %v5726, %v5734
    %v5739 = vsel %vm5731, %v5727, %v5735
    %v5740 = vsel %vm5732, %v5728, %v5736
    %s5741 = scalar_lea.vmem [#allocation6], 32
    %5742 = vst.msk [vmem:[%s5741] sm:$0xff] %vm5497, %v5737
    %5743 = vst.msk [vmem:[%s5741 + $0x8] sm:$0xff] %vm5497, %v5738
    %5744 = vst.msk [vmem:[%s5741 + $0x10] sm:$0xff] %vm5497, %v5739
    %5745 = vst.msk [vmem:[%s5741 + $0x18] sm:$0xff] %vm5497, %v5740
    // Predicated region
    $region30: #{tpu_custom_call.1} parent=1 // pred_check
      _
    $region31: #{tpu_custom_call.1} parent=1 // pred_check_branch
      %5747 = sbr.rel (0) target = $region33
    $region32: #{tpu_custom_call.1} parent=1 // pred_region
      %5749 = vsyncadd [#allocation7], 0
      %s5750 = sshll.u32 [#allocation6], 4
      %s5751 = int_to_ptr.vmem [resolvable:$true] %s5750
      %s5752 = sshll.u32 %s7, 4
      %s5753 = int_to_ptr.hbm [resolvable:$true] %s5752
      %5758 = dma.vmem_to_hbm [thread:$0]  %s5751, 1024, %s5753, [#allocation7], 128, 128, 8
    $region33: #{tpu_custom_call.1} parent=1 // pred_fallthru
      _
    // Predicated region
    $region34: #{tpu_custom_call.1} parent=1 // pred_check
      _
    $region35: #{tpu_custom_call.1} parent=1 // pred_check_branch
      %5760 = sbr.rel (0) target = $region37
    $region36: #{tpu_custom_call.1} parent=1 // pred_region
      %5762 = dma.done [#allocation7], 1024
    $region37: #{tpu_custom_call.1} parent=1 // pred_fallthru
      _
    %5763 = vsyncpa [#allocation7], 1

</llo_original>
